<compile_context>
chip_gen: v7x
topology: tpu7x:2x2x1
jax: 0.10.0
libtpu: 0.0.40
codegen_flags: <defaults>
</compile_context>

<pallas_src>
import functools

import jax
import jax.numpy as jnp
from jax.experimental import pallas as pl
from jax.experimental.pallas import tpu as pltpu

_MXU_DTYPE = jnp.bfloat16  # MXU operand dtype (accumulation stays f32)


# ---------------------------------------------------------------------------
# In-kernel helpers (all operate on flat (C, H*W) maps; H*W lives on lanes)
# ---------------------------------------------------------------------------
def _shifted_taps(xf, W, K, fill):
    """K*K shifted views of a flat (C, H*W) map for a KxK stride-1 'same' window.

    Returns a list (kh-major, then kw) of (C, H*W) arrays where
        tap[kh*K + kw][c, i*W + j] == x[c, i + kh - p, j + kw - p]   (p = K // 2)
    and out-of-image positions are `fill` (0 for conv halos, -inf for maxpool).
    Row overflow is handled by the fill-extended row; column wrap is masked.
    """
    C, HW = xf.shape
    p = K // 2
    P = p * W + p                                            # max |flat shift|
    pad = jnp.full((C, P), fill, xf.dtype)
    ext = jnp.concatenate([pad, xf, pad], axis=1)            # (C, HW + 2P)
    col = jax.lax.broadcasted_iota(jnp.int32, (1, HW), 1) % W
    taps = []
    for kh in range(K):
        dh = kh - p
        for kw in range(K):
            dw = kw - p
            off = dh * W + dw
            shifted = ext[:, P + off:P + off + HW]
            if dw != 0:                                      # mask column wrap
                valid = jnp.logical_and(col + dw >= 0, col + dw < W)
                shifted = jnp.where(valid, shifted, jnp.full_like(shifted, fill))
            taps.append(shifted)
    return taps


def _conv_kxk(xf, w2d, W, K):
    """KxK 'same' conv (stride 1) as ONE deep-K matmul.

    xf  : (Cin, H*W)        bf16 activation (flat spatial on lanes)
    w2d : (Cout, K*K*Cin)   weights, contraction ordered (kh, kw, cin)
    returns (Cout, H*W) f32
    """
    patches = jnp.concatenate(_shifted_taps(xf, W, K, 0.0), axis=0)
    return jnp.dot(w2d, patches, preferred_element_type=jnp.float32)


def _inception_kernel(x_ref,
                      w1x1_ref, s1x1_ref, b1x1_ref,
                      w2b_ref, s2b_ref, b2b_ref,
                      w3b_ref, s3b_ref, b3b_ref,
                      w4_ref, s4_ref, b4_ref,
                      out_ref,
                      *, W, c1, r1, r2, c2, c3, c4, mxu_dtype):
    """Whole Inception block for one batch tile (block = (B_tile, C, H*W))."""
    b_tile = x_ref.shape[0]

    w1x1 = w1x1_ref[...]
    s1x1, b1x1 = s1x1_ref[...], b1x1_ref[...]
    w2b, s2b, b2b = w2b_ref[...], s2b_ref[...], b2b_ref[...]
    w3b, s3b, b3b = w3b_ref[...], s3b_ref[...], b3b_ref[...]
    w4, s4, b4 = w4_ref[...], s4_ref[...], b4_ref[...]

    for b in range(b_tile):                       # static unroll; B_tile is small
        xb = x_ref[b].astype(mxu_dtype)           # (cin, HW) bf16

        # ---- fused pointwise stage: branch1 1x1 + branch2/3 reduce 1x1s -----
        y = jnp.dot(w1x1, xb, preferred_element_type=jnp.float32)   # (c_pw, HW)
        y = jnp.maximum(y * s1x1 + b1x1, 0.0)     # folded BN(eval) + ReLU, f32
        o1 = y[0:c1]

        # ---- branch 2: 3x3 conv on the 1x1-reduce output ---------------------
        t2 = y[c1:c1 + r1].astype(mxu_dtype)
        o2 = jnp.maximum(_conv_kxk(t2, w2b, W, 3) * s2b + b2b, 0.0)

        # ---- branch 3: 5x5 conv on the 1x1-reduce output ---------------------
        t3 = y[c1 + r1:c1 + r1 + r2].astype(mxu_dtype)
        o3 = jnp.maximum(_conv_kxk(t3, w3b, W, 5) * s3b + b3b, 0.0)

        # ---- branch 4: maxpool(3, stride 1, pad 1) then 3x3 conv -------------
        pooled = None
        for win in _shifted_taps(xb, W, 3, -jnp.inf):
            pooled = win if pooled is None else jnp.maximum(pooled, win)
        o4 = jnp.maximum(_conv_kxk(pooled, w4, W, 3) * s4 + b4, 0.0)

        # ---- one lane-dense store of all four branches for this sample -------
        out_ref[b] = jnp.concatenate([o1, o2, o3, o4], axis=0).astype(out_ref.dtype)


# ---------------------------------------------------------------------------
# Wrapper
# ---------------------------------------------------------------------------
def _pick_batch_tile(n, cap=8):
    """Largest batch tile <= cap that keeps >=2 grid blocks (v7x megacore)."""
    divisors = [d for d in range(1, min(cap, n) + 1) if n % d == 0]
    good = [d for d in divisors if n // d >= 2]
    return max(good) if good else n


def _vmem_limit_bytes(in_block, out_block, weights, act_itemsize):
    """Tile-footprint-derived VMEM budget, capped per TPU generation."""
    def padded(shape, itemsize):
        lead = 1
        for d in shape[:-2]:
            lead *= int(d)
        sub = -(-int(shape[-2]) // 8) * 8
        lane = -(-int(shape[-1]) // 128) * 128
        return lead * sub * lane * itemsize

    tiles = padded(in_block, act_itemsize) + padded(out_block, act_itemsize)
    wbytes = sum(padded(w.shape, w.dtype.itemsize) for w in weights)
    est = 2 * (tiles + wbytes) + (8 << 20)   # double-buffered blocks + im2col temps
    try:
        cap = int(pltpu.get_tpu_info().vmem_capacity_bytes)
    except Exception:  # pragma: no cover - conservative fallback (v7x per-core VMEM)
        cap = 64 << 20
    return int(min(max(est, 32 << 20), int(0.75 * cap), 100 << 20))


def base_inception_forward(x_nchw, params, *, mxu_dtype=_MXU_DTYPE):
    N, cin, H, W = x_nchw.shape
    HW = H * W
    x = x_nchw.reshape(N, cin, HW)            # free contiguous reshape (no transpose)

    (w_b1, s_b1, b_b1) = params["b1"]
    (w_b2a, s_b2a, b_b2a) = params["b2a"]
    (w_b2b, s_b2b, b_b2b) = params["b2b"]
    (w_b3a, s_b3a, b_b3a) = params["b3a"]
    (w_b3b, s_b3b, b_b3b) = params["b3b"]
    (w_b4, s_b4, b_b4) = params["b4"]

    c1, r1, r2 = w_b1.shape[-1], w_b2a.shape[-1], w_b3a.shape[-1]
    c2, c3, c4 = w_b2b.shape[-1], w_b3b.shape[-1], w_b4.shape[-1]
    c_pw = c1 + r1 + r2
    c_total = c1 + c2 + c3 + c4
    f32 = jnp.float32

    # Fused pointwise weight (channels on sublanes): (c_pw, cin).
    w1x1 = jnp.concatenate([w_b1.reshape(cin, c1).T,
                            w_b2a.reshape(cin, r1).T,
                            w_b3a.reshape(cin, r2).T], axis=0).astype(mxu_dtype)
    s1x1 = jnp.concatenate([s_b1, s_b2a, s_b3a]).reshape(c_pw, 1).astype(f32)
    b1x1 = jnp.concatenate([b_b1, b_b2a, b_b3a]).reshape(c_pw, 1).astype(f32)

    # KxK weights flattened to (Cout, K*K*Cin); contraction ordered (kh, kw, cin).
    w2b = w_b2b.reshape(3 * 3 * r1, c2).T.astype(mxu_dtype)
    w3b = w_b3b.reshape(5 * 5 * r2, c3).T.astype(mxu_dtype)
    w4 = w_b4.reshape(3 * 3 * cin, c4).T.astype(mxu_dtype)
    s2b, b2b = s_b2b.reshape(c2, 1).astype(f32), b_b2b.reshape(c2, 1).astype(f32)
    s3b, b3b = s_b3b.reshape(c3, 1).astype(f32), b_b3b.reshape(c3, 1).astype(f32)
    s4, b4 = s_b4.reshape(c4, 1).astype(f32), b_b4.reshape(c4, 1).astype(f32)

    weights = (w1x1, s1x1, b1x1, w2b, s2b, b2b, w3b, s3b, b3b, w4, s4, b4)

    b_tile = _pick_batch_tile(N)
    grid = (N // b_tile,)

    kernel = functools.partial(_inception_kernel, W=W, c1=c1, r1=r1, r2=r2,
                               c2=c2, c3=c3, c4=c4, mxu_dtype=mxu_dtype)

    def _whole(a):
        return pl.BlockSpec(a.shape, lambda n, _nd=a.ndim: (0,) * _nd)

    grid_spec = pltpu.PrefetchScalarGridSpec(
        num_scalar_prefetch=0,
        grid=grid,
        in_specs=[pl.BlockSpec((b_tile, cin, HW), lambda n: (n, 0, 0))]
                 + [_whole(w) for w in weights],
        out_specs=pl.BlockSpec((b_tile, c_total, HW), lambda n: (n, 0, 0)),
    )

    out_flat = pl.pallas_call(
        kernel,
        out_shape=jax.ShapeDtypeStruct((N, c_total, HW), x.dtype),
        grid_spec=grid_spec,
        compiler_params=pltpu.CompilerParams(
            dimension_semantics=("parallel",),
            vmem_limit_bytes=_vmem_limit_bytes(
                (b_tile, cin, HW), (b_tile, c_total, HW), weights,
                jnp.dtype(x.dtype).itemsize)),
    )(x, *weights)

    return out_flat.reshape(N, c_total, H, W)   # free contiguous reshape


# ---------------------------------------------------------------------------
# Parameter construction (deterministic; BN folded with inference semantics)
# ---------------------------------------------------------------------------
def make_conv_bn_params(key, cin, cout, ksize, eps=1e-5):
    kw_, kb, kg, kbeta, km, kv = jax.random.split(key, 6)
    w = jax.random.normal(kw_, (ksize, ksize, cin, cout), jnp.float32) * 0.1
    conv_b = jax.random.normal(kb, (cout,), jnp.float32) * 0.05
    gamma = 1.0 + 0.1 * jax.random.normal(kg, (cout,), jnp.float32)
    beta = 0.1 * jax.random.normal(kbeta, (cout,), jnp.float32)
    mean = 0.05 * jax.random.normal(km, (cout,), jnp.float32)
    var = 1.0 + 0.1 * jax.random.uniform(kv, (cout,), jnp.float32)
    inv_std = 1.0 / jnp.sqrt(var + eps)
    scale = gamma * inv_std
    bias = (conv_b - mean) * scale + beta
    return w, scale, bias


def init_base_inception(key, in_channel, out_channel_list, reduce_channel_list):
    ks = jax.random.split(key, 6)
    return {
        "b1":  make_conv_bn_params(ks[0], in_channel, out_channel_list[0], 1),
        "b2a": make_conv_bn_params(ks[1], in_channel, reduce_channel_list[0], 1),
        "b2b": make_conv_bn_params(ks[2], reduce_channel_list[0], out_channel_list[1], 3),
        "b3a": make_conv_bn_params(ks[3], in_channel, reduce_channel_list[1], 1),
        "b3b": make_conv_bn_params(ks[4], reduce_channel_list[1], out_channel_list[2], 5),
        "b4":  make_conv_bn_params(ks[5], in_channel, out_channel_list[3], 3),
    }


# ---------------------------------------------------------------------------
# Pure-JAX reference (same folded-BN semantics) for in-script validation
# ---------------------------------------------------------------------------
def _ref_forward(x_nchw, params):
    x = jnp.transpose(x_nchw, (0, 2, 3, 1))

    def cbr(xx, w, scale, bias):
        y = jax.lax.conv_general_dilated(
            xx, w, window_strides=(1, 1), padding="SAME",
            dimension_numbers=("NHWC", "HWIO", "NHWC"))
        return jnp.maximum(y * scale + bias, 0.0)

    def maxpool3(xx):
        return jax.lax.reduce_window(
            xx, -jnp.inf, jax.lax.max, (1, 3, 3, 1), (1, 1, 1, 1),
            padding=((0, 0), (1, 1), (1, 1), (0, 0)))

    o1 = cbr(x, *params["b1"])
    o2 = cbr(cbr(x, *params["b2a"]), *params["b2b"])
    o3 = cbr(cbr(x, *params["b3a"]), *params["b3b"])
    o4 = cbr(maxpool3(x), *params["b4"])
    out = jnp.concatenate([o1, o2, o3, o4], axis=-1)
    return jnp.transpose(out, (0, 3, 1, 2))


# ---------------------------------------------------------------------------
if __name__ == "__main__":
    key = jax.random.PRNGKey(0)
    kx, kp = jax.random.split(key)

    in_channel = 4
    out_channel_list = [8, 8, 8, 8]
    reduce_channel_list = [4, 4]

    x = jax.random.normal(kx, (2, in_channel, 16, 16), jnp.float32)  # NCHW
    params = init_base_inception(kp, in_channel, out_channel_list,
                                 reduce_channel_list)

    out = jax.jit(base_inception_forward)(x, params)
    out = jax.block_until_ready(out)

    expected_shape = (2, sum(out_channel_list), 16, 16)
    assert out.shape == expected_shape, (out.shape, expected_shape)
    assert bool(jnp.all(jnp.isfinite(out)))

    ref = _ref_forward(x, params)
    max_err = float(jnp.max(jnp.abs(out - ref)))
    assert max_err < 5e-2, max_err   # bf16 MXU operands, f32 accumulation

    print("KERNEL_OK")
</pallas_src>

<mosaic_0001>
module attributes {stable_mosaic.version = 11 : i64} {
  func.func @_inception_kernel(%arg0: i32, %arg1: memref<1x4x256xf32, #tpu.memory_space<vmem>>, %arg2: memref<16x4xbf16, #tpu.memory_space<vmem>>, %arg3: memref<16x1xf32, #tpu.memory_space<vmem>>, %arg4: memref<16x1xf32, #tpu.memory_space<vmem>>, %arg5: memref<8x36xbf16, #tpu.memory_space<vmem>>, %arg6: memref<8x1xf32, #tpu.memory_space<vmem>>, %arg7: memref<8x1xf32, #tpu.memory_space<vmem>>, %arg8: memref<8x100xbf16, #tpu.memory_space<vmem>>, %arg9: memref<8x1xf32, #tpu.memory_space<vmem>>, %arg10: memref<8x1xf32, #tpu.memory_space<vmem>>, %arg11: memref<8x36xbf16, #tpu.memory_space<vmem>>, %arg12: memref<8x1xf32, #tpu.memory_space<vmem>>, %arg13: memref<8x1xf32, #tpu.memory_space<vmem>>, %arg14: memref<1x32x256xf32, #tpu.memory_space<vmem>>) attributes {dimension_semantics = [#tpu.dimension_semantics<parallel>], iteration_bounds = array<i64: 2>, scalar_prefetch = 0 : i64, scratch_operands = 0 : i64, tpu.core_type = #tpu.core_type<tc>, window_params = [{transform_indices = @transform_0, window_bounds = array<i64: 1, 4, 256>}, {pipeline_mode = #tpu.pipeline_mode<synchronous>, transform_indices = @transform_1, window_bounds = array<i64: 16, 4>}, {pipeline_mode = #tpu.pipeline_mode<synchronous>, transform_indices = @transform_2, window_bounds = array<i64: 16, 1>}, {pipeline_mode = #tpu.pipeline_mode<synchronous>, transform_indices = @transform_3, window_bounds = array<i64: 16, 1>}, {pipeline_mode = #tpu.pipeline_mode<synchronous>, transform_indices = @transform_4, window_bounds = array<i64: 8, 36>}, {pipeline_mode = #tpu.pipeline_mode<synchronous>, transform_indices = @transform_5, window_bounds = array<i64: 8, 1>}, {pipeline_mode = #tpu.pipeline_mode<synchronous>, transform_indices = @transform_6, window_bounds = array<i64: 8, 1>}, {pipeline_mode = #tpu.pipeline_mode<synchronous>, transform_indices = @transform_7, window_bounds = array<i64: 8, 100>}, {pipeline_mode = #tpu.pipeline_mode<synchronous>, transform_indices = @transform_8, window_bounds = array<i64: 8, 1>}, {pipeline_mode = #tpu.pipeline_mode<synchronous>, transform_indices = @transform_9, window_bounds = array<i64: 8, 1>}, {pipeline_mode = #tpu.pipeline_mode<synchronous>, transform_indices = @transform_10, window_bounds = array<i64: 8, 36>}, {pipeline_mode = #tpu.pipeline_mode<synchronous>, transform_indices = @transform_11, window_bounds = array<i64: 8, 1>}, {pipeline_mode = #tpu.pipeline_mode<synchronous>, transform_indices = @transform_12, window_bounds = array<i64: 8, 1>}, {transform_indices = @transform_13, window_bounds = array<i64: 1, 32, 256>}]} {
    %c0 = arith.constant 0 : index
    %c0_0 = arith.constant 0 : index
    %0 = vector.load %arg2[%c0, %c0_0] : memref<16x4xbf16, #tpu.memory_space<vmem>>, vector<16x4xbf16>
    %c0_1 = arith.constant 0 : index
    %c0_2 = arith.constant 0 : index
    %1 = vector.load %arg3[%c0_1, %c0_2] : memref<16x1xf32, #tpu.memory_space<vmem>>, vector<16x1xf32>
    %c0_3 = arith.constant 0 : index
    %c0_4 = arith.constant 0 : index
    %2 = vector.load %arg4[%c0_3, %c0_4] : memref<16x1xf32, #tpu.memory_space<vmem>>, vector<16x1xf32>
    %c0_5 = arith.constant 0 : index
    %c0_6 = arith.constant 0 : index
    %3 = vector.load %arg5[%c0_5, %c0_6] : memref<8x36xbf16, #tpu.memory_space<vmem>>, vector<8x36xbf16>
    %c0_7 = arith.constant 0 : index
    %c0_8 = arith.constant 0 : index
    %4 = vector.load %arg6[%c0_7, %c0_8] : memref<8x1xf32, #tpu.memory_space<vmem>>, vector<8x1xf32>
    %c0_9 = arith.constant 0 : index
    %c0_10 = arith.constant 0 : index
    %5 = vector.load %arg7[%c0_9, %c0_10] : memref<8x1xf32, #tpu.memory_space<vmem>>, vector<8x1xf32>
    %c0_11 = arith.constant 0 : index
    %c0_12 = arith.constant 0 : index
    %6 = vector.load %arg8[%c0_11, %c0_12] : memref<8x100xbf16, #tpu.memory_space<vmem>>, vector<8x100xbf16>
    %c0_13 = arith.constant 0 : index
    %c0_14 = arith.constant 0 : index
    %7 = vector.load %arg9[%c0_13, %c0_14] : memref<8x1xf32, #tpu.memory_space<vmem>>, vector<8x1xf32>
    %c0_15 = arith.constant 0 : index
    %c0_16 = arith.constant 0 : index
    %8 = vector.load %arg10[%c0_15, %c0_16] : memref<8x1xf32, #tpu.memory_space<vmem>>, vector<8x1xf32>
    %c0_17 = arith.constant 0 : index
    %c0_18 = arith.constant 0 : index
    %9 = vector.load %arg11[%c0_17, %c0_18] : memref<8x36xbf16, #tpu.memory_space<vmem>>, vector<8x36xbf16>
    %c0_19 = arith.constant 0 : index
    %c0_20 = arith.constant 0 : index
    %10 = vector.load %arg12[%c0_19, %c0_20] : memref<8x1xf32, #tpu.memory_space<vmem>>, vector<8x1xf32>
    %c0_21 = arith.constant 0 : index
    %c0_22 = arith.constant 0 : index
    %11 = vector.load %arg13[%c0_21, %c0_22] : memref<8x1xf32, #tpu.memory_space<vmem>>, vector<8x1xf32>
    %c0_23 = arith.constant 0 : index
    %c0_24 = arith.constant 0 : index
    %c0_25 = arith.constant 0 : index
    %12 = vector.load %arg1[%c0_23, %c0_24, %c0_25] : memref<1x4x256xf32, #tpu.memory_space<vmem>>, vector<1x4x256xf32>
    %13 = vector.shape_cast %12 : vector<1x4x256xf32> to vector<4x256xf32>
    %14 = arith.truncf %13 : vector<4x256xf32> to vector<4x256xbf16>
    %cst = arith.constant dense<0.000000e+00> : vector<16x256xf32>
    %15 = tpu.matmul %0, %14, %cst {dimension_numbers = #tpu.dot_dimension_numbers<[1], [0], [0], [1], [0, 0, 1, 1], [], []>} : vector<16x4xbf16>, vector<4x256xbf16>, vector<16x256xf32> -> vector<16x256xf32>
    %16 = vector.broadcast %1 : vector<16x1xf32> to vector<16x256xf32>
    %17 = arith.mulf %15, %16 : vector<16x256xf32>
    %18 = vector.broadcast %2 : vector<16x1xf32> to vector<16x256xf32>
    %19 = arith.addf %17, %18 : vector<16x256xf32>
    %cst_26 = arith.constant 0.000000e+00 : f32
    %20 = vector.broadcast %cst_26 : f32 to vector<16x256xf32>
    %21 = arith.maximumf %19, %20 : vector<16x256xf32>
    %22 = vector.extract_strided_slice %21 {offsets = [0, 0], sizes = [8, 256], strides = [1, 1]} : vector<16x256xf32> to vector<8x256xf32>
    %23 = vector.extract_strided_slice %21 {offsets = [8, 0], sizes = [4, 256], strides = [1, 1]} : vector<16x256xf32> to vector<4x256xf32>
    %24 = arith.truncf %23 : vector<4x256xf32> to vector<4x256xbf16>
    %cst_27 = arith.constant 0.000000e+00 : bf16
    %25 = vector.broadcast %cst_27 : bf16 to vector<4x17xbf16>
    %26 = tpu.concatenate %25, %24, %25 in 1 : vector<4x17xbf16>, vector<4x256xbf16>, vector<4x17xbf16> -> vector<4x290xbf16>
    %27 = tpu.iota {dimensions = array<i32: 1>} : vector<1x256xi32>
    %c16_i32 = arith.constant 16 : i32
    %c0_i32 = arith.constant 0 : i32
    %28 = arith.cmpi eq, %c16_i32, %c0_i32 : i32
    %c1_i32 = arith.constant 1 : i32
    %29 = arith.select %28, %c1_i32, %c16_i32 : i32
    %30 = vector.broadcast %29 : i32 to vector<1x256xi32>
    %31 = arith.remsi %27, %30 : vector<1x256xi32>
    %c0_i32_28 = arith.constant 0 : i32
    %32 = vector.broadcast %c0_i32_28 : i32 to vector<1x256xi32>
    %33 = arith.cmpi ne, %31, %32 : vector<1x256xi32>
    %c0_i32_29 = arith.constant 0 : i32
    %34 = vector.broadcast %c0_i32_29 : i32 to vector<1x256xi32>
    %35 = arith.cmpi slt, %31, %34 : vector<1x256xi32>
    %c0_i32_30 = arith.constant 0 : i32
    %36 = arith.cmpi slt, %29, %c0_i32_30 : i32
    %37 = vector.broadcast %36 : i1 to vector<1x256xi1>
    %38 = vector.broadcast %37 : vector<1x256xi1> to vector<1x256xi1>
    %39 = arith.xori %35, %38 : vector<1x256xi1>
    %40 = arith.andi %39, %33 : vector<1x256xi1>
    %41 = vector.broadcast %29 : i32 to vector<1x256xi32>
    %42 = arith.addi %31, %41 : vector<1x256xi32>
    %43 = arith.select %40, %42, %31 : vector<1x256xi1>, vector<1x256xi32>
    %44 = vector.extract_strided_slice %26 {offsets = [0, 0], sizes = [4, 256], strides = [1, 1]} : vector<4x290xbf16> to vector<4x256xbf16>
    %c-1_i32 = arith.constant -1 : i32
    %45 = vector.broadcast %c-1_i32 : i32 to vector<1x256xi32>
    %46 = arith.addi %43, %45 : vector<1x256xi32>
    %c0_i32_31 = arith.constant 0 : i32
    %47 = vector.broadcast %c0_i32_31 : i32 to vector<1x256xi32>
    %48 = arith.cmpi sge, %46, %47 : vector<1x256xi32>
    %c-1_i32_32 = arith.constant -1 : i32
    %49 = vector.broadcast %c-1_i32_32 : i32 to vector<1x256xi32>
    %50 = arith.addi %43, %49 : vector<1x256xi32>
    %c16_i32_33 = arith.constant 16 : i32
    %51 = vector.broadcast %c16_i32_33 : i32 to vector<1x256xi32>
    %52 = arith.cmpi slt, %50, %51 : vector<1x256xi32>
    %53 = arith.andi %48, %52 : vector<1x256xi1>
    %cst_34 = arith.constant 0.000000e+00 : bf16
    %54 = vector.broadcast %cst_34 : bf16 to vector<4x256xbf16>
    %55 = vector.shape_cast %53 : vector<1x256xi1> to vector<1x256xi1>
    %56 = vector.broadcast %55 : vector<1x256xi1> to vector<4x256xi1>
    %57 = arith.select %56, %44, %54 : vector<4x256xi1>, vector<4x256xbf16>
    %58 = vector.extract_strided_slice %26 {offsets = [0, 1], sizes = [4, 256], strides = [1, 1]} : vector<4x290xbf16> to vector<4x256xbf16>
    %59 = vector.extract_strided_slice %26 {offsets = [0, 2], sizes = [4, 256], strides = [1, 1]} : vector<4x290xbf16> to vector<4x256xbf16>
    %c1_i32_35 = arith.constant 1 : i32
    %60 = vector.broadcast %c1_i32_35 : i32 to vector<1x256xi32>
    %61 = arith.addi %43, %60 : vector<1x256xi32>
    %c0_i32_36 = arith.constant 0 : i32
    %62 = vector.broadcast %c0_i32_36 : i32 to vector<1x256xi32>
    %63 = arith.cmpi sge, %61, %62 : vector<1x256xi32>
    %c1_i32_37 = arith.constant 1 : i32
    %64 = vector.broadcast %c1_i32_37 : i32 to vector<1x256xi32>
    %65 = arith.addi %43, %64 : vector<1x256xi32>
    %c16_i32_38 = arith.constant 16 : i32
    %66 = vector.broadcast %c16_i32_38 : i32 to vector<1x256xi32>
    %67 = arith.cmpi slt, %65, %66 : vector<1x256xi32>
    %68 = arith.andi %63, %67 : vector<1x256xi1>
    %cst_39 = arith.constant 0.000000e+00 : bf16
    %69 = vector.broadcast %cst_39 : bf16 to vector<4x256xbf16>
    %70 = vector.shape_cast %68 : vector<1x256xi1> to vector<1x256xi1>
    %71 = vector.broadcast %70 : vector<1x256xi1> to vector<4x256xi1>
    %72 = arith.select %71, %59, %69 : vector<4x256xi1>, vector<4x256xbf16>
    %73 = vector.extract_strided_slice %26 {offsets = [0, 16], sizes = [4, 256], strides = [1, 1]} : vector<4x290xbf16> to vector<4x256xbf16>
    %c-1_i32_40 = arith.constant -1 : i32
    %74 = vector.broadcast %c-1_i32_40 : i32 to vector<1x256xi32>
    %75 = arith.addi %43, %74 : vector<1x256xi32>
    %c0_i32_41 = arith.constant 0 : i32
    %76 = vector.broadcast %c0_i32_41 : i32 to vector<1x256xi32>
    %77 = arith.cmpi sge, %75, %76 : vector<1x256xi32>
    %c-1_i32_42 = arith.constant -1 : i32
    %78 = vector.broadcast %c-1_i32_42 : i32 to vector<1x256xi32>
    %79 = arith.addi %43, %78 : vector<1x256xi32>
    %c16_i32_43 = arith.constant 16 : i32
    %80 = vector.broadcast %c16_i32_43 : i32 to vector<1x256xi32>
    %81 = arith.cmpi slt, %79, %80 : vector<1x256xi32>
    %82 = arith.andi %77, %81 : vector<1x256xi1>
    %cst_44 = arith.constant 0.000000e+00 : bf16
    %83 = vector.broadcast %cst_44 : bf16 to vector<4x256xbf16>
    %84 = vector.shape_cast %82 : vector<1x256xi1> to vector<1x256xi1>
    %85 = vector.broadcast %84 : vector<1x256xi1> to vector<4x256xi1>
    %86 = arith.select %85, %73, %83 : vector<4x256xi1>, vector<4x256xbf16>
    %87 = vector.extract_strided_slice %26 {offsets = [0, 17], sizes = [4, 256], strides = [1, 1]} : vector<4x290xbf16> to vector<4x256xbf16>
    %88 = vector.extract_strided_slice %26 {offsets = [0, 18], sizes = [4, 256], strides = [1, 1]} : vector<4x290xbf16> to vector<4x256xbf16>
    %c1_i32_45 = arith.constant 1 : i32
    %89 = vector.broadcast %c1_i32_45 : i32 to vector<1x256xi32>
    %90 = arith.addi %43, %89 : vector<1x256xi32>
    %c0_i32_46 = arith.constant 0 : i32
    %91 = vector.broadcast %c0_i32_46 : i32 to vector<1x256xi32>
    %92 = arith.cmpi sge, %90, %91 : vector<1x256xi32>
    %c1_i32_47 = arith.constant 1 : i32
    %93 = vector.broadcast %c1_i32_47 : i32 to vector<1x256xi32>
    %94 = arith.addi %43, %93 : vector<1x256xi32>
    %c16_i32_48 = arith.constant 16 : i32
    %95 = vector.broadcast %c16_i32_48 : i32 to vector<1x256xi32>
    %96 = arith.cmpi slt, %94, %95 : vector<1x256xi32>
    %97 = arith.andi %92, %96 : vector<1x256xi1>
    %cst_49 = arith.constant 0.000000e+00 : bf16
    %98 = vector.broadcast %cst_49 : bf16 to vector<4x256xbf16>
    %99 = vector.shape_cast %97 : vector<1x256xi1> to vector<1x256xi1>
    %100 = vector.broadcast %99 : vector<1x256xi1> to vector<4x256xi1>
    %101 = arith.select %100, %88, %98 : vector<4x256xi1>, vector<4x256xbf16>
    %102 = vector.extract_strided_slice %26 {offsets = [0, 32], sizes = [4, 256], strides = [1, 1]} : vector<4x290xbf16> to vector<4x256xbf16>
    %c-1_i32_50 = arith.constant -1 : i32
    %103 = vector.broadcast %c-1_i32_50 : i32 to vector<1x256xi32>
    %104 = arith.addi %43, %103 : vector<1x256xi32>
    %c0_i32_51 = arith.constant 0 : i32
    %105 = vector.broadcast %c0_i32_51 : i32 to vector<1x256xi32>
    %106 = arith.cmpi sge, %104, %105 : vector<1x256xi32>
    %c-1_i32_52 = arith.constant -1 : i32
    %107 = vector.broadcast %c-1_i32_52 : i32 to vector<1x256xi32>
    %108 = arith.addi %43, %107 : vector<1x256xi32>
    %c16_i32_53 = arith.constant 16 : i32
    %109 = vector.broadcast %c16_i32_53 : i32 to vector<1x256xi32>
    %110 = arith.cmpi slt, %108, %109 : vector<1x256xi32>
    %111 = arith.andi %106, %110 : vector<1x256xi1>
    %cst_54 = arith.constant 0.000000e+00 : bf16
    %112 = vector.broadcast %cst_54 : bf16 to vector<4x256xbf16>
    %113 = vector.shape_cast %111 : vector<1x256xi1> to vector<1x256xi1>
    %114 = vector.broadcast %113 : vector<1x256xi1> to vector<4x256xi1>
    %115 = arith.select %114, %102, %112 : vector<4x256xi1>, vector<4x256xbf16>
    %116 = vector.extract_strided_slice %26 {offsets = [0, 33], sizes = [4, 256], strides = [1, 1]} : vector<4x290xbf16> to vector<4x256xbf16>
    %117 = vector.extract_strided_slice %26 {offsets = [0, 34], sizes = [4, 256], strides = [1, 1]} : vector<4x290xbf16> to vector<4x256xbf16>
    %c1_i32_55 = arith.constant 1 : i32
    %118 = vector.broadcast %c1_i32_55 : i32 to vector<1x256xi32>
    %119 = arith.addi %43, %118 : vector<1x256xi32>
    %c0_i32_56 = arith.constant 0 : i32
    %120 = vector.broadcast %c0_i32_56 : i32 to vector<1x256xi32>
    %121 = arith.cmpi sge, %119, %120 : vector<1x256xi32>
    %c1_i32_57 = arith.constant 1 : i32
    %122 = vector.broadcast %c1_i32_57 : i32 to vector<1x256xi32>
    %123 = arith.addi %43, %122 : vector<1x256xi32>
    %c16_i32_58 = arith.constant 16 : i32
    %124 = vector.broadcast %c16_i32_58 : i32 to vector<1x256xi32>
    %125 = arith.cmpi slt, %123, %124 : vector<1x256xi32>
    %126 = arith.andi %121, %125 : vector<1x256xi1>
    %cst_59 = arith.constant 0.000000e+00 : bf16
    %127 = vector.broadcast %cst_59 : bf16 to vector<4x256xbf16>
    %128 = vector.shape_cast %126 : vector<1x256xi1> to vector<1x256xi1>
    %129 = vector.broadcast %128 : vector<1x256xi1> to vector<4x256xi1>
    %130 = arith.select %129, %117, %127 : vector<4x256xi1>, vector<4x256xbf16>
    %131 = tpu.concatenate %57, %58, %72, %86, %87, %101, %115, %116, %130 in 0 : vector<4x256xbf16>, vector<4x256xbf16>, vector<4x256xbf16>, vector<4x256xbf16>, vector<4x256xbf16>, vector<4x256xbf16>, vector<4x256xbf16>, vector<4x256xbf16>, vector<4x256xbf16> -> vector<36x256xbf16>
    %cst_60 = arith.constant dense<0.000000e+00> : vector<8x256xf32>
    %132 = tpu.matmul %3, %131, %cst_60 {dimension_numbers = #tpu.dot_dimension_numbers<[1], [0], [0], [1], [0, 0, 1, 1], [], []>} : vector<8x36xbf16>, vector<36x256xbf16>, vector<8x256xf32> -> vector<8x256xf32>
    %133 = vector.broadcast %4 : vector<8x1xf32> to vector<8x256xf32>
    %134 = arith.mulf %132, %133 : vector<8x256xf32>
    %135 = vector.broadcast %5 : vector<8x1xf32> to vector<8x256xf32>
    %136 = arith.addf %134, %135 : vector<8x256xf32>
    %cst_61 = arith.constant 0.000000e+00 : f32
    %137 = vector.broadcast %cst_61 : f32 to vector<8x256xf32>
    %138 = arith.maximumf %136, %137 : vector<8x256xf32>
    %139 = vector.extract_strided_slice %21 {offsets = [12, 0], sizes = [4, 256], strides = [1, 1]} : vector<16x256xf32> to vector<4x256xf32>
    %140 = arith.truncf %139 : vector<4x256xf32> to vector<4x256xbf16>
    %cst_62 = arith.constant 0.000000e+00 : bf16
    %141 = vector.broadcast %cst_62 : bf16 to vector<4x34xbf16>
    %142 = tpu.concatenate %141, %140, %141 in 1 : vector<4x34xbf16>, vector<4x256xbf16>, vector<4x34xbf16> -> vector<4x324xbf16>
    %143 = tpu.iota {dimensions = array<i32: 1>} : vector<1x256xi32>
    %c16_i32_63 = arith.constant 16 : i32
    %c0_i32_64 = arith.constant 0 : i32
    %144 = arith.cmpi eq, %c16_i32_63, %c0_i32_64 : i32
    %c1_i32_65 = arith.constant 1 : i32
    %145 = arith.select %144, %c1_i32_65, %c16_i32_63 : i32
    %146 = vector.broadcast %145 : i32 to vector<1x256xi32>
    %147 = arith.remsi %143, %146 : vector<1x256xi32>
    %c0_i32_66 = arith.constant 0 : i32
    %148 = vector.broadcast %c0_i32_66 : i32 to vector<1x256xi32>
    %149 = arith.cmpi ne, %147, %148 : vector<1x256xi32>
    %c0_i32_67 = arith.constant 0 : i32
    %150 = vector.broadcast %c0_i32_67 : i32 to vector<1x256xi32>
    %151 = arith.cmpi slt, %147, %150 : vector<1x256xi32>
    %c0_i32_68 = arith.constant 0 : i32
    %152 = arith.cmpi slt, %145, %c0_i32_68 : i32
    %153 = vector.broadcast %152 : i1 to vector<1x256xi1>
    %154 = vector.broadcast %153 : vector<1x256xi1> to vector<1x256xi1>
    %155 = arith.xori %151, %154 : vector<1x256xi1>
    %156 = arith.andi %155, %149 : vector<1x256xi1>
    %157 = vector.broadcast %145 : i32 to vector<1x256xi32>
    %158 = arith.addi %147, %157 : vector<1x256xi32>
    %159 = arith.select %156, %158, %147 : vector<1x256xi1>, vector<1x256xi32>
    %160 = vector.extract_strided_slice %142 {offsets = [0, 0], sizes = [4, 256], strides = [1, 1]} : vector<4x324xbf16> to vector<4x256xbf16>
    %c-2_i32 = arith.constant -2 : i32
    %161 = vector.broadcast %c-2_i32 : i32 to vector<1x256xi32>
    %162 = arith.addi %159, %161 : vector<1x256xi32>
    %c0_i32_69 = arith.constant 0 : i32
    %163 = vector.broadcast %c0_i32_69 : i32 to vector<1x256xi32>
    %164 = arith.cmpi sge, %162, %163 : vector<1x256xi32>
    %c-2_i32_70 = arith.constant -2 : i32
    %165 = vector.broadcast %c-2_i32_70 : i32 to vector<1x256xi32>
    %166 = arith.addi %159, %165 : vector<1x256xi32>
    %c16_i32_71 = arith.constant 16 : i32
    %167 = vector.broadcast %c16_i32_71 : i32 to vector<1x256xi32>
    %168 = arith.cmpi slt, %166, %167 : vector<1x256xi32>
    %169 = arith.andi %164, %168 : vector<1x256xi1>
    %cst_72 = arith.constant 0.000000e+00 : bf16
    %170 = vector.broadcast %cst_72 : bf16 to vector<4x256xbf16>
    %171 = vector.shape_cast %169 : vector<1x256xi1> to vector<1x256xi1>
    %172 = vector.broadcast %171 : vector<1x256xi1> to vector<4x256xi1>
    %173 = arith.select %172, %160, %170 : vector<4x256xi1>, vector<4x256xbf16>
    %174 = vector.extract_strided_slice %142 {offsets = [0, 1], sizes = [4, 256], strides = [1, 1]} : vector<4x324xbf16> to vector<4x256xbf16>
    %c-1_i32_73 = arith.constant -1 : i32
    %175 = vector.broadcast %c-1_i32_73 : i32 to vector<1x256xi32>
    %176 = arith.addi %159, %175 : vector<1x256xi32>
    %c0_i32_74 = arith.constant 0 : i32
    %177 = vector.broadcast %c0_i32_74 : i32 to vector<1x256xi32>
    %178 = arith.cmpi sge, %176, %177 : vector<1x256xi32>
    %c-1_i32_75 = arith.constant -1 : i32
    %179 = vector.broadcast %c-1_i32_75 : i32 to vector<1x256xi32>
    %180 = arith.addi %159, %179 : vector<1x256xi32>
    %c16_i32_76 = arith.constant 16 : i32
    %181 = vector.broadcast %c16_i32_76 : i32 to vector<1x256xi32>
    %182 = arith.cmpi slt, %180, %181 : vector<1x256xi32>
    %183 = arith.andi %178, %182 : vector<1x256xi1>
    %cst_77 = arith.constant 0.000000e+00 : bf16
    %184 = vector.broadcast %cst_77 : bf16 to vector<4x256xbf16>
    %185 = vector.shape_cast %183 : vector<1x256xi1> to vector<1x256xi1>
    %186 = vector.broadcast %185 : vector<1x256xi1> to vector<4x256xi1>
    %187 = arith.select %186, %174, %184 : vector<4x256xi1>, vector<4x256xbf16>
    %188 = vector.extract_strided_slice %142 {offsets = [0, 2], sizes = [4, 256], strides = [1, 1]} : vector<4x324xbf16> to vector<4x256xbf16>
    %189 = vector.extract_strided_slice %142 {offsets = [0, 3], sizes = [4, 256], strides = [1, 1]} : vector<4x324xbf16> to vector<4x256xbf16>
    %c1_i32_78 = arith.constant 1 : i32
    %190 = vector.broadcast %c1_i32_78 : i32 to vector<1x256xi32>
    %191 = arith.addi %159, %190 : vector<1x256xi32>
    %c0_i32_79 = arith.constant 0 : i32
    %192 = vector.broadcast %c0_i32_79 : i32 to vector<1x256xi32>
    %193 = arith.cmpi sge, %191, %192 : vector<1x256xi32>
    %c1_i32_80 = arith.constant 1 : i32
    %194 = vector.broadcast %c1_i32_80 : i32 to vector<1x256xi32>
    %195 = arith.addi %159, %194 : vector<1x256xi32>
    %c16_i32_81 = arith.constant 16 : i32
    %196 = vector.broadcast %c16_i32_81 : i32 to vector<1x256xi32>
    %197 = arith.cmpi slt, %195, %196 : vector<1x256xi32>
    %198 = arith.andi %193, %197 : vector<1x256xi1>
    %cst_82 = arith.constant 0.000000e+00 : bf16
    %199 = vector.broadcast %cst_82 : bf16 to vector<4x256xbf16>
    %200 = vector.shape_cast %198 : vector<1x256xi1> to vector<1x256xi1>
    %201 = vector.broadcast %200 : vector<1x256xi1> to vector<4x256xi1>
    %202 = arith.select %201, %189, %199 : vector<4x256xi1>, vector<4x256xbf16>
    %203 = vector.extract_strided_slice %142 {offsets = [0, 4], sizes = [4, 256], strides = [1, 1]} : vector<4x324xbf16> to vector<4x256xbf16>
    %c2_i32 = arith.constant 2 : i32
    %204 = vector.broadcast %c2_i32 : i32 to vector<1x256xi32>
    %205 = arith.addi %159, %204 : vector<1x256xi32>
    %c0_i32_83 = arith.constant 0 : i32
    %206 = vector.broadcast %c0_i32_83 : i32 to vector<1x256xi32>
    %207 = arith.cmpi sge, %205, %206 : vector<1x256xi32>
    %c2_i32_84 = arith.constant 2 : i32
    %208 = vector.broadcast %c2_i32_84 : i32 to vector<1x256xi32>
    %209 = arith.addi %159, %208 : vector<1x256xi32>
    %c16_i32_85 = arith.constant 16 : i32
    %210 = vector.broadcast %c16_i32_85 : i32 to vector<1x256xi32>
    %211 = arith.cmpi slt, %209, %210 : vector<1x256xi32>
    %212 = arith.andi %207, %211 : vector<1x256xi1>
    %cst_86 = arith.constant 0.000000e+00 : bf16
    %213 = vector.broadcast %cst_86 : bf16 to vector<4x256xbf16>
    %214 = vector.shape_cast %212 : vector<1x256xi1> to vector<1x256xi1>
    %215 = vector.broadcast %214 : vector<1x256xi1> to vector<4x256xi1>
    %216 = arith.select %215, %203, %213 : vector<4x256xi1>, vector<4x256xbf16>
    %217 = vector.extract_strided_slice %142 {offsets = [0, 16], sizes = [4, 256], strides = [1, 1]} : vector<4x324xbf16> to vector<4x256xbf16>
    %c-2_i32_87 = arith.constant -2 : i32
    %218 = vector.broadcast %c-2_i32_87 : i32 to vector<1x256xi32>
    %219 = arith.addi %159, %218 : vector<1x256xi32>
    %c0_i32_88 = arith.constant 0 : i32
    %220 = vector.broadcast %c0_i32_88 : i32 to vector<1x256xi32>
    %221 = arith.cmpi sge, %219, %220 : vector<1x256xi32>
    %c-2_i32_89 = arith.constant -2 : i32
    %222 = vector.broadcast %c-2_i32_89 : i32 to vector<1x256xi32>
    %223 = arith.addi %159, %222 : vector<1x256xi32>
    %c16_i32_90 = arith.constant 16 : i32
    %224 = vector.broadcast %c16_i32_90 : i32 to vector<1x256xi32>
    %225 = arith.cmpi slt, %223, %224 : vector<1x256xi32>
    %226 = arith.andi %221, %225 : vector<1x256xi1>
    %cst_91 = arith.constant 0.000000e+00 : bf16
    %227 = vector.broadcast %cst_91 : bf16 to vector<4x256xbf16>
    %228 = vector.shape_cast %226 : vector<1x256xi1> to vector<1x256xi1>
    %229 = vector.broadcast %228 : vector<1x256xi1> to vector<4x256xi1>
    %230 = arith.select %229, %217, %227 : vector<4x256xi1>, vector<4x256xbf16>
    %231 = vector.extract_strided_slice %142 {offsets = [0, 17], sizes = [4, 256], strides = [1, 1]} : vector<4x324xbf16> to vector<4x256xbf16>
    %c-1_i32_92 = arith.constant -1 : i32
    %232 = vector.broadcast %c-1_i32_92 : i32 to vector<1x256xi32>
    %233 = arith.addi %159, %232 : vector<1x256xi32>
    %c0_i32_93 = arith.constant 0 : i32
    %234 = vector.broadcast %c0_i32_93 : i32 to vector<1x256xi32>
    %235 = arith.cmpi sge, %233, %234 : vector<1x256xi32>
    %c-1_i32_94 = arith.constant -1 : i32
    %236 = vector.broadcast %c-1_i32_94 : i32 to vector<1x256xi32>
    %237 = arith.addi %159, %236 : vector<1x256xi32>
    %c16_i32_95 = arith.constant 16 : i32
    %238 = vector.broadcast %c16_i32_95 : i32 to vector<1x256xi32>
    %239 = arith.cmpi slt, %237, %238 : vector<1x256xi32>
    %240 = arith.andi %235, %239 : vector<1x256xi1>
    %cst_96 = arith.constant 0.000000e+00 : bf16
    %241 = vector.broadcast %cst_96 : bf16 to vector<4x256xbf16>
    %242 = vector.shape_cast %240 : vector<1x256xi1> to vector<1x256xi1>
    %243 = vector.broadcast %242 : vector<1x256xi1> to vector<4x256xi1>
    %244 = arith.select %243, %231, %241 : vector<4x256xi1>, vector<4x256xbf16>
    %245 = vector.extract_strided_slice %142 {offsets = [0, 18], sizes = [4, 256], strides = [1, 1]} : vector<4x324xbf16> to vector<4x256xbf16>
    %246 = vector.extract_strided_slice %142 {offsets = [0, 19], sizes = [4, 256], strides = [1, 1]} : vector<4x324xbf16> to vector<4x256xbf16>
    %c1_i32_97 = arith.constant 1 : i32
    %247 = vector.broadcast %c1_i32_97 : i32 to vector<1x256xi32>
    %248 = arith.addi %159, %247 : vector<1x256xi32>
    %c0_i32_98 = arith.constant 0 : i32
    %249 = vector.broadcast %c0_i32_98 : i32 to vector<1x256xi32>
    %250 = arith.cmpi sge, %248, %249 : vector<1x256xi32>
    %c1_i32_99 = arith.constant 1 : i32
    %251 = vector.broadcast %c1_i32_99 : i32 to vector<1x256xi32>
    %252 = arith.addi %159, %251 : vector<1x256xi32>
    %c16_i32_100 = arith.constant 16 : i32
    %253 = vector.broadcast %c16_i32_100 : i32 to vector<1x256xi32>
    %254 = arith.cmpi slt, %252, %253 : vector<1x256xi32>
    %255 = arith.andi %250, %254 : vector<1x256xi1>
    %cst_101 = arith.constant 0.000000e+00 : bf16
    %256 = vector.broadcast %cst_101 : bf16 to vector<4x256xbf16>
    %257 = vector.shape_cast %255 : vector<1x256xi1> to vector<1x256xi1>
    %258 = vector.broadcast %257 : vector<1x256xi1> to vector<4x256xi1>
    %259 = arith.select %258, %246, %256 : vector<4x256xi1>, vector<4x256xbf16>
    %260 = vector.extract_strided_slice %142 {offsets = [0, 20], sizes = [4, 256], strides = [1, 1]} : vector<4x324xbf16> to vector<4x256xbf16>
    %c2_i32_102 = arith.constant 2 : i32
    %261 = vector.broadcast %c2_i32_102 : i32 to vector<1x256xi32>
    %262 = arith.addi %159, %261 : vector<1x256xi32>
    %c0_i32_103 = arith.constant 0 : i32
    %263 = vector.broadcast %c0_i32_103 : i32 to vector<1x256xi32>
    %264 = arith.cmpi sge, %262, %263 : vector<1x256xi32>
    %c2_i32_104 = arith.constant 2 : i32
    %265 = vector.broadcast %c2_i32_104 : i32 to vector<1x256xi32>
    %266 = arith.addi %159, %265 : vector<1x256xi32>
    %c16_i32_105 = arith.constant 16 : i32
    %267 = vector.broadcast %c16_i32_105 : i32 to vector<1x256xi32>
    %268 = arith.cmpi slt, %266, %267 : vector<1x256xi32>
    %269 = arith.andi %264, %268 : vector<1x256xi1>
    %cst_106 = arith.constant 0.000000e+00 : bf16
    %270 = vector.broadcast %cst_106 : bf16 to vector<4x256xbf16>
    %271 = vector.shape_cast %269 : vector<1x256xi1> to vector<1x256xi1>
    %272 = vector.broadcast %271 : vector<1x256xi1> to vector<4x256xi1>
    %273 = arith.select %272, %260, %270 : vector<4x256xi1>, vector<4x256xbf16>
    %274 = vector.extract_strided_slice %142 {offsets = [0, 32], sizes = [4, 256], strides = [1, 1]} : vector<4x324xbf16> to vector<4x256xbf16>
    %c-2_i32_107 = arith.constant -2 : i32
    %275 = vector.broadcast %c-2_i32_107 : i32 to vector<1x256xi32>
    %276 = arith.addi %159, %275 : vector<1x256xi32>
    %c0_i32_108 = arith.constant 0 : i32
    %277 = vector.broadcast %c0_i32_108 : i32 to vector<1x256xi32>
    %278 = arith.cmpi sge, %276, %277 : vector<1x256xi32>
    %c-2_i32_109 = arith.constant -2 : i32
    %279 = vector.broadcast %c-2_i32_109 : i32 to vector<1x256xi32>
    %280 = arith.addi %159, %279 : vector<1x256xi32>
    %c16_i32_110 = arith.constant 16 : i32
    %281 = vector.broadcast %c16_i32_110 : i32 to vector<1x256xi32>
    %282 = arith.cmpi slt, %280, %281 : vector<1x256xi32>
    %283 = arith.andi %278, %282 : vector<1x256xi1>
    %cst_111 = arith.constant 0.000000e+00 : bf16
    %284 = vector.broadcast %cst_111 : bf16 to vector<4x256xbf16>
    %285 = vector.shape_cast %283 : vector<1x256xi1> to vector<1x256xi1>
    %286 = vector.broadcast %285 : vector<1x256xi1> to vector<4x256xi1>
    %287 = arith.select %286, %274, %284 : vector<4x256xi1>, vector<4x256xbf16>
    %288 = vector.extract_strided_slice %142 {offsets = [0, 33], sizes = [4, 256], strides = [1, 1]} : vector<4x324xbf16> to vector<4x256xbf16>
    %c-1_i32_112 = arith.constant -1 : i32
    %289 = vector.broadcast %c-1_i32_112 : i32 to vector<1x256xi32>
    %290 = arith.addi %159, %289 : vector<1x256xi32>
    %c0_i32_113 = arith.constant 0 : i32
    %291 = vector.broadcast %c0_i32_113 : i32 to vector<1x256xi32>
    %292 = arith.cmpi sge, %290, %291 : vector<1x256xi32>
    %c-1_i32_114 = arith.constant -1 : i32
    %293 = vector.broadcast %c-1_i32_114 : i32 to vector<1x256xi32>
    %294 = arith.addi %159, %293 : vector<1x256xi32>
    %c16_i32_115 = arith.constant 16 : i32
    %295 = vector.broadcast %c16_i32_115 : i32 to vector<1x256xi32>
    %296 = arith.cmpi slt, %294, %295 : vector<1x256xi32>
    %297 = arith.andi %292, %296 : vector<1x256xi1>
    %cst_116 = arith.constant 0.000000e+00 : bf16
    %298 = vector.broadcast %cst_116 : bf16 to vector<4x256xbf16>
    %299 = vector.shape_cast %297 : vector<1x256xi1> to vector<1x256xi1>
    %300 = vector.broadcast %299 : vector<1x256xi1> to vector<4x256xi1>
    %301 = arith.select %300, %288, %298 : vector<4x256xi1>, vector<4x256xbf16>
    %302 = vector.extract_strided_slice %142 {offsets = [0, 34], sizes = [4, 256], strides = [1, 1]} : vector<4x324xbf16> to vector<4x256xbf16>
    %303 = vector.extract_strided_slice %142 {offsets = [0, 35], sizes = [4, 256], strides = [1, 1]} : vector<4x324xbf16> to vector<4x256xbf16>
    %c1_i32_117 = arith.constant 1 : i32
    %304 = vector.broadcast %c1_i32_117 : i32 to vector<1x256xi32>
    %305 = arith.addi %159, %304 : vector<1x256xi32>
    %c0_i32_118 = arith.constant 0 : i32
    %306 = vector.broadcast %c0_i32_118 : i32 to vector<1x256xi32>
    %307 = arith.cmpi sge, %305, %306 : vector<1x256xi32>
    %c1_i32_119 = arith.constant 1 : i32
    %308 = vector.broadcast %c1_i32_119 : i32 to vector<1x256xi32>
    %309 = arith.addi %159, %308 : vector<1x256xi32>
    %c16_i32_120 = arith.constant 16 : i32
    %310 = vector.broadcast %c16_i32_120 : i32 to vector<1x256xi32>
    %311 = arith.cmpi slt, %309, %310 : vector<1x256xi32>
    %312 = arith.andi %307, %311 : vector<1x256xi1>
    %cst_121 = arith.constant 0.000000e+00 : bf16
    %313 = vector.broadcast %cst_121 : bf16 to vector<4x256xbf16>
    %314 = vector.shape_cast %312 : vector<1x256xi1> to vector<1x256xi1>
    %315 = vector.broadcast %314 : vector<1x256xi1> to vector<4x256xi1>
    %316 = arith.select %315, %303, %313 : vector<4x256xi1>, vector<4x256xbf16>
    %317 = vector.extract_strided_slice %142 {offsets = [0, 36], sizes = [4, 256], strides = [1, 1]} : vector<4x324xbf16> to vector<4x256xbf16>
    %c2_i32_122 = arith.constant 2 : i32
    %318 = vector.broadcast %c2_i32_122 : i32 to vector<1x256xi32>
    %319 = arith.addi %159, %318 : vector<1x256xi32>
    %c0_i32_123 = arith.constant 0 : i32
    %320 = vector.broadcast %c0_i32_123 : i32 to vector<1x256xi32>
    %321 = arith.cmpi sge, %319, %320 : vector<1x256xi32>
    %c2_i32_124 = arith.constant 2 : i32
    %322 = vector.broadcast %c2_i32_124 : i32 to vector<1x256xi32>
    %323 = arith.addi %159, %322 : vector<1x256xi32>
    %c16_i32_125 = arith.constant 16 : i32
    %324 = vector.broadcast %c16_i32_125 : i32 to vector<1x256xi32>
    %325 = arith.cmpi slt, %323, %324 : vector<1x256xi32>
    %326 = arith.andi %321, %325 : vector<1x256xi1>
    %cst_126 = arith.constant 0.000000e+00 : bf16
    %327 = vector.broadcast %cst_126 : bf16 to vector<4x256xbf16>
    %328 = vector.shape_cast %326 : vector<1x256xi1> to vector<1x256xi1>
    %329 = vector.broadcast %328 : vector<1x256xi1> to vector<4x256xi1>
    %330 = arith.select %329, %317, %327 : vector<4x256xi1>, vector<4x256xbf16>
    %331 = vector.extract_strided_slice %142 {offsets = [0, 48], sizes = [4, 256], strides = [1, 1]} : vector<4x324xbf16> to vector<4x256xbf16>
    %c-2_i32_127 = arith.constant -2 : i32
    %332 = vector.broadcast %c-2_i32_127 : i32 to vector<1x256xi32>
    %333 = arith.addi %159, %332 : vector<1x256xi32>
    %c0_i32_128 = arith.constant 0 : i32
    %334 = vector.broadcast %c0_i32_128 : i32 to vector<1x256xi32>
    %335 = arith.cmpi sge, %333, %334 : vector<1x256xi32>
    %c-2_i32_129 = arith.constant -2 : i32
    %336 = vector.broadcast %c-2_i32_129 : i32 to vector<1x256xi32>
    %337 = arith.addi %159, %336 : vector<1x256xi32>
    %c16_i32_130 = arith.constant 16 : i32
    %338 = vector.broadcast %c16_i32_130 : i32 to vector<1x256xi32>
    %339 = arith.cmpi slt, %337, %338 : vector<1x256xi32>
    %340 = arith.andi %335, %339 : vector<1x256xi1>
    %cst_131 = arith.constant 0.000000e+00 : bf16
    %341 = vector.broadcast %cst_131 : bf16 to vector<4x256xbf16>
    %342 = vector.shape_cast %340 : vector<1x256xi1> to vector<1x256xi1>
    %343 = vector.broadcast %342 : vector<1x256xi1> to vector<4x256xi1>
    %344 = arith.select %343, %331, %341 : vector<4x256xi1>, vector<4x256xbf16>
    %345 = vector.extract_strided_slice %142 {offsets = [0, 49], sizes = [4, 256], strides = [1, 1]} : vector<4x324xbf16> to vector<4x256xbf16>
    %c-1_i32_132 = arith.constant -1 : i32
    %346 = vector.broadcast %c-1_i32_132 : i32 to vector<1x256xi32>
    %347 = arith.addi %159, %346 : vector<1x256xi32>
    %c0_i32_133 = arith.constant 0 : i32
    %348 = vector.broadcast %c0_i32_133 : i32 to vector<1x256xi32>
    %349 = arith.cmpi sge, %347, %348 : vector<1x256xi32>
    %c-1_i32_134 = arith.constant -1 : i32
    %350 = vector.broadcast %c-1_i32_134 : i32 to vector<1x256xi32>
    %351 = arith.addi %159, %350 : vector<1x256xi32>
    %c16_i32_135 = arith.constant 16 : i32
    %352 = vector.broadcast %c16_i32_135 : i32 to vector<1x256xi32>
    %353 = arith.cmpi slt, %351, %352 : vector<1x256xi32>
    %354 = arith.andi %349, %353 : vector<1x256xi1>
    %cst_136 = arith.constant 0.000000e+00 : bf16
    %355 = vector.broadcast %cst_136 : bf16 to vector<4x256xbf16>
    %356 = vector.shape_cast %354 : vector<1x256xi1> to vector<1x256xi1>
    %357 = vector.broadcast %356 : vector<1x256xi1> to vector<4x256xi1>
    %358 = arith.select %357, %345, %355 : vector<4x256xi1>, vector<4x256xbf16>
    %359 = vector.extract_strided_slice %142 {offsets = [0, 50], sizes = [4, 256], strides = [1, 1]} : vector<4x324xbf16> to vector<4x256xbf16>
    %360 = vector.extract_strided_slice %142 {offsets = [0, 51], sizes = [4, 256], strides = [1, 1]} : vector<4x324xbf16> to vector<4x256xbf16>
    %c1_i32_137 = arith.constant 1 : i32
    %361 = vector.broadcast %c1_i32_137 : i32 to vector<1x256xi32>
    %362 = arith.addi %159, %361 : vector<1x256xi32>
    %c0_i32_138 = arith.constant 0 : i32
    %363 = vector.broadcast %c0_i32_138 : i32 to vector<1x256xi32>
    %364 = arith.cmpi sge, %362, %363 : vector<1x256xi32>
    %c1_i32_139 = arith.constant 1 : i32
    %365 = vector.broadcast %c1_i32_139 : i32 to vector<1x256xi32>
    %366 = arith.addi %159, %365 : vector<1x256xi32>
    %c16_i32_140 = arith.constant 16 : i32
    %367 = vector.broadcast %c16_i32_140 : i32 to vector<1x256xi32>
    %368 = arith.cmpi slt, %366, %367 : vector<1x256xi32>
    %369 = arith.andi %364, %368 : vector<1x256xi1>
    %cst_141 = arith.constant 0.000000e+00 : bf16
    %370 = vector.broadcast %cst_141 : bf16 to vector<4x256xbf16>
    %371 = vector.shape_cast %369 : vector<1x256xi1> to vector<1x256xi1>
    %372 = vector.broadcast %371 : vector<1x256xi1> to vector<4x256xi1>
    %373 = arith.select %372, %360, %370 : vector<4x256xi1>, vector<4x256xbf16>
    %374 = vector.extract_strided_slice %142 {offsets = [0, 52], sizes = [4, 256], strides = [1, 1]} : vector<4x324xbf16> to vector<4x256xbf16>
    %c2_i32_142 = arith.constant 2 : i32
    %375 = vector.broadcast %c2_i32_142 : i32 to vector<1x256xi32>
    %376 = arith.addi %159, %375 : vector<1x256xi32>
    %c0_i32_143 = arith.constant 0 : i32
    %377 = vector.broadcast %c0_i32_143 : i32 to vector<1x256xi32>
    %378 = arith.cmpi sge, %376, %377 : vector<1x256xi32>
    %c2_i32_144 = arith.constant 2 : i32
    %379 = vector.broadcast %c2_i32_144 : i32 to vector<1x256xi32>
    %380 = arith.addi %159, %379 : vector<1x256xi32>
    %c16_i32_145 = arith.constant 16 : i32
    %381 = vector.broadcast %c16_i32_145 : i32 to vector<1x256xi32>
    %382 = arith.cmpi slt, %380, %381 : vector<1x256xi32>
    %383 = arith.andi %378, %382 : vector<1x256xi1>
    %cst_146 = arith.constant 0.000000e+00 : bf16
    %384 = vector.broadcast %cst_146 : bf16 to vector<4x256xbf16>
    %385 = vector.shape_cast %383 : vector<1x256xi1> to vector<1x256xi1>
    %386 = vector.broadcast %385 : vector<1x256xi1> to vector<4x256xi1>
    %387 = arith.select %386, %374, %384 : vector<4x256xi1>, vector<4x256xbf16>
    %388 = vector.extract_strided_slice %142 {offsets = [0, 64], sizes = [4, 256], strides = [1, 1]} : vector<4x324xbf16> to vector<4x256xbf16>
    %c-2_i32_147 = arith.constant -2 : i32
    %389 = vector.broadcast %c-2_i32_147 : i32 to vector<1x256xi32>
    %390 = arith.addi %159, %389 : vector<1x256xi32>
    %c0_i32_148 = arith.constant 0 : i32
    %391 = vector.broadcast %c0_i32_148 : i32 to vector<1x256xi32>
    %392 = arith.cmpi sge, %390, %391 : vector<1x256xi32>
    %c-2_i32_149 = arith.constant -2 : i32
    %393 = vector.broadcast %c-2_i32_149 : i32 to vector<1x256xi32>
    %394 = arith.addi %159, %393 : vector<1x256xi32>
    %c16_i32_150 = arith.constant 16 : i32
    %395 = vector.broadcast %c16_i32_150 : i32 to vector<1x256xi32>
    %396 = arith.cmpi slt, %394, %395 : vector<1x256xi32>
    %397 = arith.andi %392, %396 : vector<1x256xi1>
    %cst_151 = arith.constant 0.000000e+00 : bf16
    %398 = vector.broadcast %cst_151 : bf16 to vector<4x256xbf16>
    %399 = vector.shape_cast %397 : vector<1x256xi1> to vector<1x256xi1>
    %400 = vector.broadcast %399 : vector<1x256xi1> to vector<4x256xi1>
    %401 = arith.select %400, %388, %398 : vector<4x256xi1>, vector<4x256xbf16>
    %402 = vector.extract_strided_slice %142 {offsets = [0, 65], sizes = [4, 256], strides = [1, 1]} : vector<4x324xbf16> to vector<4x256xbf16>
    %c-1_i32_152 = arith.constant -1 : i32
    %403 = vector.broadcast %c-1_i32_152 : i32 to vector<1x256xi32>
    %404 = arith.addi %159, %403 : vector<1x256xi32>
    %c0_i32_153 = arith.constant 0 : i32
    %405 = vector.broadcast %c0_i32_153 : i32 to vector<1x256xi32>
    %406 = arith.cmpi sge, %404, %405 : vector<1x256xi32>
    %c-1_i32_154 = arith.constant -1 : i32
    %407 = vector.broadcast %c-1_i32_154 : i32 to vector<1x256xi32>
    %408 = arith.addi %159, %407 : vector<1x256xi32>
    %c16_i32_155 = arith.constant 16 : i32
    %409 = vector.broadcast %c16_i32_155 : i32 to vector<1x256xi32>
    %410 = arith.cmpi slt, %408, %409 : vector<1x256xi32>
    %411 = arith.andi %406, %410 : vector<1x256xi1>
    %cst_156 = arith.constant 0.000000e+00 : bf16
    %412 = vector.broadcast %cst_156 : bf16 to vector<4x256xbf16>
    %413 = vector.shape_cast %411 : vector<1x256xi1> to vector<1x256xi1>
    %414 = vector.broadcast %413 : vector<1x256xi1> to vector<4x256xi1>
    %415 = arith.select %414, %402, %412 : vector<4x256xi1>, vector<4x256xbf16>
    %416 = vector.extract_strided_slice %142 {offsets = [0, 66], sizes = [4, 256], strides = [1, 1]} : vector<4x324xbf16> to vector<4x256xbf16>
    %417 = vector.extract_strided_slice %142 {offsets = [0, 67], sizes = [4, 256], strides = [1, 1]} : vector<4x324xbf16> to vector<4x256xbf16>
    %c1_i32_157 = arith.constant 1 : i32
    %418 = vector.broadcast %c1_i32_157 : i32 to vector<1x256xi32>
    %419 = arith.addi %159, %418 : vector<1x256xi32>
    %c0_i32_158 = arith.constant 0 : i32
    %420 = vector.broadcast %c0_i32_158 : i32 to vector<1x256xi32>
    %421 = arith.cmpi sge, %419, %420 : vector<1x256xi32>
    %c1_i32_159 = arith.constant 1 : i32
    %422 = vector.broadcast %c1_i32_159 : i32 to vector<1x256xi32>
    %423 = arith.addi %159, %422 : vector<1x256xi32>
    %c16_i32_160 = arith.constant 16 : i32
    %424 = vector.broadcast %c16_i32_160 : i32 to vector<1x256xi32>
    %425 = arith.cmpi slt, %423, %424 : vector<1x256xi32>
    %426 = arith.andi %421, %425 : vector<1x256xi1>
    %cst_161 = arith.constant 0.000000e+00 : bf16
    %427 = vector.broadcast %cst_161 : bf16 to vector<4x256xbf16>
    %428 = vector.shape_cast %426 : vector<1x256xi1> to vector<1x256xi1>
    %429 = vector.broadcast %428 : vector<1x256xi1> to vector<4x256xi1>
    %430 = arith.select %429, %417, %427 : vector<4x256xi1>, vector<4x256xbf16>
    %431 = vector.extract_strided_slice %142 {offsets = [0, 68], sizes = [4, 256], strides = [1, 1]} : vector<4x324xbf16> to vector<4x256xbf16>
    %c2_i32_162 = arith.constant 2 : i32
    %432 = vector.broadcast %c2_i32_162 : i32 to vector<1x256xi32>
    %433 = arith.addi %159, %432 : vector<1x256xi32>
    %c0_i32_163 = arith.constant 0 : i32
    %434 = vector.broadcast %c0_i32_163 : i32 to vector<1x256xi32>
    %435 = arith.cmpi sge, %433, %434 : vector<1x256xi32>
    %c2_i32_164 = arith.constant 2 : i32
    %436 = vector.broadcast %c2_i32_164 : i32 to vector<1x256xi32>
    %437 = arith.addi %159, %436 : vector<1x256xi32>
    %c16_i32_165 = arith.constant 16 : i32
    %438 = vector.broadcast %c16_i32_165 : i32 to vector<1x256xi32>
    %439 = arith.cmpi slt, %437, %438 : vector<1x256xi32>
    %440 = arith.andi %435, %439 : vector<1x256xi1>
    %cst_166 = arith.constant 0.000000e+00 : bf16
    %441 = vector.broadcast %cst_166 : bf16 to vector<4x256xbf16>
    %442 = vector.shape_cast %440 : vector<1x256xi1> to vector<1x256xi1>
    %443 = vector.broadcast %442 : vector<1x256xi1> to vector<4x256xi1>
    %444 = arith.select %443, %431, %441 : vector<4x256xi1>, vector<4x256xbf16>
    %445 = tpu.concatenate %173, %187, %188, %202, %216, %230, %244, %245, %259, %273, %287, %301, %302, %316, %330, %344 in 0 : vector<4x256xbf16>, vector<4x256xbf16>, vector<4x256xbf16>, vector<4x256xbf16>, vector<4x256xbf16>, vector<4x256xbf16>, vector<4x256xbf16>, vector<4x256xbf16>, vector<4x256xbf16>, vector<4x256xbf16>, vector<4x256xbf16>, vector<4x256xbf16>, vector<4x256xbf16>, vector<4x256xbf16>, vector<4x256xbf16>, vector<4x256xbf16> -> vector<64x256xbf16>
    %446 = tpu.concatenate %358, %359, %373, %387, %401, %415, %416, %430, %444 in 0 : vector<4x256xbf16>, vector<4x256xbf16>, vector<4x256xbf16>, vector<4x256xbf16>, vector<4x256xbf16>, vector<4x256xbf16>, vector<4x256xbf16>, vector<4x256xbf16>, vector<4x256xbf16> -> vector<36x256xbf16>
    %447 = tpu.concatenate %445, %446 in 0 : vector<64x256xbf16>, vector<36x256xbf16> -> vector<100x256xbf16>
    %cst_167 = arith.constant dense<0.000000e+00> : vector<8x256xf32>
    %448 = tpu.matmul %6, %447, %cst_167 {dimension_numbers = #tpu.dot_dimension_numbers<[1], [0], [0], [1], [0, 0, 1, 1], [], []>} : vector<8x100xbf16>, vector<100x256xbf16>, vector<8x256xf32> -> vector<8x256xf32>
    %449 = vector.broadcast %7 : vector<8x1xf32> to vector<8x256xf32>
    %450 = arith.mulf %448, %449 : vector<8x256xf32>
    %451 = vector.broadcast %8 : vector<8x1xf32> to vector<8x256xf32>
    %452 = arith.addf %450, %451 : vector<8x256xf32>
    %cst_168 = arith.constant 0.000000e+00 : f32
    %453 = vector.broadcast %cst_168 : f32 to vector<8x256xf32>
    %454 = arith.maximumf %452, %453 : vector<8x256xf32>
    %cst_169 = arith.constant 0xFF80 : bf16
    %455 = vector.broadcast %cst_169 : bf16 to vector<4x17xbf16>
    %456 = tpu.concatenate %455, %14, %455 in 1 : vector<4x17xbf16>, vector<4x256xbf16>, vector<4x17xbf16> -> vector<4x290xbf16>
    %457 = tpu.iota {dimensions = array<i32: 1>} : vector<1x256xi32>
    %c16_i32_170 = arith.constant 16 : i32
    %c0_i32_171 = arith.constant 0 : i32
    %458 = arith.cmpi eq, %c16_i32_170, %c0_i32_171 : i32
    %c1_i32_172 = arith.constant 1 : i32
    %459 = arith.select %458, %c1_i32_172, %c16_i32_170 : i32
    %460 = vector.broadcast %459 : i32 to vector<1x256xi32>
    %461 = arith.remsi %457, %460 : vector<1x256xi32>
    %c0_i32_173 = arith.constant 0 : i32
    %462 = vector.broadcast %c0_i32_173 : i32 to vector<1x256xi32>
    %463 = arith.cmpi ne, %461, %462 : vector<1x256xi32>
    %c0_i32_174 = arith.constant 0 : i32
    %464 = vector.broadcast %c0_i32_174 : i32 to vector<1x256xi32>
    %465 = arith.cmpi slt, %461, %464 : vector<1x256xi32>
    %c0_i32_175 = arith.constant 0 : i32
    %466 = arith.cmpi slt, %459, %c0_i32_175 : i32
    %467 = vector.broadcast %466 : i1 to vector<1x256xi1>
    %468 = vector.broadcast %467 : vector<1x256xi1> to vector<1x256xi1>
    %469 = arith.xori %465, %468 : vector<1x256xi1>
    %470 = arith.andi %469, %463 : vector<1x256xi1>
    %471 = vector.broadcast %459 : i32 to vector<1x256xi32>
    %472 = arith.addi %461, %471 : vector<1x256xi32>
    %473 = arith.select %470, %472, %461 : vector<1x256xi1>, vector<1x256xi32>
    %474 = vector.extract_strided_slice %456 {offsets = [0, 0], sizes = [4, 256], strides = [1, 1]} : vector<4x290xbf16> to vector<4x256xbf16>
    %c-1_i32_176 = arith.constant -1 : i32
    %475 = vector.broadcast %c-1_i32_176 : i32 to vector<1x256xi32>
    %476 = arith.addi %473, %475 : vector<1x256xi32>
    %c0_i32_177 = arith.constant 0 : i32
    %477 = vector.broadcast %c0_i32_177 : i32 to vector<1x256xi32>
    %478 = arith.cmpi sge, %476, %477 : vector<1x256xi32>
    %c-1_i32_178 = arith.constant -1 : i32
    %479 = vector.broadcast %c-1_i32_178 : i32 to vector<1x256xi32>
    %480 = arith.addi %473, %479 : vector<1x256xi32>
    %c16_i32_179 = arith.constant 16 : i32
    %481 = vector.broadcast %c16_i32_179 : i32 to vector<1x256xi32>
    %482 = arith.cmpi slt, %480, %481 : vector<1x256xi32>
    %483 = arith.andi %478, %482 : vector<1x256xi1>
    %cst_180 = arith.constant 0xFF80 : bf16
    %484 = vector.broadcast %cst_180 : bf16 to vector<4x256xbf16>
    %485 = vector.shape_cast %483 : vector<1x256xi1> to vector<1x256xi1>
    %486 = vector.broadcast %485 : vector<1x256xi1> to vector<4x256xi1>
    %487 = arith.select %486, %474, %484 : vector<4x256xi1>, vector<4x256xbf16>
    %488 = vector.extract_strided_slice %456 {offsets = [0, 1], sizes = [4, 256], strides = [1, 1]} : vector<4x290xbf16> to vector<4x256xbf16>
    %489 = vector.extract_strided_slice %456 {offsets = [0, 2], sizes = [4, 256], strides = [1, 1]} : vector<4x290xbf16> to vector<4x256xbf16>
    %c1_i32_181 = arith.constant 1 : i32
    %490 = vector.broadcast %c1_i32_181 : i32 to vector<1x256xi32>
    %491 = arith.addi %473, %490 : vector<1x256xi32>
    %c0_i32_182 = arith.constant 0 : i32
    %492 = vector.broadcast %c0_i32_182 : i32 to vector<1x256xi32>
    %493 = arith.cmpi sge, %491, %492 : vector<1x256xi32>
    %c1_i32_183 = arith.constant 1 : i32
    %494 = vector.broadcast %c1_i32_183 : i32 to vector<1x256xi32>
    %495 = arith.addi %473, %494 : vector<1x256xi32>
    %c16_i32_184 = arith.constant 16 : i32
    %496 = vector.broadcast %c16_i32_184 : i32 to vector<1x256xi32>
    %497 = arith.cmpi slt, %495, %496 : vector<1x256xi32>
    %498 = arith.andi %493, %497 : vector<1x256xi1>
    %cst_185 = arith.constant 0xFF80 : bf16
    %499 = vector.broadcast %cst_185 : bf16 to vector<4x256xbf16>
    %500 = vector.shape_cast %498 : vector<1x256xi1> to vector<1x256xi1>
    %501 = vector.broadcast %500 : vector<1x256xi1> to vector<4x256xi1>
    %502 = arith.select %501, %489, %499 : vector<4x256xi1>, vector<4x256xbf16>
    %503 = vector.extract_strided_slice %456 {offsets = [0, 16], sizes = [4, 256], strides = [1, 1]} : vector<4x290xbf16> to vector<4x256xbf16>
    %c-1_i32_186 = arith.constant -1 : i32
    %504 = vector.broadcast %c-1_i32_186 : i32 to vector<1x256xi32>
    %505 = arith.addi %473, %504 : vector<1x256xi32>
    %c0_i32_187 = arith.constant 0 : i32
    %506 = vector.broadcast %c0_i32_187 : i32 to vector<1x256xi32>
    %507 = arith.cmpi sge, %505, %506 : vector<1x256xi32>
    %c-1_i32_188 = arith.constant -1 : i32
    %508 = vector.broadcast %c-1_i32_188 : i32 to vector<1x256xi32>
    %509 = arith.addi %473, %508 : vector<1x256xi32>
    %c16_i32_189 = arith.constant 16 : i32
    %510 = vector.broadcast %c16_i32_189 : i32 to vector<1x256xi32>
    %511 = arith.cmpi slt, %509, %510 : vector<1x256xi32>
    %512 = arith.andi %507, %511 : vector<1x256xi1>
    %cst_190 = arith.constant 0xFF80 : bf16
    %513 = vector.broadcast %cst_190 : bf16 to vector<4x256xbf16>
    %514 = vector.shape_cast %512 : vector<1x256xi1> to vector<1x256xi1>
    %515 = vector.broadcast %514 : vector<1x256xi1> to vector<4x256xi1>
    %516 = arith.select %515, %503, %513 : vector<4x256xi1>, vector<4x256xbf16>
    %517 = vector.extract_strided_slice %456 {offsets = [0, 17], sizes = [4, 256], strides = [1, 1]} : vector<4x290xbf16> to vector<4x256xbf16>
    %518 = vector.extract_strided_slice %456 {offsets = [0, 18], sizes = [4, 256], strides = [1, 1]} : vector<4x290xbf16> to vector<4x256xbf16>
    %c1_i32_191 = arith.constant 1 : i32
    %519 = vector.broadcast %c1_i32_191 : i32 to vector<1x256xi32>
    %520 = arith.addi %473, %519 : vector<1x256xi32>
    %c0_i32_192 = arith.constant 0 : i32
    %521 = vector.broadcast %c0_i32_192 : i32 to vector<1x256xi32>
    %522 = arith.cmpi sge, %520, %521 : vector<1x256xi32>
    %c1_i32_193 = arith.constant 1 : i32
    %523 = vector.broadcast %c1_i32_193 : i32 to vector<1x256xi32>
    %524 = arith.addi %473, %523 : vector<1x256xi32>
    %c16_i32_194 = arith.constant 16 : i32
    %525 = vector.broadcast %c16_i32_194 : i32 to vector<1x256xi32>
    %526 = arith.cmpi slt, %524, %525 : vector<1x256xi32>
    %527 = arith.andi %522, %526 : vector<1x256xi1>
    %cst_195 = arith.constant 0xFF80 : bf16
    %528 = vector.broadcast %cst_195 : bf16 to vector<4x256xbf16>
    %529 = vector.shape_cast %527 : vector<1x256xi1> to vector<1x256xi1>
    %530 = vector.broadcast %529 : vector<1x256xi1> to vector<4x256xi1>
    %531 = arith.select %530, %518, %528 : vector<4x256xi1>, vector<4x256xbf16>
    %532 = vector.extract_strided_slice %456 {offsets = [0, 32], sizes = [4, 256], strides = [1, 1]} : vector<4x290xbf16> to vector<4x256xbf16>
    %c-1_i32_196 = arith.constant -1 : i32
    %533 = vector.broadcast %c-1_i32_196 : i32 to vector<1x256xi32>
    %534 = arith.addi %473, %533 : vector<1x256xi32>
    %c0_i32_197 = arith.constant 0 : i32
    %535 = vector.broadcast %c0_i32_197 : i32 to vector<1x256xi32>
    %536 = arith.cmpi sge, %534, %535 : vector<1x256xi32>
    %c-1_i32_198 = arith.constant -1 : i32
    %537 = vector.broadcast %c-1_i32_198 : i32 to vector<1x256xi32>
    %538 = arith.addi %473, %537 : vector<1x256xi32>
    %c16_i32_199 = arith.constant 16 : i32
    %539 = vector.broadcast %c16_i32_199 : i32 to vector<1x256xi32>
    %540 = arith.cmpi slt, %538, %539 : vector<1x256xi32>
    %541 = arith.andi %536, %540 : vector<1x256xi1>
    %cst_200 = arith.constant 0xFF80 : bf16
    %542 = vector.broadcast %cst_200 : bf16 to vector<4x256xbf16>
    %543 = vector.shape_cast %541 : vector<1x256xi1> to vector<1x256xi1>
    %544 = vector.broadcast %543 : vector<1x256xi1> to vector<4x256xi1>
    %545 = arith.select %544, %532, %542 : vector<4x256xi1>, vector<4x256xbf16>
    %546 = vector.extract_strided_slice %456 {offsets = [0, 33], sizes = [4, 256], strides = [1, 1]} : vector<4x290xbf16> to vector<4x256xbf16>
    %547 = vector.extract_strided_slice %456 {offsets = [0, 34], sizes = [4, 256], strides = [1, 1]} : vector<4x290xbf16> to vector<4x256xbf16>
    %c1_i32_201 = arith.constant 1 : i32
    %548 = vector.broadcast %c1_i32_201 : i32 to vector<1x256xi32>
    %549 = arith.addi %473, %548 : vector<1x256xi32>
    %c0_i32_202 = arith.constant 0 : i32
    %550 = vector.broadcast %c0_i32_202 : i32 to vector<1x256xi32>
    %551 = arith.cmpi sge, %549, %550 : vector<1x256xi32>
    %c1_i32_203 = arith.constant 1 : i32
    %552 = vector.broadcast %c1_i32_203 : i32 to vector<1x256xi32>
    %553 = arith.addi %473, %552 : vector<1x256xi32>
    %c16_i32_204 = arith.constant 16 : i32
    %554 = vector.broadcast %c16_i32_204 : i32 to vector<1x256xi32>
    %555 = arith.cmpi slt, %553, %554 : vector<1x256xi32>
    %556 = arith.andi %551, %555 : vector<1x256xi1>
    %cst_205 = arith.constant 0xFF80 : bf16
    %557 = vector.broadcast %cst_205 : bf16 to vector<4x256xbf16>
    %558 = vector.shape_cast %556 : vector<1x256xi1> to vector<1x256xi1>
    %559 = vector.broadcast %558 : vector<1x256xi1> to vector<4x256xi1>
    %560 = arith.select %559, %547, %557 : vector<4x256xi1>, vector<4x256xbf16>
    %561 = arith.maximumf %487, %488 : vector<4x256xbf16>
    %562 = arith.maximumf %561, %502 : vector<4x256xbf16>
    %563 = arith.maximumf %562, %516 : vector<4x256xbf16>
    %564 = arith.maximumf %563, %517 : vector<4x256xbf16>
    %565 = arith.maximumf %564, %531 : vector<4x256xbf16>
    %566 = arith.maximumf %565, %545 : vector<4x256xbf16>
    %567 = arith.maximumf %566, %546 : vector<4x256xbf16>
    %568 = arith.maximumf %567, %560 : vector<4x256xbf16>
    %cst_206 = arith.constant 0.000000e+00 : bf16
    %569 = vector.broadcast %cst_206 : bf16 to vector<4x17xbf16>
    %570 = tpu.concatenate %569, %568, %569 in 1 : vector<4x17xbf16>, vector<4x256xbf16>, vector<4x17xbf16> -> vector<4x290xbf16>
    %571 = tpu.iota {dimensions = array<i32: 1>} : vector<1x256xi32>
    %c16_i32_207 = arith.constant 16 : i32
    %c0_i32_208 = arith.constant 0 : i32
    %572 = arith.cmpi eq, %c16_i32_207, %c0_i32_208 : i32
    %c1_i32_209 = arith.constant 1 : i32
    %573 = arith.select %572, %c1_i32_209, %c16_i32_207 : i32
    %574 = vector.broadcast %573 : i32 to vector<1x256xi32>
    %575 = arith.remsi %571, %574 : vector<1x256xi32>
    %c0_i32_210 = arith.constant 0 : i32
    %576 = vector.broadcast %c0_i32_210 : i32 to vector<1x256xi32>
    %577 = arith.cmpi ne, %575, %576 : vector<1x256xi32>
    %c0_i32_211 = arith.constant 0 : i32
    %578 = vector.broadcast %c0_i32_211 : i32 to vector<1x256xi32>
    %579 = arith.cmpi slt, %575, %578 : vector<1x256xi32>
    %c0_i32_212 = arith.constant 0 : i32
    %580 = arith.cmpi slt, %573, %c0_i32_212 : i32
    %581 = vector.broadcast %580 : i1 to vector<1x256xi1>
    %582 = vector.broadcast %581 : vector<1x256xi1> to vector<1x256xi1>
    %583 = arith.xori %579, %582 : vector<1x256xi1>
    %584 = arith.andi %583, %577 : vector<1x256xi1>
    %585 = vector.broadcast %573 : i32 to vector<1x256xi32>
    %586 = arith.addi %575, %585 : vector<1x256xi32>
    %587 = arith.select %584, %586, %575 : vector<1x256xi1>, vector<1x256xi32>
    %588 = vector.extract_strided_slice %570 {offsets = [0, 0], sizes = [4, 256], strides = [1, 1]} : vector<4x290xbf16> to vector<4x256xbf16>
    %c-1_i32_213 = arith.constant -1 : i32
    %589 = vector.broadcast %c-1_i32_213 : i32 to vector<1x256xi32>
    %590 = arith.addi %587, %589 : vector<1x256xi32>
    %c0_i32_214 = arith.constant 0 : i32
    %591 = vector.broadcast %c0_i32_214 : i32 to vector<1x256xi32>
    %592 = arith.cmpi sge, %590, %591 : vector<1x256xi32>
    %c-1_i32_215 = arith.constant -1 : i32
    %593 = vector.broadcast %c-1_i32_215 : i32 to vector<1x256xi32>
    %594 = arith.addi %587, %593 : vector<1x256xi32>
    %c16_i32_216 = arith.constant 16 : i32
    %595 = vector.broadcast %c16_i32_216 : i32 to vector<1x256xi32>
    %596 = arith.cmpi slt, %594, %595 : vector<1x256xi32>
    %597 = arith.andi %592, %596 : vector<1x256xi1>
    %cst_217 = arith.constant 0.000000e+00 : bf16
    %598 = vector.broadcast %cst_217 : bf16 to vector<4x256xbf16>
    %599 = vector.shape_cast %597 : vector<1x256xi1> to vector<1x256xi1>
    %600 = vector.broadcast %599 : vector<1x256xi1> to vector<4x256xi1>
    %601 = arith.select %600, %588, %598 : vector<4x256xi1>, vector<4x256xbf16>
    %602 = vector.extract_strided_slice %570 {offsets = [0, 1], sizes = [4, 256], strides = [1, 1]} : vector<4x290xbf16> to vector<4x256xbf16>
    %603 = vector.extract_strided_slice %570 {offsets = [0, 2], sizes = [4, 256], strides = [1, 1]} : vector<4x290xbf16> to vector<4x256xbf16>
    %c1_i32_218 = arith.constant 1 : i32
    %604 = vector.broadcast %c1_i32_218 : i32 to vector<1x256xi32>
    %605 = arith.addi %587, %604 : vector<1x256xi32>
    %c0_i32_219 = arith.constant 0 : i32
    %606 = vector.broadcast %c0_i32_219 : i32 to vector<1x256xi32>
    %607 = arith.cmpi sge, %605, %606 : vector<1x256xi32>
    %c1_i32_220 = arith.constant 1 : i32
    %608 = vector.broadcast %c1_i32_220 : i32 to vector<1x256xi32>
    %609 = arith.addi %587, %608 : vector<1x256xi32>
    %c16_i32_221 = arith.constant 16 : i32
    %610 = vector.broadcast %c16_i32_221 : i32 to vector<1x256xi32>
    %611 = arith.cmpi slt, %609, %610 : vector<1x256xi32>
    %612 = arith.andi %607, %611 : vector<1x256xi1>
    %cst_222 = arith.constant 0.000000e+00 : bf16
    %613 = vector.broadcast %cst_222 : bf16 to vector<4x256xbf16>
    %614 = vector.shape_cast %612 : vector<1x256xi1> to vector<1x256xi1>
    %615 = vector.broadcast %614 : vector<1x256xi1> to vector<4x256xi1>
    %616 = arith.select %615, %603, %613 : vector<4x256xi1>, vector<4x256xbf16>
    %617 = vector.extract_strided_slice %570 {offsets = [0, 16], sizes = [4, 256], strides = [1, 1]} : vector<4x290xbf16> to vector<4x256xbf16>
    %c-1_i32_223 = arith.constant -1 : i32
    %618 = vector.broadcast %c-1_i32_223 : i32 to vector<1x256xi32>
    %619 = arith.addi %587, %618 : vector<1x256xi32>
    %c0_i32_224 = arith.constant 0 : i32
    %620 = vector.broadcast %c0_i32_224 : i32 to vector<1x256xi32>
    %621 = arith.cmpi sge, %619, %620 : vector<1x256xi32>
    %c-1_i32_225 = arith.constant -1 : i32
    %622 = vector.broadcast %c-1_i32_225 : i32 to vector<1x256xi32>
    %623 = arith.addi %587, %622 : vector<1x256xi32>
    %c16_i32_226 = arith.constant 16 : i32
    %624 = vector.broadcast %c16_i32_226 : i32 to vector<1x256xi32>
    %625 = arith.cmpi slt, %623, %624 : vector<1x256xi32>
    %626 = arith.andi %621, %625 : vector<1x256xi1>
    %cst_227 = arith.constant 0.000000e+00 : bf16
    %627 = vector.broadcast %cst_227 : bf16 to vector<4x256xbf16>
    %628 = vector.shape_cast %626 : vector<1x256xi1> to vector<1x256xi1>
    %629 = vector.broadcast %628 : vector<1x256xi1> to vector<4x256xi1>
    %630 = arith.select %629, %617, %627 : vector<4x256xi1>, vector<4x256xbf16>
    %631 = vector.extract_strided_slice %570 {offsets = [0, 17], sizes = [4, 256], strides = [1, 1]} : vector<4x290xbf16> to vector<4x256xbf16>
    %632 = vector.extract_strided_slice %570 {offsets = [0, 18], sizes = [4, 256], strides = [1, 1]} : vector<4x290xbf16> to vector<4x256xbf16>
    %c1_i32_228 = arith.constant 1 : i32
    %633 = vector.broadcast %c1_i32_228 : i32 to vector<1x256xi32>
    %634 = arith.addi %587, %633 : vector<1x256xi32>
    %c0_i32_229 = arith.constant 0 : i32
    %635 = vector.broadcast %c0_i32_229 : i32 to vector<1x256xi32>
    %636 = arith.cmpi sge, %634, %635 : vector<1x256xi32>
    %c1_i32_230 = arith.constant 1 : i32
    %637 = vector.broadcast %c1_i32_230 : i32 to vector<1x256xi32>
    %638 = arith.addi %587, %637 : vector<1x256xi32>
    %c16_i32_231 = arith.constant 16 : i32
    %639 = vector.broadcast %c16_i32_231 : i32 to vector<1x256xi32>
    %640 = arith.cmpi slt, %638, %639 : vector<1x256xi32>
    %641 = arith.andi %636, %640 : vector<1x256xi1>
    %cst_232 = arith.constant 0.000000e+00 : bf16
    %642 = vector.broadcast %cst_232 : bf16 to vector<4x256xbf16>
    %643 = vector.shape_cast %641 : vector<1x256xi1> to vector<1x256xi1>
    %644 = vector.broadcast %643 : vector<1x256xi1> to vector<4x256xi1>
    %645 = arith.select %644, %632, %642 : vector<4x256xi1>, vector<4x256xbf16>
    %646 = vector.extract_strided_slice %570 {offsets = [0, 32], sizes = [4, 256], strides = [1, 1]} : vector<4x290xbf16> to vector<4x256xbf16>
    %c-1_i32_233 = arith.constant -1 : i32
    %647 = vector.broadcast %c-1_i32_233 : i32 to vector<1x256xi32>
    %648 = arith.addi %587, %647 : vector<1x256xi32>
    %c0_i32_234 = arith.constant 0 : i32
    %649 = vector.broadcast %c0_i32_234 : i32 to vector<1x256xi32>
    %650 = arith.cmpi sge, %648, %649 : vector<1x256xi32>
    %c-1_i32_235 = arith.constant -1 : i32
    %651 = vector.broadcast %c-1_i32_235 : i32 to vector<1x256xi32>
    %652 = arith.addi %587, %651 : vector<1x256xi32>
    %c16_i32_236 = arith.constant 16 : i32
    %653 = vector.broadcast %c16_i32_236 : i32 to vector<1x256xi32>
    %654 = arith.cmpi slt, %652, %653 : vector<1x256xi32>
    %655 = arith.andi %650, %654 : vector<1x256xi1>
    %cst_237 = arith.constant 0.000000e+00 : bf16
    %656 = vector.broadcast %cst_237 : bf16 to vector<4x256xbf16>
    %657 = vector.shape_cast %655 : vector<1x256xi1> to vector<1x256xi1>
    %658 = vector.broadcast %657 : vector<1x256xi1> to vector<4x256xi1>
    %659 = arith.select %658, %646, %656 : vector<4x256xi1>, vector<4x256xbf16>
    %660 = vector.extract_strided_slice %570 {offsets = [0, 33], sizes = [4, 256], strides = [1, 1]} : vector<4x290xbf16> to vector<4x256xbf16>
    %661 = vector.extract_strided_slice %570 {offsets = [0, 34], sizes = [4, 256], strides = [1, 1]} : vector<4x290xbf16> to vector<4x256xbf16>
    %c1_i32_238 = arith.constant 1 : i32
    %662 = vector.broadcast %c1_i32_238 : i32 to vector<1x256xi32>
    %663 = arith.addi %587, %662 : vector<1x256xi32>
    %c0_i32_239 = arith.constant 0 : i32
    %664 = vector.broadcast %c0_i32_239 : i32 to vector<1x256xi32>
    %665 = arith.cmpi sge, %663, %664 : vector<1x256xi32>
    %c1_i32_240 = arith.constant 1 : i32
    %666 = vector.broadcast %c1_i32_240 : i32 to vector<1x256xi32>
    %667 = arith.addi %587, %666 : vector<1x256xi32>
    %c16_i32_241 = arith.constant 16 : i32
    %668 = vector.broadcast %c16_i32_241 : i32 to vector<1x256xi32>
    %669 = arith.cmpi slt, %667, %668 : vector<1x256xi32>
    %670 = arith.andi %665, %669 : vector<1x256xi1>
    %cst_242 = arith.constant 0.000000e+00 : bf16
    %671 = vector.broadcast %cst_242 : bf16 to vector<4x256xbf16>
    %672 = vector.shape_cast %670 : vector<1x256xi1> to vector<1x256xi1>
    %673 = vector.broadcast %672 : vector<1x256xi1> to vector<4x256xi1>
    %674 = arith.select %673, %661, %671 : vector<4x256xi1>, vector<4x256xbf16>
    %675 = tpu.concatenate %601, %602, %616, %630, %631, %645, %659, %660, %674 in 0 : vector<4x256xbf16>, vector<4x256xbf16>, vector<4x256xbf16>, vector<4x256xbf16>, vector<4x256xbf16>, vector<4x256xbf16>, vector<4x256xbf16>, vector<4x256xbf16>, vector<4x256xbf16> -> vector<36x256xbf16>
    %cst_243 = arith.constant dense<0.000000e+00> : vector<8x256xf32>
    %676 = tpu.matmul %9, %675, %cst_243 {dimension_numbers = #tpu.dot_dimension_numbers<[1], [0], [0], [1], [0, 0, 1, 1], [], []>} : vector<8x36xbf16>, vector<36x256xbf16>, vector<8x256xf32> -> vector<8x256xf32>
    %677 = vector.broadcast %10 : vector<8x1xf32> to vector<8x256xf32>
    %678 = arith.mulf %676, %677 : vector<8x256xf32>
    %679 = vector.broadcast %11 : vector<8x1xf32> to vector<8x256xf32>
    %680 = arith.addf %678, %679 : vector<8x256xf32>
    %cst_244 = arith.constant 0.000000e+00 : f32
    %681 = vector.broadcast %cst_244 : f32 to vector<8x256xf32>
    %682 = arith.maximumf %680, %681 : vector<8x256xf32>
    %683 = tpu.concatenate %22, %138, %454, %682 in 0 : vector<8x256xf32>, vector<8x256xf32>, vector<8x256xf32>, vector<8x256xf32> -> vector<32x256xf32>
    %c0_245 = arith.constant 0 : index
    %c0_246 = arith.constant 0 : index
    %c0_247 = arith.constant 0 : index
    %684 = vector.load %arg14[%c0_245, %c0_246, %c0_247] : memref<1x32x256xf32, #tpu.memory_space<vmem>>, vector<1x32x256xf32>
    %685 = vector.shape_cast %684 : vector<1x32x256xf32> to vector<32x256xf32>
    %686 = vector.shape_cast %683 : vector<32x256xf32> to vector<1x32x256xf32>
    tpu.vector_store %arg14[%c0_245, %c0_246, %c0_247], %686 {strides = array<i32>} : memref<1x32x256xf32, #tpu.memory_space<vmem>>, vector<1x32x256xf32>,
    return
  }
  func.func @transform_0(%arg0: i32) -> (i32, i32, i32) {
    %c0_i32 = arith.constant 0 : i32
    %c0_i32_0 = arith.constant 0 : i32
    %c0_i32_1 = arith.constant 0 : i32
    return %arg0, %c0_i32, %c0_i32_0 : i32, i32, i32
  }
  func.func @transform_1(%arg0: i32) -> (i32, i32) {
    %c0_i32 = arith.constant 0 : i32
    %c0_i32_0 = arith.constant 0 : i32
    %c0_i32_1 = arith.constant 0 : i32
    return %c0_i32, %c0_i32_0 : i32, i32
  }
  func.func @transform_2(%arg0: i32) -> (i32, i32) {
    %c0_i32 = arith.constant 0 : i32
    %c0_i32_0 = arith.constant 0 : i32
    %c0_i32_1 = arith.constant 0 : i32
    return %c0_i32, %c0_i32_0 : i32, i32
  }
  func.func @transform_3(%arg0: i32) -> (i32, i32) {
    %c0_i32 = arith.constant 0 : i32
    %c0_i32_0 = arith.constant 0 : i32
    %c0_i32_1 = arith.constant 0 : i32
    return %c0_i32, %c0_i32_0 : i32, i32
  }
  func.func @transform_4(%arg0: i32) -> (i32, i32) {
    %c0_i32 = arith.constant 0 : i32
    %c0_i32_0 = arith.constant 0 : i32
    %c0_i32_1 = arith.constant 0 : i32
    return %c0_i32, %c0_i32_0 : i32, i32
  }
  func.func @transform_5(%arg0: i32) -> (i32, i32) {
    %c0_i32 = arith.constant 0 : i32
    %c0_i32_0 = arith.constant 0 : i32
    %c0_i32_1 = arith.constant 0 : i32
    return %c0_i32, %c0_i32_0 : i32, i32
  }
  func.func @transform_6(%arg0: i32) -> (i32, i32) {
    %c0_i32 = arith.constant 0 : i32
    %c0_i32_0 = arith.constant 0 : i32
    %c0_i32_1 = arith.constant 0 : i32
    return %c0_i32, %c0_i32_0 : i32, i32
  }
  func.func @transform_7(%arg0: i32) -> (i32, i32) {
    %c0_i32 = arith.constant 0 : i32
    %c0_i32_0 = arith.constant 0 : i32
    %c0_i32_1 = arith.constant 0 : i32
    return %c0_i32, %c0_i32_0 : i32, i32
  }
  func.func @transform_8(%arg0: i32) -> (i32, i32) {
    %c0_i32 = arith.constant 0 : i32
    %c0_i32_0 = arith.constant 0 : i32
    %c0_i32_1 = arith.constant 0 : i32
    return %c0_i32, %c0_i32_0 : i32, i32
  }
  func.func @transform_9(%arg0: i32) -> (i32, i32) {
    %c0_i32 = arith.constant 0 : i32
    %c0_i32_0 = arith.constant 0 : i32
    %c0_i32_1 = arith.constant 0 : i32
    return %c0_i32, %c0_i32_0 : i32, i32
  }
  func.func @transform_10(%arg0: i32) -> (i32, i32) {
    %c0_i32 = arith.constant 0 : i32
    %c0_i32_0 = arith.constant 0 : i32
    %c0_i32_1 = arith.constant 0 : i32
    return %c0_i32, %c0_i32_0 : i32, i32
  }
  func.func @transform_11(%arg0: i32) -> (i32, i32) {
    %c0_i32 = arith.constant 0 : i32
    %c0_i32_0 = arith.constant 0 : i32
    %c0_i32_1 = arith.constant 0 : i32
    return %c0_i32, %c0_i32_0 : i32, i32
  }
  func.func @transform_12(%arg0: i32) -> (i32, i32) {
    %c0_i32 = arith.constant 0 : i32
    %c0_i32_0 = arith.constant 0 : i32
    %c0_i32_1 = arith.constant 0 : i32
    return %c0_i32, %c0_i32_0 : i32, i32
  }
  func.func @transform_13(%arg0: i32) -> (i32, i32, i32) {
    %c0_i32 = arith.constant 0 : i32
    %c0_i32_0 = arith.constant 0 : i32
    %c0_i32_1 = arith.constant 0 : i32
    return %arg0, %c0_i32, %c0_i32_0 : i32, i32, i32
  }
}

</mosaic_0001>

<llo_original>
// kernel: base_inception_forward.1
$region0: #{base_inception_forward.1}
  #allocation0 [shape = 'u32[]', space=smem, size = 0x4, offset = 0x4, fixed_abs, tag = 'smem constant byte address 0x4 - core index']
  #allocation1 [shape = 'u32[144,128]{1,0:T(1,128)}', space=vmem, size = 0x12000, scoped, tag = 'internal scratch']
  %s0 = inlined_call_operand.vmem [shape: f32[2,4,256], index: 0, kind: input, shape index: {}]
  %s1 = inlined_call_operand.vmem [shape: bf16[16,4], index: 1, kind: input, shape index: {}]
  %s2 = inlined_call_operand.vmem [shape: f32[16,1], index: 2, kind: input, shape index: {}]
  %s3 = inlined_call_operand.vmem [shape: f32[16,1], index: 3, kind: input, shape index: {}]
  %s4 = inlined_call_operand.vmem [shape: bf16[8,36], index: 4, kind: input, shape index: {}]
  %s5 = inlined_call_operand.vmem [shape: f32[8,1], index: 5, kind: input, shape index: {}]
  %s6 = inlined_call_operand.vmem [shape: f32[8,1], index: 6, kind: input, shape index: {}]
  %s7 = inlined_call_operand.vmem [shape: bf16[8,100], index: 7, kind: input, shape index: {}]
  %s8 = inlined_call_operand.vmem [shape: f32[8,1], index: 8, kind: input, shape index: {}]
  %s9 = inlined_call_operand.vmem [shape: f32[8,1], index: 9, kind: input, shape index: {}]
  %s10 = inlined_call_operand.vmem [shape: bf16[8,36], index: 10, kind: input, shape index: {}]
  %s11 = inlined_call_operand.vmem [shape: f32[8,1], index: 11, kind: input, shape index: {}]
  %s12 = inlined_call_operand.vmem [shape: f32[8,1], index: 12, kind: input, shape index: {}]
  %s13 = inlined_call_operand.vmem [shape: f32[2,32,256], index: 13, kind: output, shape index: {}]
  %s14 = sld [smem:[#allocation0]]
  $region85: #{base_inception_forward.1} parent=0
    _
  %s16 = ssub.s32 1, %s14
  %s17 = scalar_select 0, %s16, %s14
  loop: start=0, step=1, limit=4
  $region2: #{base_inception_forward.1} parent=0 // loop_pre_header
    _
  $region3: #{base_inception_forward.1} parent=0 // loop_header
    %s19 = sphi 0, %s23
    %p20 = scmp.ge.s32.totalorder %s19, 4
    %s29 = sphi 0, %s31
    %s32 = sphi 0, %s29
    %s33 = sphi 0, %s32
    %s49 = sphi 0, %s33
    %s53 = sphi 0, %s53
    %s55 = sphi 0, %s53
    %s56 = sphi 0, %s55
    %s70 = sphi 0, %s56
    %s74 = sphi 0, %s74
    %s76 = sphi 0, %s74
    %s77 = sphi 0, %s76
    %s91 = sphi 0, %s77
    %s95 = sphi 0, %s95
    %s97 = sphi 0, %s95
    %s98 = sphi 0, %s97
    %s112 = sphi 0, %s98
    %s116 = sphi 0, %s116
    %s118 = sphi 0, %s116
    %s119 = sphi 0, %s118
    %s133 = sphi 0, %s119
    %s137 = sphi 0, %s137
    %s139 = sphi 0, %s137
    %s140 = sphi 0, %s139
    %s154 = sphi 0, %s140
    %s158 = sphi 0, %s158
    %s160 = sphi 0, %s158
    %s161 = sphi 0, %s160
    %s175 = sphi 0, %s161
    %s179 = sphi 0, %s179
    %s181 = sphi 0, %s179
    %s182 = sphi 0, %s181
    %s196 = sphi 0, %s182
    %s200 = sphi 0, %s200
    %s202 = sphi 0, %s200
    %s203 = sphi 0, %s202
    %s217 = sphi 0, %s203
    %s221 = sphi 0, %s221
    %s223 = sphi 0, %s221
    %s224 = sphi 0, %s223
    %s238 = sphi 0, %s224
    %s242 = sphi 0, %s242
    %s244 = sphi 0, %s242
    %s245 = sphi 0, %s244
    %s259 = sphi 0, %s245
    %s263 = sphi 0, %s263
    %s265 = sphi 0, %s263
    %s266 = sphi 0, %s265
    %s280 = sphi 0, %s266
    %s284 = sphi 0, %s284
    %s286 = sphi 0, %s284
    %s287 = sphi 0, %s286
    %s301 = sphi 0, %s287
    %s307 = sphi 0, %s309
    %s310 = sphi 0, %s307
    %s311 = sphi 0, %s310
    %s327 = sphi 0, %s311
  $region4: #{base_inception_forward.1} parent=0 // loop_header_branch
    %22 = sbr.rel (%p20) target = $region8
  $region5: #{base_inception_forward.1} parent=0 // loop_body
    %s24 = ssub.s32 %s19, 1
    %s25 = ssub.s32 %s19, 2
    %s26 = sadd.s32 %s19, 1
    %s27 = ssub.s32 %s19, %s26
    %p28 = scmp.eq.s32.totalorder %s27, 0
    %s30 = sadd.s32 %s29, 1
    %s31 = scalar_select %p28, %s29, %s30
    %p34 = pneg %p28
    %p35 = scmp.eq.s32.totalorder %s19, 1
    %p36 = por %p34, %p35
    %p37 = scmp.ne.s32.totalorder %s29, %s32
    %p38 = scmp.eq.s32.totalorder %s19, 0
    %p39 = por %p37, %p38
    %p40 = scmp.ne.s32.totalorder %s29, %s32
    %p41 = scmp.eq.s32.totalorder %s24, 1
    %p42 = por %p40, %p41
    %p43 = scmp.ne.s32.totalorder %s32, %s33
    %p44 = scmp.eq.s32.totalorder %s24, 0
    %p45 = por %p43, %p44
    %p46 = scmp.ne.s32.totalorder %s32, %s33
    %p47 = scmp.eq.s32.totalorder %s25, 1
    %p48 = por %p46, %p47
    %p50 = scmp.ne.s32.totalorder %s33, %s49
    %p51 = scmp.eq.s32.totalorder %s25, 0
    %p52 = por %p50, %p51
    %s54 = sadd.s32 %s53, 1
    %p57 = scmp.eq.s32.totalorder %s19, 1
    %p58 = scmp.ne.s32.totalorder %s53, %s55
    %p59 = scmp.eq.s32.totalorder %s19, 0
    %p60 = por %p58, %p59
    %p61 = scmp.ne.s32.totalorder %s53, %s55
    %p62 = scmp.eq.s32.totalorder %s24, 1
    %p63 = por %p61, %p62
    %p64 = scmp.ne.s32.totalorder %s55, %s56
    %p65 = scmp.eq.s32.totalorder %s24, 0
    %p66 = por %p64, %p65
    %p67 = scmp.ne.s32.totalorder %s55, %s56
    %p68 = scmp.eq.s32.totalorder %s25, 1
    %p69 = por %p67, %p68
    %p71 = scmp.ne.s32.totalorder %s56, %s70
    %p72 = scmp.eq.s32.totalorder %s25, 0
    %p73 = por %p71, %p72
    %s75 = sadd.s32 %s74, 1
    %p78 = scmp.eq.s32.totalorder %s19, 1
    %p79 = scmp.ne.s32.totalorder %s74, %s76
    %p80 = scmp.eq.s32.totalorder %s19, 0
    %p81 = por %p79, %p80
    %p82 = scmp.ne.s32.totalorder %s74, %s76
    %p83 = scmp.eq.s32.totalorder %s24, 1
    %p84 = por %p82, %p83
    %p85 = scmp.ne.s32.totalorder %s76, %s77
    %p86 = scmp.eq.s32.totalorder %s24, 0
    %p87 = por %p85, %p86
    %p88 = scmp.ne.s32.totalorder %s76, %s77
    %p89 = scmp.eq.s32.totalorder %s25, 1
    %p90 = por %p88, %p89
    %p92 = scmp.ne.s32.totalorder %s77, %s91
    %p93 = scmp.eq.s32.totalorder %s25, 0
    %p94 = por %p92, %p93
    %s96 = sadd.s32 %s95, 1
    %p99 = scmp.eq.s32.totalorder %s19, 1
    %p100 = scmp.ne.s32.totalorder %s95, %s97
    %p101 = scmp.eq.s32.totalorder %s19, 0
    %p102 = por %p100, %p101
    %p103 = scmp.ne.s32.totalorder %s95, %s97
    %p104 = scmp.eq.s32.totalorder %s24, 1
    %p105 = por %p103, %p104
    %p106 = scmp.ne.s32.totalorder %s97, %s98
    %p107 = scmp.eq.s32.totalorder %s24, 0
    %p108 = por %p106, %p107
    %p109 = scmp.ne.s32.totalorder %s97, %s98
    %p110 = scmp.eq.s32.totalorder %s25, 1
    %p111 = por %p109, %p110
    %p113 = scmp.ne.s32.totalorder %s98, %s112
    %p114 = scmp.eq.s32.totalorder %s25, 0
    %p115 = por %p113, %p114
    %s117 = sadd.s32 %s116, 1
    %p120 = scmp.eq.s32.totalorder %s19, 1
    %p121 = scmp.ne.s32.totalorder %s116, %s118
    %p122 = scmp.eq.s32.totalorder %s19, 0
    %p123 = por %p121, %p122
    %p124 = scmp.ne.s32.totalorder %s116, %s118
    %p125 = scmp.eq.s32.totalorder %s24, 1
    %p126 = por %p124, %p125
    %p127 = scmp.ne.s32.totalorder %s118, %s119
    %p128 = scmp.eq.s32.totalorder %s24, 0
    %p129 = por %p127, %p128
    %p130 = scmp.ne.s32.totalorder %s118, %s119
    %p131 = scmp.eq.s32.totalorder %s25, 1
    %p132 = por %p130, %p131
    %p134 = scmp.ne.s32.totalorder %s119, %s133
    %p135 = scmp.eq.s32.totalorder %s25, 0
    %p136 = por %p134, %p135
    %s138 = sadd.s32 %s137, 1
    %p141 = scmp.eq.s32.totalorder %s19, 1
    %p142 = scmp.ne.s32.totalorder %s137, %s139
    %p143 = scmp.eq.s32.totalorder %s19, 0
    %p144 = por %p142, %p143
    %p145 = scmp.ne.s32.totalorder %s137, %s139
    %p146 = scmp.eq.s32.totalorder %s24, 1
    %p147 = por %p145, %p146
    %p148 = scmp.ne.s32.totalorder %s139, %s140
    %p149 = scmp.eq.s32.totalorder %s24, 0
    %p150 = por %p148, %p149
    %p151 = scmp.ne.s32.totalorder %s139, %s140
    %p152 = scmp.eq.s32.totalorder %s25, 1
    %p153 = por %p151, %p152
    %p155 = scmp.ne.s32.totalorder %s140, %s154
    %p156 = scmp.eq.s32.totalorder %s25, 0
    %p157 = por %p155, %p156
    %s159 = sadd.s32 %s158, 1
    %p162 = scmp.eq.s32.totalorder %s19, 1
    %p163 = scmp.ne.s32.totalorder %s158, %s160
    %p164 = scmp.eq.s32.totalorder %s19, 0
    %p165 = por %p163, %p164
    %p166 = scmp.ne.s32.totalorder %s158, %s160
    %p167 = scmp.eq.s32.totalorder %s24, 1
    %p168 = por %p166, %p167
    %p169 = scmp.ne.s32.totalorder %s160, %s161
    %p170 = scmp.eq.s32.totalorder %s24, 0
    %p171 = por %p169, %p170
    %p172 = scmp.ne.s32.totalorder %s160, %s161
    %p173 = scmp.eq.s32.totalorder %s25, 1
    %p174 = por %p172, %p173
    %p176 = scmp.ne.s32.totalorder %s161, %s175
    %p177 = scmp.eq.s32.totalorder %s25, 0
    %p178 = por %p176, %p177
    %s180 = sadd.s32 %s179, 1
    %p183 = scmp.eq.s32.totalorder %s19, 1
    %p184 = scmp.ne.s32.totalorder %s179, %s181
    %p185 = scmp.eq.s32.totalorder %s19, 0
    %p186 = por %p184, %p185
    %p187 = scmp.ne.s32.totalorder %s179, %s181
    %p188 = scmp.eq.s32.totalorder %s24, 1
    %p189 = por %p187, %p188
    %p190 = scmp.ne.s32.totalorder %s181, %s182
    %p191 = scmp.eq.s32.totalorder %s24, 0
    %p192 = por %p190, %p191
    %p193 = scmp.ne.s32.totalorder %s181, %s182
    %p194 = scmp.eq.s32.totalorder %s25, 1
    %p195 = por %p193, %p194
    %p197 = scmp.ne.s32.totalorder %s182, %s196
    %p198 = scmp.eq.s32.totalorder %s25, 0
    %p199 = por %p197, %p198
    %s201 = sadd.s32 %s200, 1
    %p204 = scmp.eq.s32.totalorder %s19, 1
    %p205 = scmp.ne.s32.totalorder %s200, %s202
    %p206 = scmp.eq.s32.totalorder %s19, 0
    %p207 = por %p205, %p206
    %p208 = scmp.ne.s32.totalorder %s200, %s202
    %p209 = scmp.eq.s32.totalorder %s24, 1
    %p210 = por %p208, %p209
    %p211 = scmp.ne.s32.totalorder %s202, %s203
    %p212 = scmp.eq.s32.totalorder %s24, 0
    %p213 = por %p211, %p212
    %p214 = scmp.ne.s32.totalorder %s202, %s203
    %p215 = scmp.eq.s32.totalorder %s25, 1
    %p216 = por %p214, %p215
    %p218 = scmp.ne.s32.totalorder %s203, %s217
    %p219 = scmp.eq.s32.totalorder %s25, 0
    %p220 = por %p218, %p219
    %s222 = sadd.s32 %s221, 1
    %p225 = scmp.eq.s32.totalorder %s19, 1
    %p226 = scmp.ne.s32.totalorder %s221, %s223
    %p227 = scmp.eq.s32.totalorder %s19, 0
    %p228 = por %p226, %p227
    %p229 = scmp.ne.s32.totalorder %s221, %s223
    %p230 = scmp.eq.s32.totalorder %s24, 1
    %p231 = por %p229, %p230
    %p232 = scmp.ne.s32.totalorder %s223, %s224
    %p233 = scmp.eq.s32.totalorder %s24, 0
    %p234 = por %p232, %p233
    %p235 = scmp.ne.s32.totalorder %s223, %s224
    %p236 = scmp.eq.s32.totalorder %s25, 1
    %p237 = por %p235, %p236
    %p239 = scmp.ne.s32.totalorder %s224, %s238
    %p240 = scmp.eq.s32.totalorder %s25, 0
    %p241 = por %p239, %p240
    %s243 = sadd.s32 %s242, 1
    %p246 = scmp.eq.s32.totalorder %s19, 1
    %p247 = scmp.ne.s32.totalorder %s242, %s244
    %p248 = scmp.eq.s32.totalorder %s19, 0
    %p249 = por %p247, %p248
    %p250 = scmp.ne.s32.totalorder %s242, %s244
    %p251 = scmp.eq.s32.totalorder %s24, 1
    %p252 = por %p250, %p251
    %p253 = scmp.ne.s32.totalorder %s244, %s245
    %p254 = scmp.eq.s32.totalorder %s24, 0
    %p255 = por %p253, %p254
    %p256 = scmp.ne.s32.totalorder %s244, %s245
    %p257 = scmp.eq.s32.totalorder %s25, 1
    %p258 = por %p256, %p257
    %p260 = scmp.ne.s32.totalorder %s245, %s259
    %p261 = scmp.eq.s32.totalorder %s25, 0
    %p262 = por %p260, %p261
    %s264 = sadd.s32 %s263, 1
    %p267 = scmp.eq.s32.totalorder %s19, 1
    %p268 = scmp.ne.s32.totalorder %s263, %s265
    %p269 = scmp.eq.s32.totalorder %s19, 0
    %p270 = por %p268, %p269
    %p271 = scmp.ne.s32.totalorder %s263, %s265
    %p272 = scmp.eq.s32.totalorder %s24, 1
    %p273 = por %p271, %p272
    %p274 = scmp.ne.s32.totalorder %s265, %s266
    %p275 = scmp.eq.s32.totalorder %s24, 0
    %p276 = por %p274, %p275
    %p277 = scmp.ne.s32.totalorder %s265, %s266
    %p278 = scmp.eq.s32.totalorder %s25, 1
    %p279 = por %p277, %p278
    %p281 = scmp.ne.s32.totalorder %s266, %s280
    %p282 = scmp.eq.s32.totalorder %s25, 0
    %p283 = por %p281, %p282
    %s285 = sadd.s32 %s284, 1
    %p288 = scmp.eq.s32.totalorder %s19, 1
    %p289 = scmp.ne.s32.totalorder %s284, %s286
    %p290 = scmp.eq.s32.totalorder %s19, 0
    %p291 = por %p289, %p290
    %p292 = scmp.ne.s32.totalorder %s284, %s286
    %p293 = scmp.eq.s32.totalorder %s24, 1
    %p294 = por %p292, %p293
    %p295 = scmp.ne.s32.totalorder %s286, %s287
    %p296 = scmp.eq.s32.totalorder %s24, 0
    %p297 = por %p295, %p296
    %p298 = scmp.ne.s32.totalorder %s286, %s287
    %p299 = scmp.eq.s32.totalorder %s25, 1
    %p300 = por %p298, %p299
    %p302 = scmp.ne.s32.totalorder %s287, %s301
    %p303 = scmp.eq.s32.totalorder %s25, 0
    %p304 = por %p302, %p303
    %s305 = ssub.s32 %s19, %s26
    %p306 = scmp.eq.s32.totalorder %s305, 0
    %s308 = sadd.s32 %s307, 1
    %s309 = scalar_select %p306, %s307, %s308
    %p312 = pneg %p306
    %p313 = scmp.eq.s32.totalorder %s19, 1
    %p314 = por %p312, %p313
    %p315 = scmp.ne.s32.totalorder %s307, %s310
    %p316 = scmp.eq.s32.totalorder %s19, 0
    %p317 = por %p315, %p316
    %p318 = scmp.ne.s32.totalorder %s307, %s310
    %p319 = scmp.eq.s32.totalorder %s24, 1
    %p320 = por %p318, %p319
    %p321 = scmp.ne.s32.totalorder %s310, %s311
    %p322 = scmp.eq.s32.totalorder %s24, 0
    %p323 = por %p321, %p322
    %p324 = scmp.ne.s32.totalorder %s310, %s311
    %p325 = scmp.eq.s32.totalorder %s25, 1
    %p326 = por %p324, %p325
    %p328 = scmp.ne.s32.totalorder %s311, %s327
    %p329 = scmp.eq.s32.totalorder %s25, 0
    %p330 = por %p328, %p329
    %p331 = scmp.le.s32.totalorder 1, %s19
    %p332 = scmp.lt.s32.totalorder %s19, 3
    %p333 = pnand %p331, %p332
    %p334 = pneg %p333
    // Predicated region
    $region9: #{base_inception_forward.1} parent=5 // pred_check
      _
    $region10: #{base_inception_forward.1} parent=5 // pred_check_branch
      %336 = sbr.rel (%p333) target = $region12
    $region11: #{base_inception_forward.1} parent=5 // pred_region
      %s337 = ssub.s32 %s19, 1
      // Predicated region
      $region13: #{base_inception_forward.1} parent=11 // pred_check
        %p338 = pneg %p66
      $region14: #{base_inception_forward.1} parent=11 // pred_check_branch
        %340 = sbr.rel (%p338) target = $region16
      $region15: #{base_inception_forward.1} parent=11 // pred_region
        _
      $region16: #{base_inception_forward.1} parent=11 // pred_fallthru
        _
      // Predicated region
      $region17: #{base_inception_forward.1} parent=11 // pred_check
        %p341 = pneg %p87
      $region18: #{base_inception_forward.1} parent=11 // pred_check_branch
        %343 = sbr.rel (%p341) target = $region20
      $region19: #{base_inception_forward.1} parent=11 // pred_region
        _
      $region20: #{base_inception_forward.1} parent=11 // pred_fallthru
        _
      // Predicated region
      $region21: #{base_inception_forward.1} parent=11 // pred_check
        %p344 = pneg %p108
      $region22: #{base_inception_forward.1} parent=11 // pred_check_branch
        %346 = sbr.rel (%p344) target = $region24
      $region23: #{base_inception_forward.1} parent=11 // pred_region
        _
      $region24: #{base_inception_forward.1} parent=11 // pred_fallthru
        _
      // Predicated region
      $region25: #{base_inception_forward.1} parent=11 // pred_check
        %p347 = pneg %p129
      $region26: #{base_inception_forward.1} parent=11 // pred_check_branch
        %349 = sbr.rel (%p347) target = $region28
      $region27: #{base_inception_forward.1} parent=11 // pred_region
        _
      $region28: #{base_inception_forward.1} parent=11 // pred_fallthru
        _
      // Predicated region
      $region29: #{base_inception_forward.1} parent=11 // pred_check
        %p350 = pneg %p150
      $region30: #{base_inception_forward.1} parent=11 // pred_check_branch
        %352 = sbr.rel (%p350) target = $region32
      $region31: #{base_inception_forward.1} parent=11 // pred_region
        _
      $region32: #{base_inception_forward.1} parent=11 // pred_fallthru
        _
      // Predicated region
      $region33: #{base_inception_forward.1} parent=11 // pred_check
        %p353 = pneg %p171
      $region34: #{base_inception_forward.1} parent=11 // pred_check_branch
        %355 = sbr.rel (%p353) target = $region36
      $region35: #{base_inception_forward.1} parent=11 // pred_region
        _
      $region36: #{base_inception_forward.1} parent=11 // pred_fallthru
        _
      // Predicated region
      $region37: #{base_inception_forward.1} parent=11 // pred_check
        %p356 = pneg %p192
      $region38: #{base_inception_forward.1} parent=11 // pred_check_branch
        %358 = sbr.rel (%p356) target = $region40
      $region39: #{base_inception_forward.1} parent=11 // pred_region
        _
      $region40: #{base_inception_forward.1} parent=11 // pred_fallthru
        _
      // Predicated region
      $region41: #{base_inception_forward.1} parent=11 // pred_check
        %p359 = pneg %p213
      $region42: #{base_inception_forward.1} parent=11 // pred_check_branch
        %361 = sbr.rel (%p359) target = $region44
      $region43: #{base_inception_forward.1} parent=11 // pred_region
        _
      $region44: #{base_inception_forward.1} parent=11 // pred_fallthru
        _
      // Predicated region
      $region45: #{base_inception_forward.1} parent=11 // pred_check
        %p362 = pneg %p234
      $region46: #{base_inception_forward.1} parent=11 // pred_check_branch
        %364 = sbr.rel (%p362) target = $region48
      $region47: #{base_inception_forward.1} parent=11 // pred_region
        _
      $region48: #{base_inception_forward.1} parent=11 // pred_fallthru
        _
      // Predicated region
      $region49: #{base_inception_forward.1} parent=11 // pred_check
        %p365 = pneg %p255
      $region50: #{base_inception_forward.1} parent=11 // pred_check_branch
        %367 = sbr.rel (%p365) target = $region52
      $region51: #{base_inception_forward.1} parent=11 // pred_region
        _
      $region52: #{base_inception_forward.1} parent=11 // pred_fallthru
        _
      // Predicated region
      $region53: #{base_inception_forward.1} parent=11 // pred_check
        %p368 = pneg %p276
      $region54: #{base_inception_forward.1} parent=11 // pred_check_branch
        %370 = sbr.rel (%p368) target = $region56
      $region55: #{base_inception_forward.1} parent=11 // pred_region
        _
      $region56: #{base_inception_forward.1} parent=11 // pred_fallthru
        _
      // Predicated region
      $region57: #{base_inception_forward.1} parent=11 // pred_check
        %p371 = pneg %p297
      $region58: #{base_inception_forward.1} parent=11 // pred_check_branch
        %373 = sbr.rel (%p371) target = $region60
      $region59: #{base_inception_forward.1} parent=11 // pred_region
        _
      $region60: #{base_inception_forward.1} parent=11 // pred_fallthru
        _
    $region12: #{base_inception_forward.1} parent=5 // pred_fallthru
      _
    %p374 = scmp.lt.s32.totalorder %s19, 2
    // Predicated region
    $region61: #{base_inception_forward.1} parent=5 // pred_check
      %p375 = pneg %p374
    $region62: #{base_inception_forward.1} parent=5 // pred_check_branch
      %377 = sbr.rel (%p375) target = $region64
    $region63: #{base_inception_forward.1} parent=5 // pred_region
      // Predicated region
      $region65: #{base_inception_forward.1} parent=63 // pred_check
        %p378 = pneg %p39
      $region66: #{base_inception_forward.1} parent=63 // pred_check_branch
        %380 = sbr.rel (%p378) target = $region68
      $region67: #{base_inception_forward.1} parent=63 // pred_region
        %p381 = scmp.lt.s32.totalorder %s19, 1
        %s382 = scalar_select %p381, %s19, 1
        %s383 = smul.addr %s382, 2
        %s384 = smul.addr %s383, 4
        %s385 = scalar_lea.vmem %s0, %s384
      $region68: #{base_inception_forward.1} parent=63 // pred_fallthru
        _
    $region64: #{base_inception_forward.1} parent=5 // pred_fallthru
      _
    %p386 = scmp.le.s32.totalorder 1, %s19
    %p387 = scmp.lt.s32.totalorder %s19, 3
    %p388 = pnand %p386, %p387
    %p389 = pneg %p388
    // Predicated region
    $region69: #{base_inception_forward.1} parent=5 // pred_check
      _
    $region70: #{base_inception_forward.1} parent=5 // pred_check_branch
      %391 = sbr.rel (%p388) target = $region72
    $region71: #{base_inception_forward.1} parent=5 // pred_region
      %s392 = ssub.s32 %s19, 1
      %p393 = scmp.lt.s32.totalorder %s24, 1
      %s394 = scalar_select %p393, %s24, 1
      %s395 = smul.addr %s394, 2
      %s396 = smul.addr %s395, 4
      %s397 = scalar_lea.vmem %s0, %s396
      %p398 = pneg %p45
      %p399 = pneg %p42
      %p400 = pneg %p66
      %p401 = pneg %p63
      %p402 = pneg %p87
      %p403 = pneg %p84
      %p404 = pneg %p108
      %p405 = pneg %p105
      %p406 = pneg %p129
      %p407 = pneg %p126
      %p408 = pneg %p150
      %p409 = pneg %p147
      %p410 = pneg %p171
      %p411 = pneg %p168
      %p412 = pneg %p192
      %p413 = pneg %p189
      %p414 = pneg %p213
      %p415 = pneg %p210
      %p416 = pneg %p234
      %p417 = pneg %p231
      %p418 = pneg %p255
      %p419 = pneg %p252
      %p420 = pneg %p276
      %p421 = pneg %p273
      %p422 = pneg %p297
      %p423 = pneg %p294
      %p424 = pneg %p323
      %p425 = pneg %p320
      %p426 = scmp.lt.s32.totalorder %s24, 1
      %s427 = scalar_select %p426, %s24, 1
      %s428 = smul.addr %s427, 8
      %s429 = smul.addr %s428, 8
      %s430 = scalar_lea.vmem %s13, %s429
      %p431 = scmp.lt.s32.totalorder %s24, 1
      %s432 = scalar_select %p431, %s24, 1
      %s433 = smul.addr %s432, 2
      %s434 = smul.addr %s433, 4
      %s435 = scalar_lea.vmem %s0, %s434
      %p436 = scmp.lt.s32.totalorder %s24, 1
      %s437 = scalar_select %p436, %s24, 1
      %s438 = smul.addr %s437, 8
      %s439 = smul.addr %s438, 8
      %s440 = scalar_lea.vmem %s13, %s439
      %v445 = vld [vmem:[%s1] sm:$0xf]
      %v446 = vld [vmem:[%s1 + $0x4] sm:$0xf]
      %v447 = vld [vmem:[%s2] sm:$0xff]
      %v448 = vld [vmem:[%s2 + $0x8] sm:$0xff]
      %v449 = vld [vmem:[%s3] sm:$0xff]
      %v450 = vld [vmem:[%s3 + $0x8] sm:$0xff]
      %v451 = vld [vmem:[%s4] sm:$0xf]
      %v452 = vld [vmem:[%s5] sm:$0xff]
      %v453 = vld [vmem:[%s6] sm:$0xff]
      %v454 = vld [vmem:[%s7] sm:$0xf]
      %v455 = vld [vmem:[%s8] sm:$0xff]
      %v456 = vld [vmem:[%s9] sm:$0xff]
      %v457 = vld [vmem:[%s10] sm:$0xf]
      %v458 = vld [vmem:[%s11] sm:$0xff]
      %v459 = vld [vmem:[%s12] sm:$0xff]
      %v460 = vld [vmem:[%s435] sm:$0xff]
      %v462 = vcombine.high %v460, %v460
      %v464 = vpack.c.bf16 %v460, %v460
      %v465 = vpack.c.bf16 %v462, %v462
      %v468 = vunpack.c.l.b16 %v445
      %v469 = vunpack.c.l.b16 %v446
      %v470 = vpack.c.b16 %v469, %v468
      %vm471 = vcmask 31744
      %v473 = vsel %vm471, %v470, 0
      %vm475 = vcmask 1041408
      %v477 = vsel %vm475, %v464, 0
      %v480 = vsel %vm475, %v465, 0
      %482 = vmatprep.subr.bf16.mxu0 %v480
      %483 = vmatpush1.bf16.msra.mxu0 %v477
      %484 = vmatprep.subr.bf16.mxu0 0
      %485 = vmatpush1.bf16.msra.mxu0 0
      %486 = vmatprep.subr.bf16.mxu0 0
      %487 = vmatpush1.bf16.msra.mxu0 0
      %488 = vmatprep.subr.bf16.mxu0 0
      %489 = vmatpush1.bf16.msra.mxu0 0
      %490 = vmatprep.subr.bf16.mxu0 0
      %491 = vmatpush1.bf16.msra.mxu0 0
      %492 = vmatprep.subr.bf16.mxu0 0
      %493 = vmatpush1.bf16.msra.mxu0 0
      %494 = vmatprep.subr.bf16.mxu0 0
      %495 = vmatpush1.bf16.msra.mxu0 0
      %496 = vmatprep.subr.bf16.mxu0 0
      %497 = vmatpush1.bf16.msra.mxu0 0
      %498 = vmatprep.subr.bf16.mxu0 0
      %499 = vmatpush1.bf16.msra.mxu0 0
      %500 = vmatprep.subr.bf16.mxu0 0
      %501 = vmatpush1.bf16.msra.mxu0 0
      %502 = vmatprep.subr.bf16.mxu0 0
      %503 = vmatpush1.bf16.msra.mxu0 0
      %504 = vmatprep.subr.bf16.mxu0 0
      %505 = vmatpush1.bf16.msra.mxu0 0
      %506 = vmatprep.subr.bf16.mxu0 0
      %507 = vmatpush1.bf16.msra.mxu0 0
      %508 = vmatprep.subr.bf16.mxu0 0
      %509 = vmatpush1.bf16.msra.mxu0 0
      %510 = vmatprep.subr.bf16.mxu0 0
      %511 = vmatpush1.bf16.msra.mxu0 0
      %512 = vmatprep.subr.bf16.mxu0 0
      %513 = vmatpush1.bf16.msra.mxu0 0
      %514 = vmatprep.mubr.bf16.mxu0 0
      %515 = vmatmul.mubr.bf16.gmra.mrb[0].mxu0 %v473
      %v516 = vpop.f32.mrb[0].mxu0
      %v517 = vadd.f32 0.0, %v516
      %v518 = vpop.f32.mrb[0].mxu0
      %v519 = vadd.f32 0.0, %v518
      %v520 = vpop.f32.mrb[0].mxu0
      %v521 = vadd.f32 0.0, %v520
      %v522 = vpop.f32.mrb[0].mxu0
      %v523 = vadd.f32 0.0, %v522
      %524 = vdwg.mxu0
      %526 = vset.pattern.permute.xlu0 0
      %527 = vperm.xlu0 %526, %v447
      %v528 = vpop.permute.xlu0 %527
      %531 = vset.pattern.permute.xlu0 0
      %532 = vperm.xlu0 %531, %v448
      %v533 = vpop.permute.xlu0 %532
      %v535 = vmul.f32 %v517, %v528
      %v536 = vmul.f32 %v519, %v528
      %v537 = vmul.f32 %v521, %v533
      %v538 = vmul.f32 %v523, %v533
      %540 = vset.pattern.permute.xlu0 0
      %541 = vperm.xlu0 %540, %v449
      %v542 = vpop.permute.xlu0 %541
      %545 = vset.pattern.permute.xlu0 0
      %546 = vperm.xlu0 %545, %v450
      %v547 = vpop.permute.xlu0 %546
      %v549 = vadd.f32 %v535, %v542
      %v550 = vadd.f32 %v536, %v542
      %v551 = vadd.f32 %v537, %v547
      %v552 = vadd.f32 %v538, %v547
      %v553 = vmax.f32 %v549, 0.0
      %v554 = vmax.f32 %v550, 0.0
      %v555 = vmax.f32 %v551, 0.0
      %v556 = vmax.f32 %v552, 0.0
      %v557 = vpack.c.bf16 %v555, %v555
      %v558 = vpack.c.bf16 %v556, %v556
      %561 = vrot.lane.b32.xlu0 %v557, 17
      %v562 = vpop.permute.xlu0 %561
      %563 = vrot.lane.b32.xlu0 %v558, 17
      %v564 = vpop.permute.xlu0 %563
      %vm565 = vcmask 138240
      %v566 = vsel %vm565, %v562, %v564
      %vm568 = vcmask 138240
      %v571 = vsel %vm568, 0, %v562
      %v574 = vsel %vm568, %v564, 0
      %v576 = vlaneseq
      %v577 = vand.u32 %v576, 127
      %v578 = vadd.s32 %v577, 128
      %vm579 = vcmp.lt.s32.totalorder %v577, 0
      %v580 = vsub.s32 0, %v577
      %v581 = vsel %vm579, %v580, %v577
      %v582 = vshrl.u32 %v581, 4
      %v583 = vand.u32 %v581, 15
      %v584 = vsub.s32 0, %v583
      %v585 = vsel %vm579, %v584, %v583
      %vm586 = vcmp.lt.s32.totalorder %v578, 0
      %v587 = vsub.s32 0, %v578
      %v588 = vsel %vm586, %v587, %v578
      %v589 = vshrl.u32 %v588, 4
      %v590 = vand.u32 %v588, 15
      %v591 = vsub.s32 0, %v590
      %v592 = vsel %vm586, %v591, %v590
      %vm593 = vcmp.ne.s32.totalorder %v585, 0
      %vm594 = vcmp.ne.s32.totalorder %v592, 0
      %vm595 = vcmp.lt.s32.totalorder %v585, 0
      %vm596 = vcmp.lt.s32.totalorder %v592, 0
      %vm597 = vmand %vm595, %vm593
      %vm598 = vmand %vm596, %vm594
      %v599 = vadd.s32 %v585, 16
      %v600 = vadd.s32 %v592, 16
      %v601 = vsel %vm597, %v599, %v585
      %v602 = vsel %vm598, %v600, %v592
      %v603 = vadd.s32 %v601, 4294967295
      %v604 = vadd.s32 %v602, 4294967295
      %vm605 = vcmp.ge.s32.totalorder %v603, 0
      %vm606 = vcmp.ge.s32.totalorder %v604, 0
      %vm607 = vcmp.lt.s32.totalorder %v603, 16
      %vm608 = vcmp.lt.s32.totalorder %v604, 16
      %vm609 = vmand %vm605, %vm607
      %vm610 = vmand %vm606, %vm608
      %v611 = vsel %vm609, 1, 0
      %v612 = vsel %vm610, 1, 0
      %vm613 = vcmp.eq.s32.totalorder %v611, 1
      %vm614 = vcmp.eq.s32.totalorder %v612, 1
      %vm615 = vmpackc.low %vm614, %vm613
      %v616 = vsel %vm615, 65537, 0
      %v617 = vlaneseq
      %v618 = vshrl.u32 %v617, 7
      %v619 = vsub.s32 0, %v618
      %v620 = vrot.slane %v616, %v619
      %v621 = vlaneseq
      %v622 = vshrl.u32 %v621, 7
      %v623 = vsub.s32 4, %v622
      %v624 = vrot.slane %v616, %v623
      %vm625 = vcmp.ne.s16.totalorder %v620, 0
      %vm626 = vcmp.ne.s16.totalorder %v624, 0
      %v627 = vsel %vm625, %v571, 0
      %v628 = vsel %vm626, %v566, 0
      %v629 = vadd.s32 %v601, 1
      %v630 = vadd.s32 %v602, 1
      %vm631 = vcmp.ge.s32.totalorder %v629, 0
      %vm632 = vcmp.ge.s32.totalorder %v630, 0
      %vm633 = vcmp.lt.s32.totalorder %v629, 16
      %vm634 = vcmp.lt.s32.totalorder %v630, 16
      %vm635 = vmand %vm631, %vm633
      %vm636 = vmand %vm632, %vm634
      %v637 = vsel %vm635, 1, 0
      %v638 = vsel %vm636, 1, 0
      %vm639 = vcmp.eq.s32.totalorder %v637, 1
      %vm640 = vcmp.eq.s32.totalorder %v638, 1
      %vm641 = vmpackc.low %vm640, %vm639
      %v642 = vsel %vm641, 65537, 0
      %v643 = vlaneseq
      %v644 = vshrl.u32 %v643, 7
      %v645 = vsub.s32 0, %v644
      %v646 = vrot.slane %v642, %v645
      %v647 = vlaneseq
      %v648 = vshrl.u32 %v647, 7
      %v649 = vsub.s32 4, %v648
      %v650 = vrot.slane %v642, %v649
      %651 = vrot.lane.b32.xlu0 %v646, 2
      %v652 = vpop.permute.xlu0 %651
      %653 = vrot.lane.b32.xlu0 %v650, 2
      %v654 = vpop.permute.xlu0 %653
      %vm655 = vcmask 15360
      %v656 = vsel %vm655, %v652, %v654
      %vm657 = vcmp.ne.s16.totalorder %v652, 0
      %vm658 = vcmp.ne.s16.totalorder %v656, 0
      %vm659 = vcmp.ne.s16.totalorder %v654, 0
      %v660 = vsel %vm657, %v571, 0
      %v661 = vsel %vm658, %v566, 0
      %v662 = vsel %vm659, %v574, 0
      %663 = vrot.lane.b32.xlu0 %v620, 16
      %v664 = vpop.permute.xlu0 %663
      %665 = vrot.lane.b32.xlu0 %v624, 16
      %v666 = vpop.permute.xlu0 %665
      %vm667 = vcmask 130048
      %v668 = vsel %vm667, %v664, %v666
      %vm669 = vcmp.ne.s16.totalorder %v664, 0
      %vm670 = vcmp.ne.s16.totalorder %v668, 0
      %vm671 = vcmp.ne.s16.totalorder %v666, 0
      %v672 = vsel %vm669, %v571, 0
      %v673 = vsel %vm670, %v566, 0
      %v674 = vsel %vm671, %v574, 0
      %675 = vrot.lane.b32.xlu0 %v646, 18
      %v676 = vpop.permute.xlu0 %675
      %677 = vrot.lane.b32.xlu0 %v650, 18
      %v678 = vpop.permute.xlu0 %677
      %vm679 = vcmask 146432
      %v680 = vsel %vm679, %v676, %v678
      %vm681 = vcmp.ne.s16.totalorder %v676, 0
      %vm682 = vcmp.ne.s16.totalorder %v680, 0
      %vm683 = vcmp.ne.s16.totalorder %v678, 0
      %v684 = vsel %vm681, %v571, 0
      %v685 = vsel %vm682, %v566, 0
      %v686 = vsel %vm683, %v574, 0
      %687 = vrot.lane.b32.xlu0 %v620, 32
      %v688 = vpop.permute.xlu0 %687
      %689 = vrot.lane.b32.xlu0 %v624, 32
      %v690 = vpop.permute.xlu0 %689
      %vm691 = vcmask 261120
      %v692 = vsel %vm691, %v688, %v690
      %vm693 = vcmp.ne.s16.totalorder %v688, 0
      %vm694 = vcmp.ne.s16.totalorder %v692, 0
      %vm695 = vcmp.ne.s16.totalorder %v690, 0
      %v696 = vsel %vm693, %v571, 0
      %v697 = vsel %vm694, %v566, 0
      %v698 = vsel %vm695, %v574, 0
      %699 = vrot.lane.b32.xlu0 %v646, 34
      %v700 = vpop.permute.xlu0 %699
      %701 = vrot.lane.b32.xlu0 %v650, 34
      %v702 = vpop.permute.xlu0 %701
      %vm703 = vcmask 277504
      %v704 = vsel %vm703, %v700, %v702
      %vm705 = vcmp.ne.s16.totalorder %v700, 0
      %vm706 = vcmp.ne.s16.totalorder %v704, 0
      %vm707 = vcmp.ne.s16.totalorder %v702, 0
      %v708 = vsel %vm705, %v571, 0
      %v709 = vsel %vm706, %v566, 0
      %v710 = vsel %vm707, %v574, 0
      %v713 = vrot.slane %v571, 6
      %v714 = vrot.slane %v566, 6
      %v715 = vrot.slane %v574, 6
      %716 = vrot.lane.b32.xlu0 %v713, 127
      %v717 = vpop.permute.xlu0 %716
      %718 = vrot.lane.b32.xlu0 %v714, 127
      %v719 = vpop.permute.xlu0 %718
      %720 = vrot.lane.b32.xlu0 %v715, 127
      %v721 = vpop.permute.xlu0 %720
      %vm722 = vcmask 1039360
      %v723 = vsel %vm722, %v717, %v719
      %v724 = vsel %vm722, %v719, %v721
      %v728 = vrot.slane %v660, 4
      %v729 = vrot.slane %v661, 4
      %v730 = vrot.slane %v662, 4
      %731 = vrot.lane.b32.xlu0 %v728, 126
      %v732 = vpop.permute.xlu0 %731
      %733 = vrot.lane.b32.xlu0 %v729, 126
      %v734 = vpop.permute.xlu0 %733
      %735 = vrot.lane.b32.xlu0 %v730, 126
      %v736 = vpop.permute.xlu0 %735
      %vm737 = vcmask 1031168
      %v738 = vsel %vm737, %v732, %v734
      %v739 = vsel %vm737, %v734, %v736
      %v743 = vrot.slane %v672, 2
      %v744 = vrot.slane %v673, 2
      %v745 = vrot.slane %v674, 2
      %746 = vrot.lane.b32.xlu0 %v743, 112
      %v747 = vpop.permute.xlu0 %746
      %748 = vrot.lane.b32.xlu0 %v744, 112
      %v749 = vpop.permute.xlu0 %748
      %750 = vrot.lane.b32.xlu0 %v745, 112
      %v751 = vpop.permute.xlu0 %750
      %vm752 = vcmask 916480
      %v753 = vsel %vm752, %v747, %v749
      %v754 = vsel %vm752, %v749, %v751
      %755 = vrot.lane.b32.xlu0 %v571, 111
      %v756 = vpop.permute.xlu0 %755
      %757 = vrot.lane.b32.xlu0 %v566, 111
      %v758 = vpop.permute.xlu0 %757
      %759 = vrot.lane.b32.xlu0 %v574, 111
      %v760 = vpop.permute.xlu0 %759
      %vm761 = vcmask 908288
      %v762 = vsel %vm761, %v756, %v758
      %v763 = vsel %vm761, %v758, %v760
      %v767 = vrot.slane %v684, 6
      %v768 = vrot.slane %v685, 6
      %v769 = vrot.slane %v686, 6
      %770 = vrot.lane.b32.xlu0 %v767, 110
      %v771 = vpop.permute.xlu0 %770
      %772 = vrot.lane.b32.xlu0 %v768, 110
      %v773 = vpop.permute.xlu0 %772
      %774 = vrot.lane.b32.xlu0 %v769, 110
      %v775 = vpop.permute.xlu0 %774
      %vm776 = vcmask 900096
      %v777 = vsel %vm776, %v771, %v773
      %v778 = vsel %vm776, %v773, %v775
      %v782 = vrot.slane %v696, 4
      %v783 = vrot.slane %v697, 4
      %v784 = vrot.slane %v698, 4
      %785 = vrot.lane.b32.xlu0 %v782, 96
      %v786 = vpop.permute.xlu0 %785
      %787 = vrot.lane.b32.xlu0 %v783, 96
      %v788 = vpop.permute.xlu0 %787
      %789 = vrot.lane.b32.xlu0 %v784, 96
      %v790 = vpop.permute.xlu0 %789
      %vm791 = vcmask 785408
      %v792 = vsel %vm791, %v786, %v788
      %v793 = vsel %vm791, %v788, %v790
      %v794 = vrot.slane %v571, 2
      %v795 = vrot.slane %v566, 2
      %v796 = vrot.slane %v574, 2
      %797 = vrot.lane.b32.xlu0 %v794, 95
      %v798 = vpop.permute.xlu0 %797
      %799 = vrot.lane.b32.xlu0 %v795, 95
      %v800 = vpop.permute.xlu0 %799
      %801 = vrot.lane.b32.xlu0 %v796, 95
      %v802 = vpop.permute.xlu0 %801
      %vm803 = vcmask 777216
      %v804 = vsel %vm803, %v798, %v800
      %v805 = vsel %vm803, %v800, %v802
      %809 = vrot.lane.b32.xlu0 %v708, 94
      %v810 = vpop.permute.xlu0 %809
      %811 = vrot.lane.b32.xlu0 %v709, 94
      %v812 = vpop.permute.xlu0 %811
      %813 = vrot.lane.b32.xlu0 %v710, 94
      %v814 = vpop.permute.xlu0 %813
      %vm815 = vcmask 769024
      %v816 = vsel %vm815, %v810, %v812
      %v817 = vsel %vm815, %v812, %v814
      %v820 = vsel %vm475, %v627, %v723
      %v823 = vsel %vm475, %v628, %v724
      %vm824 = vcmask 1043456
      %v826 = vsel %vm824, %v820, %v738
      %v828 = vsel %vm824, %v823, %v739
      %vm829 = vcmask 1045504
      %v831 = vsel %vm829, %v826, %v753
      %v834 = vsel %vm829, %v828, %v754
      %v838 = vsel %vm475, %v762, %v777
      %v841 = vsel %vm475, %v763, %v778
      %v843 = vsel %vm824, %v838, %v792
      %v845 = vsel %vm824, %v841, %v793
      %v847 = vsel %vm829, %v843, %v804
      %v850 = vsel %vm829, %v845, %v805
      %vm852 = vcmask 293888
      %v854 = vsel %vm852, %v451, 0
      %v857 = vsel %vm475, %v816, 0
      %v860 = vsel %vm475, %v817, 0
      %862 = vmatprep.subr.bf16.mxu0 %v834
      %863 = vmatpush1.bf16.msra.mxu0 %v831
      %864 = vmatprep.subr.bf16.mxu0 %v850
      %865 = vmatpush1.bf16.msra.mxu0 %v847
      %866 = vmatprep.subr.bf16.mxu0 %v860
      %867 = vmatpush1.bf16.msra.mxu0 %v857
      %868 = vmatprep.subr.bf16.mxu0 0
      %869 = vmatpush1.bf16.msra.mxu0 0
      %870 = vmatprep.subr.bf16.mxu0 0
      %871 = vmatpush1.bf16.msra.mxu0 0
      %872 = vmatprep.subr.bf16.mxu0 0
      %873 = vmatpush1.bf16.msra.mxu0 0
      %874 = vmatprep.subr.bf16.mxu0 0
      %875 = vmatpush1.bf16.msra.mxu0 0
      %876 = vmatprep.subr.bf16.mxu0 0
      %877 = vmatpush1.bf16.msra.mxu0 0
      %878 = vmatprep.subr.bf16.mxu0 0
      %879 = vmatpush1.bf16.msra.mxu0 0
      %880 = vmatprep.subr.bf16.mxu0 0
      %881 = vmatpush1.bf16.msra.mxu0 0
      %882 = vmatprep.subr.bf16.mxu0 0
      %883 = vmatpush1.bf16.msra.mxu0 0
      %884 = vmatprep.subr.bf16.mxu0 0
      %885 = vmatpush1.bf16.msra.mxu0 0
      %886 = vmatprep.subr.bf16.mxu0 0
      %887 = vmatpush1.bf16.msra.mxu0 0
      %888 = vmatprep.subr.bf16.mxu0 0
      %889 = vmatpush1.bf16.msra.mxu0 0
      %890 = vmatprep.subr.bf16.mxu0 0
      %891 = vmatpush1.bf16.msra.mxu0 0
      %892 = vmatprep.subr.bf16.mxu0 0
      %893 = vmatpush1.bf16.msra.mxu0 0
      %894 = vmatprep.mubr.bf16.mxu0 0
      %895 = vmatmul.mubr.bf16.gmra.mrb[0].mxu0 %v854
      %v896 = vpop.f32.mrb[0].mxu0
      %v897 = vadd.f32 0.0, %v896
      %v898 = vpop.f32.mrb[0].mxu0
      %v899 = vadd.f32 0.0, %v898
      %v900 = vpop.f32.mrb[0].mxu0
      %v901 = vpop.f32.mrb[0].mxu0
      %902 = vdwg.mxu0
      %904 = vset.pattern.permute.xlu0 0
      %905 = vperm.xlu0 %904, %v452
      %v906 = vpop.permute.xlu0 %905
      %v908 = vmul.f32 %v897, %v906
      %v909 = vmul.f32 %v899, %v906
      %911 = vset.pattern.permute.xlu0 0
      %912 = vperm.xlu0 %911, %v453
      %v913 = vpop.permute.xlu0 %912
      %v915 = vadd.f32 %v908, %v913
      %v916 = vadd.f32 %v909, %v913
      %v917 = vmax.f32 %v915, 0.0
      %v918 = vmax.f32 %v916, 0.0
      %v919 = vrot.slane %v557, 2
      %v920 = vrot.slane %v558, 2
      %921 = vrot.lane.b32.xlu0 %v919, 34
      %v922 = vpop.permute.xlu0 %921
      %923 = vrot.lane.b32.xlu0 %v920, 34
      %v924 = vpop.permute.xlu0 %923
      %v925 = vsel %vm703, %v922, %v924
      %vm927 = vcmask 277504
      %v929 = vsel %vm927, 0, %v922
      %v932 = vsel %vm927, %v924, 0
      %v934 = vadd.s32 %v601, 4294967294
      %v935 = vadd.s32 %v602, 4294967294
      %vm936 = vcmp.ge.s32.totalorder %v934, 0
      %vm937 = vcmp.ge.s32.totalorder %v935, 0
      %vm938 = vcmp.lt.s32.totalorder %v934, 16
      %vm939 = vcmp.lt.s32.totalorder %v935, 16
      %vm940 = vmand %vm936, %vm938
      %vm941 = vmand %vm937, %vm939
      %v942 = vsel %vm940, 1, 0
      %v943 = vsel %vm941, 1, 0
      %vm944 = vcmp.eq.s32.totalorder %v942, 1
      %vm945 = vcmp.eq.s32.totalorder %v943, 1
      %vm946 = vmpackc.low %vm945, %vm944
      %v947 = vsel %vm946, 65537, 0
      %v948 = vlaneseq
      %v949 = vshrl.u32 %v948, 7
      %v950 = vsub.s32 0, %v949
      %v951 = vrot.slane %v947, %v950
      %v952 = vlaneseq
      %v953 = vshrl.u32 %v952, 7
      %v954 = vsub.s32 4, %v953
      %v955 = vrot.slane %v947, %v954
      %vm956 = vcmp.ne.s16.totalorder %v951, 0
      %vm957 = vcmp.ne.s16.totalorder %v955, 0
      %v958 = vsel %vm956, %v929, 0
      %v959 = vsel %vm957, %v925, 0
      %960 = vrot.lane.b32.xlu0 %v620, 1
      %v961 = vpop.permute.xlu0 %960
      %962 = vrot.lane.b32.xlu0 %v624, 1
      %v963 = vpop.permute.xlu0 %962
      %vm964 = vcmask 7168
      %v965 = vsel %vm964, %v961, %v963
      %vm966 = vcmp.ne.s16.totalorder %v961, 0
      %vm967 = vcmp.ne.s16.totalorder %v965, 0
      %vm968 = vcmp.ne.s16.totalorder %v963, 0
      %v969 = vsel %vm966, %v929, 0
      %v970 = vsel %vm967, %v925, 0
      %v971 = vsel %vm968, %v932, 0
      %972 = vrot.lane.b32.xlu0 %v646, 3
      %v973 = vpop.permute.xlu0 %972
      %974 = vrot.lane.b32.xlu0 %v650, 3
      %v975 = vpop.permute.xlu0 %974
      %vm976 = vcmask 23552
      %v977 = vsel %vm976, %v973, %v975
      %vm978 = vcmp.ne.s16.totalorder %v973, 0
      %vm979 = vcmp.ne.s16.totalorder %v977, 0
      %vm980 = vcmp.ne.s16.totalorder %v975, 0
      %v981 = vsel %vm978, %v929, 0
      %v982 = vsel %vm979, %v925, 0
      %v983 = vsel %vm980, %v932, 0
      %v984 = vadd.s32 %v601, 2
      %v985 = vadd.s32 %v602, 2
      %vm986 = vcmp.ge.s32.totalorder %v984, 0
      %vm987 = vcmp.ge.s32.totalorder %v985, 0
      %vm988 = vcmp.lt.s32.totalorder %v984, 16
      %vm989 = vcmp.lt.s32.totalorder %v985, 16
      %vm990 = vmand %vm986, %vm988
      %vm991 = vmand %vm987, %vm989
      %v992 = vsel %vm990, 1, 0
      %v993 = vsel %vm991, 1, 0
      %vm994 = vcmp.eq.s32.totalorder %v992, 1
      %vm995 = vcmp.eq.s32.totalorder %v993, 1
      %vm996 = vmpackc.low %vm995, %vm994
      %v997 = vsel %vm996, 65537, 0
      %v998 = vlaneseq
      %v999 = vshrl.u32 %v998, 7
      %v1000 = vsub.s32 0, %v999
      %v1001 = vrot.slane %v997, %v1000
      %v1002 = vlaneseq
      %v1003 = vshrl.u32 %v1002, 7
      %v1004 = vsub.s32 4, %v1003
      %v1005 = vrot.slane %v997, %v1004
      %1006 = vrot.lane.b32.xlu0 %v1001, 4
      %v1007 = vpop.permute.xlu0 %1006
      %1008 = vrot.lane.b32.xlu0 %v1005, 4
      %v1009 = vpop.permute.xlu0 %1008
      %vm1010 = vcmask 31744
      %v1011 = vsel %vm1010, %v1007, %v1009
      %vm1012 = vcmp.ne.s16.totalorder %v1007, 0
      %vm1013 = vcmp.ne.s16.totalorder %v1011, 0
      %vm1014 = vcmp.ne.s16.totalorder %v1009, 0
      %v1015 = vsel %vm1012, %v929, 0
      %v1016 = vsel %vm1013, %v925, 0
      %v1017 = vsel %vm1014, %v932, 0
      %1018 = vrot.lane.b32.xlu0 %v951, 16
      %v1019 = vpop.permute.xlu0 %1018
      %1020 = vrot.lane.b32.xlu0 %v955, 16
      %v1021 = vpop.permute.xlu0 %1020
      %v1022 = vsel %vm667, %v1019, %v1021
      %vm1023 = vcmp.ne.s16.totalorder %v1019, 0
      %vm1024 = vcmp.ne.s16.totalorder %v1022, 0
      %vm1025 = vcmp.ne.s16.totalorder %v1021, 0
      %v1026 = vsel %vm1023, %v929, 0
      %v1027 = vsel %vm1024, %v925, 0
      %v1028 = vsel %vm1025, %v932, 0
      %1029 = vrot.lane.b32.xlu0 %v620, 17
      %v1030 = vpop.permute.xlu0 %1029
      %1031 = vrot.lane.b32.xlu0 %v624, 17
      %v1032 = vpop.permute.xlu0 %1031
      %v1033 = vsel %vm565, %v1030, %v1032
      %vm1034 = vcmp.ne.s16.totalorder %v1030, 0
      %vm1035 = vcmp.ne.s16.totalorder %v1033, 0
      %vm1036 = vcmp.ne.s16.totalorder %v1032, 0
      %v1037 = vsel %vm1034, %v929, 0
      %v1038 = vsel %vm1035, %v925, 0
      %v1039 = vsel %vm1036, %v932, 0
      %1040 = vrot.lane.b32.xlu0 %v646, 19
      %v1041 = vpop.permute.xlu0 %1040
      %1042 = vrot.lane.b32.xlu0 %v650, 19
      %v1043 = vpop.permute.xlu0 %1042
      %vm1044 = vcmask 154624
      %v1045 = vsel %vm1044, %v1041, %v1043
      %vm1046 = vcmp.ne.s16.totalorder %v1041, 0
      %vm1047 = vcmp.ne.s16.totalorder %v1045, 0
      %vm1048 = vcmp.ne.s16.totalorder %v1043, 0
      %v1049 = vsel %vm1046, %v929, 0
      %v1050 = vsel %vm1047, %v925, 0
      %v1051 = vsel %vm1048, %v932, 0
      %1052 = vrot.lane.b32.xlu0 %v1001, 20
      %v1053 = vpop.permute.xlu0 %1052
      %1054 = vrot.lane.b32.xlu0 %v1005, 20
      %v1055 = vpop.permute.xlu0 %1054
      %vm1056 = vcmask 162816
      %v1057 = vsel %vm1056, %v1053, %v1055
      %vm1058 = vcmp.ne.s16.totalorder %v1053, 0
      %vm1059 = vcmp.ne.s16.totalorder %v1057, 0
      %vm1060 = vcmp.ne.s16.totalorder %v1055, 0
      %v1061 = vsel %vm1058, %v929, 0
      %v1062 = vsel %vm1059, %v925, 0
      %v1063 = vsel %vm1060, %v932, 0
      %1064 = vrot.lane.b32.xlu0 %v951, 32
      %v1065 = vpop.permute.xlu0 %1064
      %1066 = vrot.lane.b32.xlu0 %v955, 32
      %v1067 = vpop.permute.xlu0 %1066
      %v1068 = vsel %vm691, %v1065, %v1067
      %vm1069 = vcmp.ne.s16.totalorder %v1065, 0
      %vm1070 = vcmp.ne.s16.totalorder %v1068, 0
      %vm1071 = vcmp.ne.s16.totalorder %v1067, 0
      %v1072 = vsel %vm1069, %v929, 0
      %v1073 = vsel %vm1070, %v925, 0
      %v1074 = vsel %vm1071, %v932, 0
      %1075 = vrot.lane.b32.xlu0 %v620, 33
      %v1076 = vpop.permute.xlu0 %1075
      %1077 = vrot.lane.b32.xlu0 %v624, 33
      %v1078 = vpop.permute.xlu0 %1077
      %vm1079 = vcmask 269312
      %v1080 = vsel %vm1079, %v1076, %v1078
      %vm1081 = vcmp.ne.s16.totalorder %v1076, 0
      %vm1082 = vcmp.ne.s16.totalorder %v1080, 0
      %vm1083 = vcmp.ne.s16.totalorder %v1078, 0
      %v1084 = vsel %vm1081, %v929, 0
      %v1085 = vsel %vm1082, %v925, 0
      %v1086 = vsel %vm1083, %v932, 0
      %1087 = vrot.lane.b32.xlu0 %v646, 35
      %v1088 = vpop.permute.xlu0 %1087
      %1089 = vrot.lane.b32.xlu0 %v650, 35
      %v1090 = vpop.permute.xlu0 %1089
      %vm1091 = vcmask 285696
      %v1092 = vsel %vm1091, %v1088, %v1090
      %vm1093 = vcmp.ne.s16.totalorder %v1088, 0
      %vm1094 = vcmp.ne.s16.totalorder %v1092, 0
      %vm1095 = vcmp.ne.s16.totalorder %v1090, 0
      %v1096 = vsel %vm1093, %v929, 0
      %v1097 = vsel %vm1094, %v925, 0
      %v1098 = vsel %vm1095, %v932, 0
      %1099 = vrot.lane.b32.xlu0 %v1001, 36
      %v1100 = vpop.permute.xlu0 %1099
      %1101 = vrot.lane.b32.xlu0 %v1005, 36
      %v1102 = vpop.permute.xlu0 %1101
      %vm1103 = vcmask 293888
      %v1104 = vsel %vm1103, %v1100, %v1102
      %vm1105 = vcmp.ne.s16.totalorder %v1100, 0
      %vm1106 = vcmp.ne.s16.totalorder %v1104, 0
      %vm1107 = vcmp.ne.s16.totalorder %v1102, 0
      %v1108 = vsel %vm1105, %v929, 0
      %v1109 = vsel %vm1106, %v925, 0
      %v1110 = vsel %vm1107, %v932, 0
      %1111 = vrot.lane.b32.xlu0 %v951, 48
      %v1112 = vpop.permute.xlu0 %1111
      %1113 = vrot.lane.b32.xlu0 %v955, 48
      %v1114 = vpop.permute.xlu0 %1113
      %vm1115 = vcmask 392192
      %v1116 = vsel %vm1115, %v1112, %v1114
      %vm1117 = vcmp.ne.s16.totalorder %v1112, 0
      %vm1118 = vcmp.ne.s16.totalorder %v1116, 0
      %vm1119 = vcmp.ne.s16.totalorder %v1114, 0
      %v1120 = vsel %vm1117, %v929, 0
      %v1121 = vsel %vm1118, %v925, 0
      %v1122 = vsel %vm1119, %v932, 0
      %1123 = vrot.lane.b32.xlu0 %v620, 49
      %v1124 = vpop.permute.xlu0 %1123
      %1125 = vrot.lane.b32.xlu0 %v624, 49
      %v1126 = vpop.permute.xlu0 %1125
      %vm1127 = vcmask 400384
      %v1128 = vsel %vm1127, %v1124, %v1126
      %vm1129 = vcmp.ne.s16.totalorder %v1124, 0
      %vm1130 = vcmp.ne.s16.totalorder %v1128, 0
      %vm1131 = vcmp.ne.s16.totalorder %v1126, 0
      %v1132 = vsel %vm1129, %v929, 0
      %v1133 = vsel %vm1130, %v925, 0
      %v1134 = vsel %vm1131, %v932, 0
      %1135 = vrot.lane.b32.xlu0 %v646, 51
      %v1136 = vpop.permute.xlu0 %1135
      %1137 = vrot.lane.b32.xlu0 %v650, 51
      %v1138 = vpop.permute.xlu0 %1137
      %vm1139 = vcmask 416768
      %v1140 = vsel %vm1139, %v1136, %v1138
      %vm1141 = vcmp.ne.s16.totalorder %v1136, 0
      %vm1142 = vcmp.ne.s16.totalorder %v1140, 0
      %vm1143 = vcmp.ne.s16.totalorder %v1138, 0
      %v1144 = vsel %vm1141, %v929, 0
      %v1145 = vsel %vm1142, %v925, 0
      %v1146 = vsel %vm1143, %v932, 0
      %1147 = vrot.lane.b32.xlu0 %v1001, 52
      %v1148 = vpop.permute.xlu0 %1147
      %1149 = vrot.lane.b32.xlu0 %v1005, 52
      %v1150 = vpop.permute.xlu0 %1149
      %vm1151 = vcmask 424960
      %v1152 = vsel %vm1151, %v1148, %v1150
      %vm1153 = vcmp.ne.s16.totalorder %v1148, 0
      %vm1154 = vcmp.ne.s16.totalorder %v1152, 0
      %vm1155 = vcmp.ne.s16.totalorder %v1150, 0
      %v1156 = vsel %vm1153, %v929, 0
      %v1157 = vsel %vm1154, %v925, 0
      %v1158 = vsel %vm1155, %v932, 0
      %1159 = vrot.lane.b32.xlu0 %v951, 64
      %v1160 = vpop.permute.xlu0 %1159
      %1161 = vrot.lane.b32.xlu0 %v955, 64
      %v1162 = vpop.permute.xlu0 %1161
      %vm1163 = vcmask 523264
      %v1164 = vsel %vm1163, %v1160, %v1162
      %vm1165 = vcmp.ne.s16.totalorder %v1160, 0
      %vm1166 = vcmp.ne.s16.totalorder %v1164, 0
      %vm1167 = vcmp.ne.s16.totalorder %v1162, 0
      %v1168 = vsel %vm1165, %v929, 0
      %v1169 = vsel %vm1166, %v925, 0
      %v1170 = vsel %vm1167, %v932, 0
      %1171 = vrot.lane.b32.xlu0 %v620, 65
      %v1172 = vpop.permute.xlu0 %1171
      %1173 = vrot.lane.b32.xlu0 %v624, 65
      %v1174 = vpop.permute.xlu0 %1173
      %vm1175 = vcmask 531456
      %v1176 = vsel %vm1175, %v1172, %v1174
      %vm1177 = vcmp.ne.s16.totalorder %v1172, 0
      %vm1178 = vcmp.ne.s16.totalorder %v1176, 0
      %vm1179 = vcmp.ne.s16.totalorder %v1174, 0
      %v1180 = vsel %vm1177, %v929, 0
      %v1181 = vsel %vm1178, %v925, 0
      %v1182 = vsel %vm1179, %v932, 0
      %1183 = vrot.lane.b32.xlu0 %v646, 67
      %v1184 = vpop.permute.xlu0 %1183
      %1185 = vrot.lane.b32.xlu0 %v650, 67
      %v1186 = vpop.permute.xlu0 %1185
      %vm1187 = vcmask 547840
      %v1188 = vsel %vm1187, %v1184, %v1186
      %vm1189 = vcmp.ne.s16.totalorder %v1184, 0
      %vm1190 = vcmp.ne.s16.totalorder %v1188, 0
      %vm1191 = vcmp.ne.s16.totalorder %v1186, 0
      %v1192 = vsel %vm1189, %v929, 0
      %v1193 = vsel %vm1190, %v925, 0
      %v1194 = vsel %vm1191, %v932, 0
      %1195 = vrot.lane.b32.xlu0 %v1001, 68
      %v1196 = vpop.permute.xlu0 %1195
      %1197 = vrot.lane.b32.xlu0 %v1005, 68
      %v1198 = vpop.permute.xlu0 %1197
      %vm1199 = vcmask 556032
      %v1200 = vsel %vm1199, %v1196, %v1198
      %vm1201 = vcmp.ne.s16.totalorder %v1196, 0
      %vm1202 = vcmp.ne.s16.totalorder %v1200, 0
      %vm1203 = vcmp.ne.s16.totalorder %v1198, 0
      %v1204 = vsel %vm1201, %v929, 0
      %v1205 = vsel %vm1202, %v925, 0
      %v1206 = vsel %vm1203, %v932, 0
      %v1210 = vrot.slane %v969, 6
      %v1211 = vrot.slane %v970, 6
      %v1212 = vrot.slane %v971, 6
      %1213 = vrot.lane.b32.xlu0 %v1210, 127
      %v1214 = vpop.permute.xlu0 %1213
      %1215 = vrot.lane.b32.xlu0 %v1211, 127
      %v1216 = vpop.permute.xlu0 %1215
      %1217 = vrot.lane.b32.xlu0 %v1212, 127
      %v1218 = vpop.permute.xlu0 %1217
      %v1219 = vsel %vm722, %v1214, %v1216
      %v1220 = vsel %vm722, %v1216, %v1218
      %v1223 = vrot.slane %v929, 4
      %v1224 = vrot.slane %v925, 4
      %v1225 = vrot.slane %v932, 4
      %1226 = vrot.lane.b32.xlu0 %v1223, 126
      %v1227 = vpop.permute.xlu0 %1226
      %1228 = vrot.lane.b32.xlu0 %v1224, 126
      %v1229 = vpop.permute.xlu0 %1228
      %1230 = vrot.lane.b32.xlu0 %v1225, 126
      %v1231 = vpop.permute.xlu0 %1230
      %v1232 = vsel %vm737, %v1227, %v1229
      %v1233 = vsel %vm737, %v1229, %v1231
      %v1237 = vrot.slane %v981, 2
      %v1238 = vrot.slane %v982, 2
      %v1239 = vrot.slane %v983, 2
      %1240 = vrot.lane.b32.xlu0 %v1237, 125
      %v1241 = vpop.permute.xlu0 %1240
      %1242 = vrot.lane.b32.xlu0 %v1238, 125
      %v1243 = vpop.permute.xlu0 %1242
      %1244 = vrot.lane.b32.xlu0 %v1239, 125
      %v1245 = vpop.permute.xlu0 %1244
      %vm1246 = vcmask 1022976
      %v1247 = vsel %vm1246, %v1241, %v1243
      %v1248 = vsel %vm1246, %v1243, %v1245
      %1252 = vrot.lane.b32.xlu0 %v1015, 124
      %v1253 = vpop.permute.xlu0 %1252
      %1254 = vrot.lane.b32.xlu0 %v1016, 124
      %v1255 = vpop.permute.xlu0 %1254
      %1256 = vrot.lane.b32.xlu0 %v1017, 124
      %v1257 = vpop.permute.xlu0 %1256
      %vm1258 = vcmask 1014784
      %v1259 = vsel %vm1258, %v1253, %v1255
      %v1260 = vsel %vm1258, %v1255, %v1257
      %v1264 = vrot.slane %v1026, 6
      %v1265 = vrot.slane %v1027, 6
      %v1266 = vrot.slane %v1028, 6
      %1267 = vrot.lane.b32.xlu0 %v1264, 112
      %v1268 = vpop.permute.xlu0 %1267
      %1269 = vrot.lane.b32.xlu0 %v1265, 112
      %v1270 = vpop.permute.xlu0 %1269
      %1271 = vrot.lane.b32.xlu0 %v1266, 112
      %v1272 = vpop.permute.xlu0 %1271
      %v1273 = vsel %vm752, %v1268, %v1270
      %v1274 = vsel %vm752, %v1270, %v1272
      %v1278 = vrot.slane %v1037, 4
      %v1279 = vrot.slane %v1038, 4
      %v1280 = vrot.slane %v1039, 4
      %1281 = vrot.lane.b32.xlu0 %v1278, 111
      %v1282 = vpop.permute.xlu0 %1281
      %1283 = vrot.lane.b32.xlu0 %v1279, 111
      %v1284 = vpop.permute.xlu0 %1283
      %1285 = vrot.lane.b32.xlu0 %v1280, 111
      %v1286 = vpop.permute.xlu0 %1285
      %v1287 = vsel %vm761, %v1282, %v1284
      %v1288 = vsel %vm761, %v1284, %v1286
      %v1289 = vrot.slane %v929, 2
      %v1290 = vrot.slane %v925, 2
      %v1291 = vrot.slane %v932, 2
      %1292 = vrot.lane.b32.xlu0 %v1289, 110
      %v1293 = vpop.permute.xlu0 %1292
      %1294 = vrot.lane.b32.xlu0 %v1290, 110
      %v1295 = vpop.permute.xlu0 %1294
      %1296 = vrot.lane.b32.xlu0 %v1291, 110
      %v1297 = vpop.permute.xlu0 %1296
      %v1298 = vsel %vm776, %v1293, %v1295
      %v1299 = vsel %vm776, %v1295, %v1297
      %1303 = vrot.lane.b32.xlu0 %v1049, 109
      %v1304 = vpop.permute.xlu0 %1303
      %1305 = vrot.lane.b32.xlu0 %v1050, 109
      %v1306 = vpop.permute.xlu0 %1305
      %1307 = vrot.lane.b32.xlu0 %v1051, 109
      %v1308 = vpop.permute.xlu0 %1307
      %vm1309 = vcmask 891904
      %v1310 = vsel %vm1309, %v1304, %v1306
      %v1311 = vsel %vm1309, %v1306, %v1308
      %v1315 = vrot.slane %v1061, 6
      %v1316 = vrot.slane %v1062, 6
      %v1317 = vrot.slane %v1063, 6
      %1318 = vrot.lane.b32.xlu0 %v1315, 108
      %v1319 = vpop.permute.xlu0 %1318
      %1320 = vrot.lane.b32.xlu0 %v1316, 108
      %v1321 = vpop.permute.xlu0 %1320
      %1322 = vrot.lane.b32.xlu0 %v1317, 108
      %v1323 = vpop.permute.xlu0 %1322
      %vm1324 = vcmask 883712
      %v1325 = vsel %vm1324, %v1319, %v1321
      %v1326 = vsel %vm1324, %v1321, %v1323
      %v1330 = vrot.slane %v1072, 4
      %v1331 = vrot.slane %v1073, 4
      %v1332 = vrot.slane %v1074, 4
      %1333 = vrot.lane.b32.xlu0 %v1330, 96
      %v1334 = vpop.permute.xlu0 %1333
      %1335 = vrot.lane.b32.xlu0 %v1331, 96
      %v1336 = vpop.permute.xlu0 %1335
      %1337 = vrot.lane.b32.xlu0 %v1332, 96
      %v1338 = vpop.permute.xlu0 %1337
      %v1339 = vsel %vm791, %v1334, %v1336
      %v1340 = vsel %vm791, %v1336, %v1338
      %v1344 = vrot.slane %v1084, 2
      %v1345 = vrot.slane %v1085, 2
      %v1346 = vrot.slane %v1086, 2
      %1347 = vrot.lane.b32.xlu0 %v1344, 95
      %v1348 = vpop.permute.xlu0 %1347
      %1349 = vrot.lane.b32.xlu0 %v1345, 95
      %v1350 = vpop.permute.xlu0 %1349
      %1351 = vrot.lane.b32.xlu0 %v1346, 95
      %v1352 = vpop.permute.xlu0 %1351
      %v1353 = vsel %vm803, %v1348, %v1350
      %v1354 = vsel %vm803, %v1350, %v1352
      %1355 = vrot.lane.b32.xlu0 %v929, 94
      %v1356 = vpop.permute.xlu0 %1355
      %1357 = vrot.lane.b32.xlu0 %v925, 94
      %v1358 = vpop.permute.xlu0 %1357
      %1359 = vrot.lane.b32.xlu0 %v932, 94
      %v1360 = vpop.permute.xlu0 %1359
      %v1361 = vsel %vm815, %v1356, %v1358
      %v1362 = vsel %vm815, %v1358, %v1360
      %v1366 = vrot.slane %v1096, 6
      %v1367 = vrot.slane %v1097, 6
      %v1368 = vrot.slane %v1098, 6
      %1369 = vrot.lane.b32.xlu0 %v1366, 93
      %v1370 = vpop.permute.xlu0 %1369
      %1371 = vrot.lane.b32.xlu0 %v1367, 93
      %v1372 = vpop.permute.xlu0 %1371
      %1373 = vrot.lane.b32.xlu0 %v1368, 93
      %v1374 = vpop.permute.xlu0 %1373
      %vm1375 = vcmask 760832
      %v1376 = vsel %vm1375, %v1370, %v1372
      %v1377 = vsel %vm1375, %v1372, %v1374
      %v1381 = vrot.slane %v1108, 4
      %v1382 = vrot.slane %v1109, 4
      %v1383 = vrot.slane %v1110, 4
      %1384 = vrot.lane.b32.xlu0 %v1381, 92
      %v1385 = vpop.permute.xlu0 %1384
      %1386 = vrot.lane.b32.xlu0 %v1382, 92
      %v1387 = vpop.permute.xlu0 %1386
      %1388 = vrot.lane.b32.xlu0 %v1383, 92
      %v1389 = vpop.permute.xlu0 %1388
      %vm1390 = vcmask 752640
      %v1391 = vsel %vm1390, %v1385, %v1387
      %v1392 = vsel %vm1390, %v1387, %v1389
      %v1396 = vrot.slane %v1120, 2
      %v1397 = vrot.slane %v1121, 2
      %v1398 = vrot.slane %v1122, 2
      %1399 = vrot.lane.b32.xlu0 %v1396, 80
      %v1400 = vpop.permute.xlu0 %1399
      %1401 = vrot.lane.b32.xlu0 %v1397, 80
      %v1402 = vpop.permute.xlu0 %1401
      %1403 = vrot.lane.b32.xlu0 %v1398, 80
      %v1404 = vpop.permute.xlu0 %1403
      %vm1405 = vcmask 654336
      %v1406 = vsel %vm1405, %v1400, %v1402
      %v1407 = vsel %vm1405, %v1402, %v1404
      %v1410 = vsel %vm475, %v958, %v1219
      %v1413 = vsel %vm475, %v959, %v1220
      %v1415 = vsel %vm824, %v1410, %v1232
      %v1417 = vsel %vm824, %v1413, %v1233
      %v1419 = vsel %vm829, %v1415, %v1247
      %v1422 = vsel %vm829, %v1417, %v1248
      %v1426 = vsel %vm475, %v1259, %v1273
      %v1429 = vsel %vm475, %v1260, %v1274
      %v1431 = vsel %vm824, %v1426, %v1287
      %v1433 = vsel %vm824, %v1429, %v1288
      %v1435 = vsel %vm829, %v1431, %v1298
      %v1438 = vsel %vm829, %v1433, %v1299
      %v1442 = vsel %vm475, %v1310, %v1325
      %v1445 = vsel %vm475, %v1311, %v1326
      %v1447 = vsel %vm824, %v1442, %v1339
      %v1449 = vsel %vm824, %v1445, %v1340
      %v1451 = vsel %vm829, %v1447, %v1353
      %v1454 = vsel %vm829, %v1449, %v1354
      %v1458 = vsel %vm475, %v1361, %v1376
      %v1461 = vsel %vm475, %v1362, %v1377
      %v1463 = vsel %vm824, %v1458, %v1391
      %v1465 = vsel %vm824, %v1461, %v1392
      %v1467 = vsel %vm829, %v1463, %v1406
      %v1470 = vsel %vm829, %v1465, %v1407
      %v1472 = vrot.slane %v929, 6
      %v1473 = vrot.slane %v925, 6
      %v1474 = vrot.slane %v932, 6
      %1475 = vrot.lane.b32.xlu0 %v1472, 127
      %v1476 = vpop.permute.xlu0 %1475
      %1477 = vrot.lane.b32.xlu0 %v1473, 127
      %v1478 = vpop.permute.xlu0 %1477
      %1479 = vrot.lane.b32.xlu0 %v1474, 127
      %v1480 = vpop.permute.xlu0 %1479
      %v1481 = vsel %vm722, %v1476, %v1478
      %v1482 = vsel %vm722, %v1478, %v1480
      %v1486 = vrot.slane %v1144, 4
      %v1487 = vrot.slane %v1145, 4
      %v1488 = vrot.slane %v1146, 4
      %1489 = vrot.lane.b32.xlu0 %v1486, 126
      %v1490 = vpop.permute.xlu0 %1489
      %1491 = vrot.lane.b32.xlu0 %v1487, 126
      %v1492 = vpop.permute.xlu0 %1491
      %1493 = vrot.lane.b32.xlu0 %v1488, 126
      %v1494 = vpop.permute.xlu0 %1493
      %v1495 = vsel %vm737, %v1490, %v1492
      %v1496 = vsel %vm737, %v1492, %v1494
      %v1500 = vrot.slane %v1156, 2
      %v1501 = vrot.slane %v1157, 2
      %v1502 = vrot.slane %v1158, 2
      %1503 = vrot.lane.b32.xlu0 %v1500, 125
      %v1504 = vpop.permute.xlu0 %1503
      %1505 = vrot.lane.b32.xlu0 %v1501, 125
      %v1506 = vpop.permute.xlu0 %1505
      %1507 = vrot.lane.b32.xlu0 %v1502, 125
      %v1508 = vpop.permute.xlu0 %1507
      %v1509 = vsel %vm1246, %v1504, %v1506
      %v1510 = vsel %vm1246, %v1506, %v1508
      %1514 = vrot.lane.b32.xlu0 %v1168, 113
      %v1515 = vpop.permute.xlu0 %1514
      %1516 = vrot.lane.b32.xlu0 %v1169, 113
      %v1517 = vpop.permute.xlu0 %1516
      %1518 = vrot.lane.b32.xlu0 %v1170, 113
      %v1519 = vpop.permute.xlu0 %1518
      %vm1520 = vcmask 924672
      %v1521 = vsel %vm1520, %v1515, %v1517
      %v1522 = vsel %vm1520, %v1517, %v1519
      %v1526 = vrot.slane %v1180, 6
      %v1527 = vrot.slane %v1181, 6
      %v1528 = vrot.slane %v1182, 6
      %1529 = vrot.lane.b32.xlu0 %v1526, 112
      %v1530 = vpop.permute.xlu0 %1529
      %1531 = vrot.lane.b32.xlu0 %v1527, 112
      %v1532 = vpop.permute.xlu0 %1531
      %1533 = vrot.lane.b32.xlu0 %v1528, 112
      %v1534 = vpop.permute.xlu0 %1533
      %v1535 = vsel %vm752, %v1530, %v1532
      %v1536 = vsel %vm752, %v1532, %v1534
      %1537 = vrot.lane.b32.xlu0 %v1223, 111
      %v1538 = vpop.permute.xlu0 %1537
      %1539 = vrot.lane.b32.xlu0 %v1224, 111
      %v1540 = vpop.permute.xlu0 %1539
      %1541 = vrot.lane.b32.xlu0 %v1225, 111
      %v1542 = vpop.permute.xlu0 %1541
      %v1543 = vsel %vm761, %v1538, %v1540
      %v1544 = vsel %vm761, %v1540, %v1542
      %v1548 = vrot.slane %v1192, 2
      %v1549 = vrot.slane %v1193, 2
      %v1550 = vrot.slane %v1194, 2
      %1551 = vrot.lane.b32.xlu0 %v1548, 110
      %v1552 = vpop.permute.xlu0 %1551
      %1553 = vrot.lane.b32.xlu0 %v1549, 110
      %v1554 = vpop.permute.xlu0 %1553
      %1555 = vrot.lane.b32.xlu0 %v1550, 110
      %v1556 = vpop.permute.xlu0 %1555
      %v1557 = vsel %vm776, %v1552, %v1554
      %v1558 = vsel %vm776, %v1554, %v1556
      %1562 = vrot.lane.b32.xlu0 %v1204, 109
      %v1563 = vpop.permute.xlu0 %1562
      %1564 = vrot.lane.b32.xlu0 %v1205, 109
      %v1565 = vpop.permute.xlu0 %1564
      %1566 = vrot.lane.b32.xlu0 %v1206, 109
      %v1567 = vpop.permute.xlu0 %1566
      %v1568 = vsel %vm1309, %v1563, %v1565
      %v1569 = vsel %vm1309, %v1565, %v1567
      %v1572 = vsel %vm475, %v1132, %v1481
      %v1575 = vsel %vm475, %v1133, %v1482
      %v1578 = vsel %vm475, %v1134, %v1480
      %v1580 = vsel %vm824, %v1572, %v1495
      %v1582 = vsel %vm824, %v1575, %v1496
      %v1584 = vsel %vm824, %v1578, %v1494
      %v1586 = vsel %vm829, %v1580, %v1509
      %v1588 = vsel %vm829, %v1582, %v1510
      %v1590 = vsel %vm829, %v1584, %v1508
      %v1593 = vsel %vm475, %v1521, %v1535
      %v1596 = vsel %vm475, %v1522, %v1536
      %v1599 = vsel %vm475, %v1519, %v1534
      %v1601 = vsel %vm824, %v1593, %v1543
      %v1603 = vsel %vm824, %v1596, %v1544
      %v1605 = vsel %vm824, %v1599, %v1542
      %v1607 = vsel %vm829, %v1601, %v1557
      %v1609 = vsel %vm829, %v1603, %v1558
      %v1611 = vsel %vm829, %v1605, %v1556
      %1618 = vrot.lane.b32.xlu0 %v1586, 79
      %v1619 = vpop.permute.xlu0 %1618
      %1620 = vrot.lane.b32.xlu0 %v1588, 79
      %v1621 = vpop.permute.xlu0 %1620
      %1622 = vrot.lane.b32.xlu0 %v1590, 79
      %v1623 = vpop.permute.xlu0 %1622
      %1624 = vrot.lane.b32.xlu0 %v1607, 79
      %v1625 = vpop.permute.xlu0 %1624
      %1626 = vrot.lane.b32.xlu0 %v1609, 79
      %v1627 = vpop.permute.xlu0 %1626
      %1628 = vrot.lane.b32.xlu0 %v1611, 79
      %v1629 = vpop.permute.xlu0 %1628
      %1630 = vrot.lane.b32.xlu0 %v1568, 79
      %v1631 = vpop.permute.xlu0 %1630
      %1632 = vrot.lane.b32.xlu0 %v1569, 79
      %v1633 = vpop.permute.xlu0 %1632
      %1634 = vrot.lane.b32.xlu0 %v1567, 79
      %v1635 = vpop.permute.xlu0 %1634
      %vm1636 = vcmask 646144
      %v1637 = vsel %vm1636, %v1619, %v1621
      %v1638 = vsel %vm1636, %v1621, %v1623
      %v1639 = vsel %vm1636, %v1625, %v1627
      %v1640 = vsel %vm1636, %v1627, %v1629
      %v1641 = vsel %vm1636, %v1631, %v1633
      %v1642 = vsel %vm1636, %v1633, %v1635
      %vm1647 = vcmask 818176
      %v1649 = vsel %vm1647, %v454, 0
      %v1652 = vsel %vm475, %v1641, 0
      %v1655 = vsel %vm475, %v1642, 0
      %1657 = vmatprep.subr.bf16.mxu0 %v1422
      %1658 = vmatpush1.bf16.msra.mxu0 %v1419
      %1659 = vmatprep.subr.bf16.mxu0 %v1438
      %1660 = vmatpush1.bf16.msra.mxu0 %v1435
      %1661 = vmatprep.subr.bf16.mxu0 %v1454
      %1662 = vmatpush1.bf16.msra.mxu0 %v1451
      %1663 = vmatprep.subr.bf16.mxu0 %v1470
      %1664 = vmatpush1.bf16.msra.mxu0 %v1467
      %1665 = vmatprep.subr.bf16.mxu0 %v1638
      %1666 = vmatpush1.bf16.msra.mxu0 %v1637
      %1667 = vmatprep.subr.bf16.mxu0 %v1640
      %1668 = vmatpush1.bf16.msra.mxu0 %v1639
      %1669 = vmatprep.subr.bf16.mxu0 %v1655
      %1670 = vmatpush1.bf16.msra.mxu0 %v1652
      %1671 = vmatprep.subr.bf16.mxu0 0
      %1672 = vmatpush1.bf16.msra.mxu0 0
      %1673 = vmatprep.subr.bf16.mxu0 0
      %1674 = vmatpush1.bf16.msra.mxu0 0
      %1675 = vmatprep.subr.bf16.mxu0 0
      %1676 = vmatpush1.bf16.msra.mxu0 0
      %1677 = vmatprep.subr.bf16.mxu0 0
      %1678 = vmatpush1.bf16.msra.mxu0 0
      %1679 = vmatprep.subr.bf16.mxu0 0
      %1680 = vmatpush1.bf16.msra.mxu0 0
      %1681 = vmatprep.subr.bf16.mxu0 0
      %1682 = vmatpush1.bf16.msra.mxu0 0
      %1683 = vmatprep.subr.bf16.mxu0 0
      %1684 = vmatpush1.bf16.msra.mxu0 0
      %1685 = vmatprep.subr.bf16.mxu0 0
      %1686 = vmatpush1.bf16.msra.mxu0 0
      %1687 = vmatprep.subr.bf16.mxu0 0
      %1688 = vmatpush1.bf16.msra.mxu0 0
      %1689 = vmatprep.mubr.bf16.mxu0 0
      %1690 = vmatmul.mubr.bf16.gmra.mrb[0].mxu0 %v1649
      %v1691 = vpop.f32.mrb[0].mxu0
      %v1692 = vadd.f32 0.0, %v1691
      %v1693 = vpop.f32.mrb[0].mxu0
      %v1694 = vadd.f32 0.0, %v1693
      %v1695 = vpop.f32.mrb[0].mxu0
      %v1696 = vpop.f32.mrb[0].mxu0
      %1697 = vdwg.mxu0
      %1699 = vset.pattern.permute.xlu0 0
      %1700 = vperm.xlu0 %1699, %v455
      %v1701 = vpop.permute.xlu0 %1700
      %v1703 = vmul.f32 %v1692, %v1701
      %v1704 = vmul.f32 %v1694, %v1701
      %1706 = vset.pattern.permute.xlu0 0
      %1707 = vperm.xlu0 %1706, %v456
      %v1708 = vpop.permute.xlu0 %1707
      %v1710 = vadd.f32 %v1703, %v1708
      %v1711 = vadd.f32 %v1704, %v1708
      %v1712 = vmax.f32 %v1710, 0.0
      %v1713 = vmax.f32 %v1711, 0.0
      %1716 = vrot.lane.b32.xlu0 %v464, 17
      %v1717 = vpop.permute.xlu0 %1716
      %1718 = vrot.lane.b32.xlu0 %v465, 17
      %v1719 = vpop.permute.xlu0 %1718
      %v1720 = vsel %vm565, %v1717, %v1719
      %v1724 = vsel %vm568, 4286644096, %v1717
      %v1727 = vsel %vm568, %v1719, 4286644096
      %v1729 = vsel %vm625, %v1724, 4286644096
      %v1730 = vsel %vm626, %v1720, 4286644096
      %v1731 = vsel %vm657, %v1724, 4286644096
      %v1732 = vsel %vm658, %v1720, 4286644096
      %v1733 = vsel %vm659, %v1727, 4286644096
      %v1734 = vsel %vm669, %v1724, 4286644096
      %v1735 = vsel %vm670, %v1720, 4286644096
      %v1736 = vsel %vm671, %v1727, 4286644096
      %v1737 = vsel %vm681, %v1724, 4286644096
      %v1738 = vsel %vm682, %v1720, 4286644096
      %v1739 = vsel %vm683, %v1727, 4286644096
      %v1740 = vsel %vm693, %v1724, 4286644096
      %v1741 = vsel %vm694, %v1720, 4286644096
      %v1742 = vsel %vm695, %v1727, 4286644096
      %v1743 = vsel %vm705, %v1724, 4286644096
      %v1744 = vsel %vm706, %v1720, 4286644096
      %v1745 = vsel %vm707, %v1727, 4286644096
      %1748 = vrot.lane.b32.xlu0 %v1724, 127
      %v1749 = vpop.permute.xlu0 %1748
      %1750 = vrot.lane.b32.xlu0 %v1720, 127
      %v1751 = vpop.permute.xlu0 %1750
      %1752 = vrot.lane.b32.xlu0 %v1727, 127
      %v1753 = vpop.permute.xlu0 %1752
      %v1754 = vsel %vm722, %v1749, %v1751
      %v1755 = vsel %vm722, %v1751, %v1753
      %v1758 = vmax.bf16 %v1729, %v1754
      %v1759 = vmax.bf16 %v1730, %v1755
      %1763 = vrot.lane.b32.xlu0 %v1731, 126
      %v1764 = vpop.permute.xlu0 %1763
      %1765 = vrot.lane.b32.xlu0 %v1732, 126
      %v1766 = vpop.permute.xlu0 %1765
      %1767 = vrot.lane.b32.xlu0 %v1733, 126
      %v1768 = vpop.permute.xlu0 %1767
      %v1769 = vsel %vm737, %v1764, %v1766
      %v1770 = vsel %vm737, %v1766, %v1768
      %v1773 = vmax.bf16 %v1758, %v1769
      %v1774 = vmax.bf16 %v1759, %v1770
      %1778 = vrot.lane.b32.xlu0 %v1734, 112
      %v1779 = vpop.permute.xlu0 %1778
      %1780 = vrot.lane.b32.xlu0 %v1735, 112
      %v1781 = vpop.permute.xlu0 %1780
      %1782 = vrot.lane.b32.xlu0 %v1736, 112
      %v1783 = vpop.permute.xlu0 %1782
      %v1784 = vsel %vm752, %v1779, %v1781
      %v1785 = vsel %vm752, %v1781, %v1783
      %v1788 = vmax.bf16 %v1773, %v1784
      %v1789 = vmax.bf16 %v1774, %v1785
      %1790 = vrot.lane.b32.xlu0 %v1724, 111
      %v1791 = vpop.permute.xlu0 %1790
      %1792 = vrot.lane.b32.xlu0 %v1720, 111
      %v1793 = vpop.permute.xlu0 %1792
      %1794 = vrot.lane.b32.xlu0 %v1727, 111
      %v1795 = vpop.permute.xlu0 %1794
      %v1796 = vsel %vm761, %v1791, %v1793
      %v1797 = vsel %vm761, %v1793, %v1795
      %v1800 = vmax.bf16 %v1788, %v1796
      %v1801 = vmax.bf16 %v1789, %v1797
      %1805 = vrot.lane.b32.xlu0 %v1737, 110
      %v1806 = vpop.permute.xlu0 %1805
      %1807 = vrot.lane.b32.xlu0 %v1738, 110
      %v1808 = vpop.permute.xlu0 %1807
      %1809 = vrot.lane.b32.xlu0 %v1739, 110
      %v1810 = vpop.permute.xlu0 %1809
      %v1811 = vsel %vm776, %v1806, %v1808
      %v1812 = vsel %vm776, %v1808, %v1810
      %v1815 = vmax.bf16 %v1800, %v1811
      %v1816 = vmax.bf16 %v1801, %v1812
      %1820 = vrot.lane.b32.xlu0 %v1740, 96
      %v1821 = vpop.permute.xlu0 %1820
      %1822 = vrot.lane.b32.xlu0 %v1741, 96
      %v1823 = vpop.permute.xlu0 %1822
      %1824 = vrot.lane.b32.xlu0 %v1742, 96
      %v1825 = vpop.permute.xlu0 %1824
      %v1826 = vsel %vm791, %v1821, %v1823
      %v1827 = vsel %vm791, %v1823, %v1825
      %v1830 = vmax.bf16 %v1815, %v1826
      %v1831 = vmax.bf16 %v1816, %v1827
      %1832 = vrot.lane.b32.xlu0 %v1724, 95
      %v1833 = vpop.permute.xlu0 %1832
      %1834 = vrot.lane.b32.xlu0 %v1720, 95
      %v1835 = vpop.permute.xlu0 %1834
      %1836 = vrot.lane.b32.xlu0 %v1727, 95
      %v1837 = vpop.permute.xlu0 %1836
      %v1838 = vsel %vm803, %v1833, %v1835
      %v1839 = vsel %vm803, %v1835, %v1837
      %v1842 = vmax.bf16 %v1830, %v1838
      %v1843 = vmax.bf16 %v1831, %v1839
      %1847 = vrot.lane.b32.xlu0 %v1743, 94
      %v1848 = vpop.permute.xlu0 %1847
      %1849 = vrot.lane.b32.xlu0 %v1744, 94
      %v1850 = vpop.permute.xlu0 %1849
      %1851 = vrot.lane.b32.xlu0 %v1745, 94
      %v1852 = vpop.permute.xlu0 %1851
      %v1853 = vsel %vm815, %v1848, %v1850
      %v1854 = vsel %vm815, %v1850, %v1852
      %v1857 = vmax.bf16 %v1842, %v1853
      %v1858 = vmax.bf16 %v1843, %v1854
      %1861 = vrot.lane.b32.xlu0 %v1857, 17
      %v1862 = vpop.permute.xlu0 %1861
      %1863 = vrot.lane.b32.xlu0 %v1858, 17
      %v1864 = vpop.permute.xlu0 %1863
      %v1865 = vsel %vm565, %v1862, %v1864
      %v1868 = vsel %vm568, 0, %v1862
      %v1871 = vsel %vm568, %v1864, 0
      %v1873 = vsel %vm625, %v1868, 0
      %v1874 = vsel %vm626, %v1865, 0
      %v1875 = vsel %vm657, %v1868, 0
      %v1876 = vsel %vm658, %v1865, 0
      %v1877 = vsel %vm659, %v1871, 0
      %v1878 = vsel %vm669, %v1868, 0
      %v1879 = vsel %vm670, %v1865, 0
      %v1880 = vsel %vm671, %v1871, 0
      %v1881 = vsel %vm681, %v1868, 0
      %v1882 = vsel %vm682, %v1865, 0
      %v1883 = vsel %vm683, %v1871, 0
      %v1884 = vsel %vm693, %v1868, 0
      %v1885 = vsel %vm694, %v1865, 0
      %v1886 = vsel %vm695, %v1871, 0
      %v1887 = vsel %vm705, %v1868, 0
      %v1888 = vsel %vm706, %v1865, 0
      %v1889 = vsel %vm707, %v1871, 0
      %v1892 = vrot.slane %v1868, 6
      %v1893 = vrot.slane %v1865, 6
      %v1894 = vrot.slane %v1871, 6
      %1895 = vrot.lane.b32.xlu0 %v1892, 127
      %v1896 = vpop.permute.xlu0 %1895
      %1897 = vrot.lane.b32.xlu0 %v1893, 127
      %v1898 = vpop.permute.xlu0 %1897
      %1899 = vrot.lane.b32.xlu0 %v1894, 127
      %v1900 = vpop.permute.xlu0 %1899
      %v1901 = vsel %vm722, %v1896, %v1898
      %v1902 = vsel %vm722, %v1898, %v1900
      %v1906 = vrot.slane %v1875, 4
      %v1907 = vrot.slane %v1876, 4
      %v1908 = vrot.slane %v1877, 4
      %1909 = vrot.lane.b32.xlu0 %v1906, 126
      %v1910 = vpop.permute.xlu0 %1909
      %1911 = vrot.lane.b32.xlu0 %v1907, 126
      %v1912 = vpop.permute.xlu0 %1911
      %1913 = vrot.lane.b32.xlu0 %v1908, 126
      %v1914 = vpop.permute.xlu0 %1913
      %v1915 = vsel %vm737, %v1910, %v1912
      %v1916 = vsel %vm737, %v1912, %v1914
      %v1920 = vrot.slane %v1878, 2
      %v1921 = vrot.slane %v1879, 2
      %v1922 = vrot.slane %v1880, 2
      %1923 = vrot.lane.b32.xlu0 %v1920, 112
      %v1924 = vpop.permute.xlu0 %1923
      %1925 = vrot.lane.b32.xlu0 %v1921, 112
      %v1926 = vpop.permute.xlu0 %1925
      %1927 = vrot.lane.b32.xlu0 %v1922, 112
      %v1928 = vpop.permute.xlu0 %1927
      %v1929 = vsel %vm752, %v1924, %v1926
      %v1930 = vsel %vm752, %v1926, %v1928
      %1931 = vrot.lane.b32.xlu0 %v1868, 111
      %v1932 = vpop.permute.xlu0 %1931
      %1933 = vrot.lane.b32.xlu0 %v1865, 111
      %v1934 = vpop.permute.xlu0 %1933
      %1935 = vrot.lane.b32.xlu0 %v1871, 111
      %v1936 = vpop.permute.xlu0 %1935
      %v1937 = vsel %vm761, %v1932, %v1934
      %v1938 = vsel %vm761, %v1934, %v1936
      %v1942 = vrot.slane %v1881, 6
      %v1943 = vrot.slane %v1882, 6
      %v1944 = vrot.slane %v1883, 6
      %1945 = vrot.lane.b32.xlu0 %v1942, 110
      %v1946 = vpop.permute.xlu0 %1945
      %1947 = vrot.lane.b32.xlu0 %v1943, 110
      %v1948 = vpop.permute.xlu0 %1947
      %1949 = vrot.lane.b32.xlu0 %v1944, 110
      %v1950 = vpop.permute.xlu0 %1949
      %v1951 = vsel %vm776, %v1946, %v1948
      %v1952 = vsel %vm776, %v1948, %v1950
      %v1956 = vrot.slane %v1884, 4
      %v1957 = vrot.slane %v1885, 4
      %v1958 = vrot.slane %v1886, 4
      %1959 = vrot.lane.b32.xlu0 %v1956, 96
      %v1960 = vpop.permute.xlu0 %1959
      %1961 = vrot.lane.b32.xlu0 %v1957, 96
      %v1962 = vpop.permute.xlu0 %1961
      %1963 = vrot.lane.b32.xlu0 %v1958, 96
      %v1964 = vpop.permute.xlu0 %1963
      %v1965 = vsel %vm791, %v1960, %v1962
      %v1966 = vsel %vm791, %v1962, %v1964
      %v1967 = vrot.slane %v1868, 2
      %v1968 = vrot.slane %v1865, 2
      %v1969 = vrot.slane %v1871, 2
      %1970 = vrot.lane.b32.xlu0 %v1967, 95
      %v1971 = vpop.permute.xlu0 %1970
      %1972 = vrot.lane.b32.xlu0 %v1968, 95
      %v1973 = vpop.permute.xlu0 %1972
      %1974 = vrot.lane.b32.xlu0 %v1969, 95
      %v1975 = vpop.permute.xlu0 %1974
      %v1976 = vsel %vm803, %v1971, %v1973
      %v1977 = vsel %vm803, %v1973, %v1975
      %1981 = vrot.lane.b32.xlu0 %v1887, 94
      %v1982 = vpop.permute.xlu0 %1981
      %1983 = vrot.lane.b32.xlu0 %v1888, 94
      %v1984 = vpop.permute.xlu0 %1983
      %1985 = vrot.lane.b32.xlu0 %v1889, 94
      %v1986 = vpop.permute.xlu0 %1985
      %v1987 = vsel %vm815, %v1982, %v1984
      %v1988 = vsel %vm815, %v1984, %v1986
      %v1991 = vsel %vm475, %v1873, %v1901
      %v1994 = vsel %vm475, %v1874, %v1902
      %v1996 = vsel %vm824, %v1991, %v1915
      %v1998 = vsel %vm824, %v1994, %v1916
      %v2000 = vsel %vm829, %v1996, %v1929
      %v2003 = vsel %vm829, %v1998, %v1930
      %v2007 = vsel %vm475, %v1937, %v1951
      %v2010 = vsel %vm475, %v1938, %v1952
      %v2012 = vsel %vm824, %v2007, %v1965
      %v2014 = vsel %vm824, %v2010, %v1966
      %v2016 = vsel %vm829, %v2012, %v1976
      %v2019 = vsel %vm829, %v2014, %v1977
      %v2022 = vsel %vm852, %v457, 0
      %v2025 = vsel %vm475, %v1987, 0
      %v2028 = vsel %vm475, %v1988, 0
      %2030 = vmatprep.subr.bf16.mxu0 %v2003
      %2031 = vmatpush1.bf16.msra.mxu0 %v2000
      %2032 = vmatprep.subr.bf16.mxu0 %v2019
      %2033 = vmatpush1.bf16.msra.mxu0 %v2016
      %2034 = vmatprep.subr.bf16.mxu0 %v2028
      %2035 = vmatpush1.bf16.msra.mxu0 %v2025
      %2036 = vmatprep.subr.bf16.mxu0 0
      %2037 = vmatpush1.bf16.msra.mxu0 0
      %2038 = vmatprep.subr.bf16.mxu0 0
      %2039 = vmatpush1.bf16.msra.mxu0 0
      %2040 = vmatprep.subr.bf16.mxu0 0
      %2041 = vmatpush1.bf16.msra.mxu0 0
      %2042 = vmatprep.subr.bf16.mxu0 0
      %2043 = vmatpush1.bf16.msra.mxu0 0
      %2044 = vmatprep.subr.bf16.mxu0 0
      %2045 = vmatpush1.bf16.msra.mxu0 0
      %2046 = vmatprep.subr.bf16.mxu0 0
      %2047 = vmatpush1.bf16.msra.mxu0 0
      %2048 = vmatprep.subr.bf16.mxu0 0
      %2049 = vmatpush1.bf16.msra.mxu0 0
      %2050 = vmatprep.subr.bf16.mxu0 0
      %2051 = vmatpush1.bf16.msra.mxu0 0
      %2052 = vmatprep.subr.bf16.mxu0 0
      %2053 = vmatpush1.bf16.msra.mxu0 0
      %2054 = vmatprep.subr.bf16.mxu0 0
      %2055 = vmatpush1.bf16.msra.mxu0 0
      %2056 = vmatprep.subr.bf16.mxu0 0
      %2057 = vmatpush1.bf16.msra.mxu0 0
      %2058 = vmatprep.subr.bf16.mxu0 0
      %2059 = vmatpush1.bf16.msra.mxu0 0
      %2060 = vmatprep.subr.bf16.mxu0 0
      %2061 = vmatpush1.bf16.msra.mxu0 0
      %2062 = vmatprep.mubr.bf16.mxu0 0
      %2063 = vmatmul.mubr.bf16.gmra.mrb[0].mxu0 %v2022
      %v2064 = vpop.f32.mrb[0].mxu0
      %v2065 = vadd.f32 0.0, %v2064
      %v2066 = vpop.f32.mrb[0].mxu0
      %v2067 = vadd.f32 0.0, %v2066
      %v2068 = vpop.f32.mrb[0].mxu0
      %v2069 = vpop.f32.mrb[0].mxu0
      %2070 = vdwg.mxu0
      %2072 = vset.pattern.permute.xlu0 0
      %2073 = vperm.xlu0 %2072, %v458
      %v2074 = vpop.permute.xlu0 %2073
      %v2076 = vmul.f32 %v2065, %v2074
      %v2077 = vmul.f32 %v2067, %v2074
      %2079 = vset.pattern.permute.xlu0 0
      %2080 = vperm.xlu0 %2079, %v459
      %v2081 = vpop.permute.xlu0 %2080
      %v2083 = vadd.f32 %v2076, %v2081
      %v2084 = vadd.f32 %v2077, %v2081
      %v2085 = vmax.f32 %v2083, 0.0
      %v2086 = vmax.f32 %v2084, 0.0
      %2087 = vst [vmem:[%s440] sm:$0xff] %v553
      %2088 = vst [vmem:[%s440 + $0x8] sm:$0xff] %v554
      %2089 = vst [vmem:[%s440 + $0x10] sm:$0xff] %v917
      %2090 = vst [vmem:[%s440 + $0x18] sm:$0xff] %v918
      %2091 = vst [vmem:[%s440 + $0x20] sm:$0xff] %v1712
      %2092 = vst [vmem:[%s440 + $0x28] sm:$0xff] %v1713
      %2093 = vst [vmem:[%s440 + $0x30] sm:$0xff] %v2085
      %2094 = vst [vmem:[%s440 + $0x38] sm:$0xff] %v2086
      %p2095 = scmp.lt.s32.totalorder %s24, 1
      %s2096 = scalar_select %p2095, %s24, 1
      %s2097 = smul.addr %s2096, 8
      %s2098 = smul.addr %s2097, 8
      %s2099 = scalar_lea.vmem %s13, %s2098
      // Predicated region
      $region73: #{base_inception_forward.1} parent=71 // pred_check
        %p2100 = pneg %p320
      $region74: #{base_inception_forward.1} parent=71 // pred_check_branch
        %2102 = sbr.rel (%p2100) target = $region76
      $region75: #{base_inception_forward.1} parent=71 // pred_region
        _
      $region76: #{base_inception_forward.1} parent=71 // pred_fallthru
        _
    $region72: #{base_inception_forward.1} parent=5 // pred_fallthru
      _
    %p2103 = scmp.le.s32.totalorder 2, %s19
    // Predicated region
    $region77: #{base_inception_forward.1} parent=5 // pred_check
      %p2104 = pneg %p2103
    $region78: #{base_inception_forward.1} parent=5 // pred_check_branch
      %2106 = sbr.rel (%p2104) target = $region80
    $region79: #{base_inception_forward.1} parent=5 // pred_region
      %s2107 = ssub.s32 %s19, 2
      // Predicated region
      $region81: #{base_inception_forward.1} parent=79 // pred_check
        %p2108 = pneg %p326
      $region82: #{base_inception_forward.1} parent=79 // pred_check_branch
        %2110 = sbr.rel (%p2108) target = $region84
      $region83: #{base_inception_forward.1} parent=79 // pred_region
        %p2111 = scmp.lt.s32.totalorder %s25, 1
        %s2112 = scalar_select %p2111, %s25, 1
        %s2113 = smul.addr %s2112, 8
        %s2114 = smul.addr %s2113, 8
        %s2115 = scalar_lea.vmem %s13, %s2114
      $region84: #{base_inception_forward.1} parent=79 // pred_fallthru
        _
    $region80: #{base_inception_forward.1} parent=5 // pred_fallthru
      _
  $region6: #{base_inception_forward.1} parent=0 // loop_footer
    %s23 = sadd.s32 1, %s19
  $region7: #{base_inception_forward.1} parent=0 // loop_footer_branch
    %18 = sbr.rel target = $region3
  $region8: #{base_inception_forward.1} parent=0 // loop_exit
    _

</llo_original>
